<compile_context>
chip_gen: v5e
topology: v5e:2x2
jax: 0.10.0
libtpu: 0.0.40
codegen_flags: <defaults>
</compile_context>

<pallas_src>
import jax
import jax.numpy as jnp
from jax.experimental import pallas as pl
from jax.experimental.pallas import tpu as pltpu

K1 = 3                      # ECA 1D conv kernel size (channel attention)
K2 = 7                      # spatial attention 2D conv kernel size
PAD2 = (K2 - 1) // 2        # = 3


def cbam_kernel(w1_ref, w2_ref, x_ref, o_ref, pad_ref):
    # w1_ref : SMEM (3,)    Conv1d(1,1,3,bias=False) weight, flattened
    # w2_ref : SMEM (98,)   Conv2d(2,1,7,bias=False) weight, flattened (2*7*7)
    # x_ref  : VMEM (Nb, C, H*W)   lane-dense input block
    # o_ref  : VMEM (Nb, C, H*W)   lane-dense output block
    # pad_ref: VMEM scratch (2, Nb, H+6, W+6) zero-padded mean/max maps
    Nb, C, HW = x_ref.shape
    _, _, Hp, Wp = pad_ref.shape
    H, W = Hp - 2 * PAD2, Wp - 2 * PAD2

    x = x_ref[...].astype(jnp.float32)                     # (Nb, C, HW)

    # ---------------- Channel attention (ECA) ----------------
    # Global average pool over the lane axis (HW).
    avg = jnp.mean(x, axis=2)                              # (Nb, C), C on lanes
    # 3-tap cross-correlation along C with zero padding (matches nn.Conv1d).
    zcol = jnp.zeros((Nb, 1), jnp.float32)
    avg_m1 = jnp.concatenate([zcol, avg[:, :C - 1]], axis=1)   # avg[c-1]
    avg_p1 = jnp.concatenate([avg[:, 1:], zcol], axis=1)       # avg[c+1]
    ca = jax.nn.sigmoid(w1_ref[0] * avg_m1
                        + w1_ref[1] * avg
                        + w1_ref[2] * avg_p1)              # (Nb, C)

    x_ca = x * ca[:, :, None]                              # lane-dense scale

    # ---------------- Spatial attention ----------------
    m_map = jnp.mean(x_ca, axis=1)                         # (Nb, HW) channel mean
    x_map = jnp.max(x_ca, axis=1)                          # (Nb, HW) channel max

    # Write the two tiny maps once into a pre-zeroed padded scratch.
    pad_ref[...] = jnp.zeros_like(pad_ref)
    pad_ref[0, :, PAD2:PAD2 + H, PAD2:PAD2 + W] = m_map.reshape(Nb, H, W)
    pad_ref[1, :, PAD2:PAD2 + H, PAD2:PAD2 + W] = x_map.reshape(Nb, H, W)
    mp = pad_ref[0]                                        # (Nb, Hp, Wp)
    xp = pad_ref[1]

    # Hoist all 98 weight scalar reads out of the unrolled tap loop.
    w2m = [[w2_ref[ki * K2 + kj] for kj in range(K2)] for ki in range(K2)]
    w2x = [[w2_ref[K2 * K2 + ki * K2 + kj] for kj in range(K2)] for ki in range(K2)]

    # 7x7 conv, 2 input channels (mean, max) -> 1 output channel.
    # kj (lane) shifts hoisted: 7 lane shifts per map total, reused across ki.
    acc = jnp.zeros((Nb, H, W), jnp.float32)
    for kj in range(K2):
        m_kj = mp[:, :, kj:kj + W]                         # (Nb, Hp, W)
        x_kj = xp[:, :, kj:kj + W]
        for ki in range(K2):                               # sublane slices only
            acc = acc + w2m[ki][kj] * m_kj[:, ki:ki + H, :]
            acc = acc + w2x[ki][kj] * x_kj[:, ki:ki + H, :]
    sa = jax.nn.sigmoid(acc).reshape(Nb, 1, HW)            # back to lane-dense

    o_ref[...] = (x_ca * sa).astype(o_ref.dtype)           # unmasked lane-dense store


def cbam(x, w1_flat, w2_flat, *, block_budget_bytes=4 * 1024 * 1024,
         vmem_limit_bytes=48 * 1024 * 1024):
    N, C, H, W = x.shape
    HW = H * W
    x2 = x.reshape(N, C, HW)                               # lane-dense wrapper reshape

    # Fold batch elements into one grid step (amortize ~0.35us/step overhead),
    # while keeping each pipelined block small enough for v7x's 64 MiB VMEM.
    bytes_per_n = C * HW * x.dtype.itemsize
    nb = max(1, min(N, block_budget_bytes // max(1, bytes_per_n)))
    while N % nb != 0:
        nb -= 1

    out = pl.pallas_call(
        cbam_kernel,
        out_shape=jax.ShapeDtypeStruct((N, C, HW), x.dtype),
        grid=(N // nb,),
        in_specs=[
            pl.BlockSpec(memory_space=pltpu.MemorySpace.SMEM),   # w1 (3,)
            pl.BlockSpec(memory_space=pltpu.MemorySpace.SMEM),   # w2 (98,)
            pl.BlockSpec((nb, C, HW), lambda n: (n, 0, 0)),      # x (lane-dense)
        ],
        out_specs=pl.BlockSpec((nb, C, HW), lambda n: (n, 0, 0)),
        scratch_shapes=[
            pltpu.VMEM((2, nb, H + 2 * PAD2, W + 2 * PAD2), jnp.float32),
        ],
        compiler_params=pltpu.CompilerParams(
            dimension_semantics=("parallel",),
            vmem_limit_bytes=vmem_limit_bytes,
        ),
    )(w1_flat, w2_flat, x2)
    return out.reshape(N, C, H, W)


def cbam_ref(x, w1_flat, w2_flat):
    """Pure-JAX reference of the exact PyTorch semantics (for validation)."""
    N, C, H, W = x.shape
    w2 = w2_flat.reshape(2, K2, K2)
    avg = jnp.mean(x, axis=(2, 3))                         # (N, C)
    avg_p = jnp.pad(avg, ((0, 0), (1, 1)))
    ca = sum(w1_flat[j] * avg_p[:, j:j + C] for j in range(K1))
    ca = jax.nn.sigmoid(ca)[:, :, None, None]
    x = x * ca
    m = jnp.mean(x, axis=1)
    mx = jnp.max(x, axis=1)
    mp = jnp.pad(m, ((0, 0), (PAD2, PAD2), (PAD2, PAD2)))
    xp = jnp.pad(mx, ((0, 0), (PAD2, PAD2), (PAD2, PAD2)))
    acc = jnp.zeros((N, H, W), jnp.float32)
    for ki in range(K2):
        for kj in range(K2):
            acc = acc + w2[0, ki, kj] * mp[:, ki:ki + H, kj:kj + W]
            acc = acc + w2[1, ki, kj] * xp[:, ki:ki + H, kj:kj + W]
    sa = jax.nn.sigmoid(acc)[:, None, :, :]
    return x * sa


if __name__ == "__main__":
    key = jax.random.PRNGKey(0)
    kx, k1, k2 = jax.random.split(key, 3)

    N, C, H, W = 2, 4, 16, 16  # conv_dim = C = 4; H*W = 256 (lane-dense)
    x = jax.random.normal(kx, (N, C, H, W), dtype=jnp.float32)

    # Deterministic synthetic weights (same shapes as nn.Conv1d(1,1,3) / nn.Conv2d(2,1,7))
    w1_flat = 0.3 * jax.random.normal(k1, (K1,), dtype=jnp.float32)            # (1,1,3) flat
    w2_flat = 0.05 * jax.random.normal(k2, (2 * K2 * K2,), dtype=jnp.float32)  # (1,2,7,7) flat

    out = cbam(x, w1_flat, w2_flat)
    out = jax.block_until_ready(out)

    ref = cbam_ref(x, w1_flat, w2_flat)
    assert out.shape == (N, C, H, W) and out.dtype == jnp.float32
    assert jnp.allclose(out, ref, atol=1e-5, rtol=1e-5), "mismatch vs reference"

    print("KERNEL_OK")
</pallas_src>

<mosaic_0001>
module attributes {stable_mosaic.version = 11 : i64} {
  func.func @cbam_kernel(%arg0: i32, %arg1: memref<3xf32, #tpu.memory_space<smem>>, %arg2: memref<98xf32, #tpu.memory_space<smem>>, %arg3: memref<2x4x256xf32, #tpu.memory_space<vmem>>, %arg4: memref<2x4x256xf32, #tpu.memory_space<vmem>>, %arg5: memref<2x2x22x22xf32, #tpu.memory_space<vmem>>) attributes {dimension_semantics = [#tpu.dimension_semantics<parallel>], iteration_bounds = array<i64: 1>, scalar_prefetch = 0 : i64, scratch_operands = 1 : i64, tpu.core_type = #tpu.core_type<tc>, window_params = [{transform_indices = @transform_0, window_bounds = array<i64: 3>}, {transform_indices = @transform_1, window_bounds = array<i64: 98>}, {transform_indices = @transform_2, window_bounds = array<i64: 2, 4, 256>}, {transform_indices = @transform_3, window_bounds = array<i64: 2, 4, 256>}]} {
    %c0 = arith.constant 0 : index
    %c0_0 = arith.constant 0 : index
    %c0_1 = arith.constant 0 : index
    %0 = vector.load %arg3[%c0, %c0_0, %c0_1] : memref<2x4x256xf32, #tpu.memory_space<vmem>>, vector<2x4x256xf32>
    %cst = arith.constant dense<0.000000e+00> : vector<2x4xf32>
    %1 = vector.multi_reduction <add>, %0, %cst [2] : vector<2x4x256xf32> to vector<2x4xf32>
    %cst_2 = arith.constant 2.560000e+02 : f32
    %2 = vector.broadcast %cst_2 : f32 to vector<2x4xf32>
    %3 = arith.divf %1, %2 : vector<2x4xf32>
    %cst_3 = arith.constant 0.000000e+00 : f32
    %4 = vector.broadcast %cst_3 : f32 to vector<2x1xf32>
    %5 = vector.extract_strided_slice %3 {offsets = [0, 0], sizes = [2, 3], strides = [1, 1]} : vector<2x4xf32> to vector<2x3xf32>
    %6 = tpu.concatenate %4, %5 in 1 : vector<2x1xf32>, vector<2x3xf32> -> vector<2x4xf32>
    %7 = vector.extract_strided_slice %3 {offsets = [0, 1], sizes = [2, 3], strides = [1, 1]} : vector<2x4xf32> to vector<2x3xf32>
    %8 = tpu.concatenate %7, %4 in 1 : vector<2x3xf32>, vector<2x1xf32> -> vector<2x4xf32>
    %c0_4 = arith.constant 0 : index
    %9 = memref.load %arg1[%c0_4] : memref<3xf32, #tpu.memory_space<smem>>
    %10 = vector.broadcast %9 : f32 to vector<2x4xf32>
    %11 = arith.mulf %10, %6 : vector<2x4xf32>
    %c1 = arith.constant 1 : index
    %12 = memref.load %arg1[%c1] : memref<3xf32, #tpu.memory_space<smem>>
    %13 = vector.broadcast %12 : f32 to vector<2x4xf32>
    %14 = arith.mulf %13, %3 : vector<2x4xf32>
    %15 = arith.addf %11, %14 : vector<2x4xf32>
    %c2 = arith.constant 2 : index
    %16 = memref.load %arg1[%c2] : memref<3xf32, #tpu.memory_space<smem>>
    %17 = vector.broadcast %16 : f32 to vector<2x4xf32>
    %18 = arith.mulf %17, %8 : vector<2x4xf32>
    %19 = arith.addf %15, %18 : vector<2x4xf32>
    %20 = arith.negf %19 : vector<2x4xf32>
    %21 = math.exp %20 : vector<2x4xf32>
    %cst_5 = arith.constant 1.000000e+00 : f32
    %22 = vector.broadcast %cst_5 : f32 to vector<2x4xf32>
    %23 = arith.addf %22, %21 : vector<2x4xf32>
    %24 = arith.divf %22, %23 : vector<2x4xf32>
    %25 = vector.shape_cast %24 : vector<2x4xf32> to vector<2x4x1xf32>
    %26 = vector.broadcast %25 : vector<2x4x1xf32> to vector<2x4x256xf32>
    %27 = arith.mulf %0, %26 : vector<2x4x256xf32>
    %cst_6 = arith.constant dense<0.000000e+00> : vector<2x256xf32>
    %28 = vector.multi_reduction <add>, %27, %cst_6 [1] : vector<2x4x256xf32> to vector<2x256xf32>
    %cst_7 = arith.constant 4.000000e+00 : f32
    %29 = vector.broadcast %cst_7 : f32 to vector<2x256xf32>
    %30 = arith.divf %28, %29 : vector<2x256xf32>
    %cst_8 = arith.constant dense<0xFF800000> : vector<2x256xf32>
    %31 = vector.multi_reduction <maximumf>, %27, %cst_8 [1] : vector<2x4x256xf32> to vector<2x256xf32>
    %cst_9 = arith.constant 0.000000e+00 : f32
    %32 = vector.broadcast %cst_9 : f32 to vector<2x2x22x22xf32>
    %c0_10 = arith.constant 0 : index
    %c0_11 = arith.constant 0 : index
    %c0_12 = arith.constant 0 : index
    %c0_13 = arith.constant 0 : index
    %33 = vector.load %arg5[%c0_10, %c0_11, %c0_12, %c0_13] : memref<2x2x22x22xf32, #tpu.memory_space<vmem>>, vector<2x2x22x22xf32>
    tpu.vector_store %arg5[%c0_10, %c0_11, %c0_12, %c0_13], %32 {strides = array<i32>} : memref<2x2x22x22xf32, #tpu.memory_space<vmem>>, vector<2x2x22x22xf32>,
    %34 = vector.shape_cast %30 : vector<2x256xf32> to vector<2x16x16xf32>
    %c0_14 = arith.constant 0 : index
    %c0_15 = arith.constant 0 : index
    %c3 = arith.constant 3 : index
    %c3_16 = arith.constant 3 : index
    %35 = vector.load %arg5[%c0_14, %c0_15, %c3, %c3_16] : memref<2x2x22x22xf32, #tpu.memory_space<vmem>>, vector<1x2x16x16xf32>
    %36 = vector.shape_cast %35 : vector<1x2x16x16xf32> to vector<2x16x16xf32>
    %37 = vector.shape_cast %34 : vector<2x16x16xf32> to vector<1x2x16x16xf32>
    tpu.vector_store %arg5[%c0_14, %c0_15, %c3, %c3_16], %37 {strides = array<i32>} : memref<2x2x22x22xf32, #tpu.memory_space<vmem>>, vector<1x2x16x16xf32>,
    %38 = vector.shape_cast %31 : vector<2x256xf32> to vector<2x16x16xf32>
    %c1_17 = arith.constant 1 : index
    %c0_18 = arith.constant 0 : index
    %c3_19 = arith.constant 3 : index
    %c3_20 = arith.constant 3 : index
    %39 = vector.load %arg5[%c1_17, %c0_18, %c3_19, %c3_20] : memref<2x2x22x22xf32, #tpu.memory_space<vmem>>, vector<1x2x16x16xf32>
    %40 = vector.shape_cast %39 : vector<1x2x16x16xf32> to vector<2x16x16xf32>
    %41 = vector.shape_cast %38 : vector<2x16x16xf32> to vector<1x2x16x16xf32>
    tpu.vector_store %arg5[%c1_17, %c0_18, %c3_19, %c3_20], %41 {strides = array<i32>} : memref<2x2x22x22xf32, #tpu.memory_space<vmem>>, vector<1x2x16x16xf32>,
    %c0_21 = arith.constant 0 : index
    %c0_22 = arith.constant 0 : index
    %c0_23 = arith.constant 0 : index
    %c0_24 = arith.constant 0 : index
    %42 = vector.load %arg5[%c0_21, %c0_22, %c0_23, %c0_24] : memref<2x2x22x22xf32, #tpu.memory_space<vmem>>, vector<1x2x22x22xf32>
    %43 = vector.shape_cast %42 : vector<1x2x22x22xf32> to vector<2x22x22xf32>
    %c1_25 = arith.constant 1 : index
    %c0_26 = arith.constant 0 : index
    %c0_27 = arith.constant 0 : index
    %c0_28 = arith.constant 0 : index
    %44 = vector.load %arg5[%c1_25, %c0_26, %c0_27, %c0_28] : memref<2x2x22x22xf32, #tpu.memory_space<vmem>>, vector<1x2x22x22xf32>
    %45 = vector.shape_cast %44 : vector<1x2x22x22xf32> to vector<2x22x22xf32>
    %c0_29 = arith.constant 0 : index
    %46 = memref.load %arg2[%c0_29] : memref<98xf32, #tpu.memory_space<smem>>
    %c1_30 = arith.constant 1 : index
    %47 = memref.load %arg2[%c1_30] : memref<98xf32, #tpu.memory_space<smem>>
    %c2_31 = arith.constant 2 : index
    %48 = memref.load %arg2[%c2_31] : memref<98xf32, #tpu.memory_space<smem>>
    %c3_32 = arith.constant 3 : index
    %49 = memref.load %arg2[%c3_32] : memref<98xf32, #tpu.memory_space<smem>>
    %c4 = arith.constant 4 : index
    %50 = memref.load %arg2[%c4] : memref<98xf32, #tpu.memory_space<smem>>
    %c5 = arith.constant 5 : index
    %51 = memref.load %arg2[%c5] : memref<98xf32, #tpu.memory_space<smem>>
    %c6 = arith.constant 6 : index
    %52 = memref.load %arg2[%c6] : memref<98xf32, #tpu.memory_space<smem>>
    %c7 = arith.constant 7 : index
    %53 = memref.load %arg2[%c7] : memref<98xf32, #tpu.memory_space<smem>>
    %c8 = arith.constant 8 : index
    %54 = memref.load %arg2[%c8] : memref<98xf32, #tpu.memory_space<smem>>
    %c9 = arith.constant 9 : index
    %55 = memref.load %arg2[%c9] : memref<98xf32, #tpu.memory_space<smem>>
    %c10 = arith.constant 10 : index
    %56 = memref.load %arg2[%c10] : memref<98xf32, #tpu.memory_space<smem>>
    %c11 = arith.constant 11 : index
    %57 = memref.load %arg2[%c11] : memref<98xf32, #tpu.memory_space<smem>>
    %c12 = arith.constant 12 : index
    %58 = memref.load %arg2[%c12] : memref<98xf32, #tpu.memory_space<smem>>
    %c13 = arith.constant 13 : index
    %59 = memref.load %arg2[%c13] : memref<98xf32, #tpu.memory_space<smem>>
    %c14 = arith.constant 14 : index
    %60 = memref.load %arg2[%c14] : memref<98xf32, #tpu.memory_space<smem>>
    %c15 = arith.constant 15 : index
    %61 = memref.load %arg2[%c15] : memref<98xf32, #tpu.memory_space<smem>>
    %c16 = arith.constant 16 : index
    %62 = memref.load %arg2[%c16] : memref<98xf32, #tpu.memory_space<smem>>
    %c17 = arith.constant 17 : index
    %63 = memref.load %arg2[%c17] : memref<98xf32, #tpu.memory_space<smem>>
    %c18 = arith.constant 18 : index
    %64 = memref.load %arg2[%c18] : memref<98xf32, #tpu.memory_space<smem>>
    %c19 = arith.constant 19 : index
    %65 = memref.load %arg2[%c19] : memref<98xf32, #tpu.memory_space<smem>>
    %c20 = arith.constant 20 : index
    %66 = memref.load %arg2[%c20] : memref<98xf32, #tpu.memory_space<smem>>
    %c21 = arith.constant 21 : index
    %67 = memref.load %arg2[%c21] : memref<98xf32, #tpu.memory_space<smem>>
    %c22 = arith.constant 22 : index
    %68 = memref.load %arg2[%c22] : memref<98xf32, #tpu.memory_space<smem>>
    %c23 = arith.constant 23 : index
    %69 = memref.load %arg2[%c23] : memref<98xf32, #tpu.memory_space<smem>>
    %c24 = arith.constant 24 : index
    %70 = memref.load %arg2[%c24] : memref<98xf32, #tpu.memory_space<smem>>
    %c25 = arith.constant 25 : index
    %71 = memref.load %arg2[%c25] : memref<98xf32, #tpu.memory_space<smem>>
    %c26 = arith.constant 26 : index
    %72 = memref.load %arg2[%c26] : memref<98xf32, #tpu.memory_space<smem>>
    %c27 = arith.constant 27 : index
    %73 = memref.load %arg2[%c27] : memref<98xf32, #tpu.memory_space<smem>>
    %c28 = arith.constant 28 : index
    %74 = memref.load %arg2[%c28] : memref<98xf32, #tpu.memory_space<smem>>
    %c29 = arith.constant 29 : index
    %75 = memref.load %arg2[%c29] : memref<98xf32, #tpu.memory_space<smem>>
    %c30 = arith.constant 30 : index
    %76 = memref.load %arg2[%c30] : memref<98xf32, #tpu.memory_space<smem>>
    %c31 = arith.constant 31 : index
    %77 = memref.load %arg2[%c31] : memref<98xf32, #tpu.memory_space<smem>>
    %c32 = arith.constant 32 : index
    %78 = memref.load %arg2[%c32] : memref<98xf32, #tpu.memory_space<smem>>
    %c33 = arith.constant 33 : index
    %79 = memref.load %arg2[%c33] : memref<98xf32, #tpu.memory_space<smem>>
    %c34 = arith.constant 34 : index
    %80 = memref.load %arg2[%c34] : memref<98xf32, #tpu.memory_space<smem>>
    %c35 = arith.constant 35 : index
    %81 = memref.load %arg2[%c35] : memref<98xf32, #tpu.memory_space<smem>>
    %c36 = arith.constant 36 : index
    %82 = memref.load %arg2[%c36] : memref<98xf32, #tpu.memory_space<smem>>
    %c37 = arith.constant 37 : index
    %83 = memref.load %arg2[%c37] : memref<98xf32, #tpu.memory_space<smem>>
    %c38 = arith.constant 38 : index
    %84 = memref.load %arg2[%c38] : memref<98xf32, #tpu.memory_space<smem>>
    %c39 = arith.constant 39 : index
    %85 = memref.load %arg2[%c39] : memref<98xf32, #tpu.memory_space<smem>>
    %c40 = arith.constant 40 : index
    %86 = memref.load %arg2[%c40] : memref<98xf32, #tpu.memory_space<smem>>
    %c41 = arith.constant 41 : index
    %87 = memref.load %arg2[%c41] : memref<98xf32, #tpu.memory_space<smem>>
    %c42 = arith.constant 42 : index
    %88 = memref.load %arg2[%c42] : memref<98xf32, #tpu.memory_space<smem>>
    %c43 = arith.constant 43 : index
    %89 = memref.load %arg2[%c43] : memref<98xf32, #tpu.memory_space<smem>>
    %c44 = arith.constant 44 : index
    %90 = memref.load %arg2[%c44] : memref<98xf32, #tpu.memory_space<smem>>
    %c45 = arith.constant 45 : index
    %91 = memref.load %arg2[%c45] : memref<98xf32, #tpu.memory_space<smem>>
    %c46 = arith.constant 46 : index
    %92 = memref.load %arg2[%c46] : memref<98xf32, #tpu.memory_space<smem>>
    %c47 = arith.constant 47 : index
    %93 = memref.load %arg2[%c47] : memref<98xf32, #tpu.memory_space<smem>>
    %c48 = arith.constant 48 : index
    %94 = memref.load %arg2[%c48] : memref<98xf32, #tpu.memory_space<smem>>
    %c49 = arith.constant 49 : index
    %95 = memref.load %arg2[%c49] : memref<98xf32, #tpu.memory_space<smem>>
    %c50 = arith.constant 50 : index
    %96 = memref.load %arg2[%c50] : memref<98xf32, #tpu.memory_space<smem>>
    %c51 = arith.constant 51 : index
    %97 = memref.load %arg2[%c51] : memref<98xf32, #tpu.memory_space<smem>>
    %c52 = arith.constant 52 : index
    %98 = memref.load %arg2[%c52] : memref<98xf32, #tpu.memory_space<smem>>
    %c53 = arith.constant 53 : index
    %99 = memref.load %arg2[%c53] : memref<98xf32, #tpu.memory_space<smem>>
    %c54 = arith.constant 54 : index
    %100 = memref.load %arg2[%c54] : memref<98xf32, #tpu.memory_space<smem>>
    %c55 = arith.constant 55 : index
    %101 = memref.load %arg2[%c55] : memref<98xf32, #tpu.memory_space<smem>>
    %c56 = arith.constant 56 : index
    %102 = memref.load %arg2[%c56] : memref<98xf32, #tpu.memory_space<smem>>
    %c57 = arith.constant 57 : index
    %103 = memref.load %arg2[%c57] : memref<98xf32, #tpu.memory_space<smem>>
    %c58 = arith.constant 58 : index
    %104 = memref.load %arg2[%c58] : memref<98xf32, #tpu.memory_space<smem>>
    %c59 = arith.constant 59 : index
    %105 = memref.load %arg2[%c59] : memref<98xf32, #tpu.memory_space<smem>>
    %c60 = arith.constant 60 : index
    %106 = memref.load %arg2[%c60] : memref<98xf32, #tpu.memory_space<smem>>
    %c61 = arith.constant 61 : index
    %107 = memref.load %arg2[%c61] : memref<98xf32, #tpu.memory_space<smem>>
    %c62 = arith.constant 62 : index
    %108 = memref.load %arg2[%c62] : memref<98xf32, #tpu.memory_space<smem>>
    %c63 = arith.constant 63 : index
    %109 = memref.load %arg2[%c63] : memref<98xf32, #tpu.memory_space<smem>>
    %c64 = arith.constant 64 : index
    %110 = memref.load %arg2[%c64] : memref<98xf32, #tpu.memory_space<smem>>
    %c65 = arith.constant 65 : index
    %111 = memref.load %arg2[%c65] : memref<98xf32, #tpu.memory_space<smem>>
    %c66 = arith.constant 66 : index
    %112 = memref.load %arg2[%c66] : memref<98xf32, #tpu.memory_space<smem>>
    %c67 = arith.constant 67 : index
    %113 = memref.load %arg2[%c67] : memref<98xf32, #tpu.memory_space<smem>>
    %c68 = arith.constant 68 : index
    %114 = memref.load %arg2[%c68] : memref<98xf32, #tpu.memory_space<smem>>
    %c69 = arith.constant 69 : index
    %115 = memref.load %arg2[%c69] : memref<98xf32, #tpu.memory_space<smem>>
    %c70 = arith.constant 70 : index
    %116 = memref.load %arg2[%c70] : memref<98xf32, #tpu.memory_space<smem>>
    %c71 = arith.constant 71 : index
    %117 = memref.load %arg2[%c71] : memref<98xf32, #tpu.memory_space<smem>>
    %c72 = arith.constant 72 : index
    %118 = memref.load %arg2[%c72] : memref<98xf32, #tpu.memory_space<smem>>
    %c73 = arith.constant 73 : index
    %119 = memref.load %arg2[%c73] : memref<98xf32, #tpu.memory_space<smem>>
    %c74 = arith.constant 74 : index
    %120 = memref.load %arg2[%c74] : memref<98xf32, #tpu.memory_space<smem>>
    %c75 = arith.constant 75 : index
    %121 = memref.load %arg2[%c75] : memref<98xf32, #tpu.memory_space<smem>>
    %c76 = arith.constant 76 : index
    %122 = memref.load %arg2[%c76] : memref<98xf32, #tpu.memory_space<smem>>
    %c77 = arith.constant 77 : index
    %123 = memref.load %arg2[%c77] : memref<98xf32, #tpu.memory_space<smem>>
    %c78 = arith.constant 78 : index
    %124 = memref.load %arg2[%c78] : memref<98xf32, #tpu.memory_space<smem>>
    %c79 = arith.constant 79 : index
    %125 = memref.load %arg2[%c79] : memref<98xf32, #tpu.memory_space<smem>>
    %c80 = arith.constant 80 : index
    %126 = memref.load %arg2[%c80] : memref<98xf32, #tpu.memory_space<smem>>
    %c81 = arith.constant 81 : index
    %127 = memref.load %arg2[%c81] : memref<98xf32, #tpu.memory_space<smem>>
    %c82 = arith.constant 82 : index
    %128 = memref.load %arg2[%c82] : memref<98xf32, #tpu.memory_space<smem>>
    %c83 = arith.constant 83 : index
    %129 = memref.load %arg2[%c83] : memref<98xf32, #tpu.memory_space<smem>>
    %c84 = arith.constant 84 : index
    %130 = memref.load %arg2[%c84] : memref<98xf32, #tpu.memory_space<smem>>
    %c85 = arith.constant 85 : index
    %131 = memref.load %arg2[%c85] : memref<98xf32, #tpu.memory_space<smem>>
    %c86 = arith.constant 86 : index
    %132 = memref.load %arg2[%c86] : memref<98xf32, #tpu.memory_space<smem>>
    %c87 = arith.constant 87 : index
    %133 = memref.load %arg2[%c87] : memref<98xf32, #tpu.memory_space<smem>>
    %c88 = arith.constant 88 : index
    %134 = memref.load %arg2[%c88] : memref<98xf32, #tpu.memory_space<smem>>
    %c89 = arith.constant 89 : index
    %135 = memref.load %arg2[%c89] : memref<98xf32, #tpu.memory_space<smem>>
    %c90 = arith.constant 90 : index
    %136 = memref.load %arg2[%c90] : memref<98xf32, #tpu.memory_space<smem>>
    %c91 = arith.constant 91 : index
    %137 = memref.load %arg2[%c91] : memref<98xf32, #tpu.memory_space<smem>>
    %c92 = arith.constant 92 : index
    %138 = memref.load %arg2[%c92] : memref<98xf32, #tpu.memory_space<smem>>
    %c93 = arith.constant 93 : index
    %139 = memref.load %arg2[%c93] : memref<98xf32, #tpu.memory_space<smem>>
    %c94 = arith.constant 94 : index
    %140 = memref.load %arg2[%c94] : memref<98xf32, #tpu.memory_space<smem>>
    %c95 = arith.constant 95 : index
    %141 = memref.load %arg2[%c95] : memref<98xf32, #tpu.memory_space<smem>>
    %c96 = arith.constant 96 : index
    %142 = memref.load %arg2[%c96] : memref<98xf32, #tpu.memory_space<smem>>
    %c97 = arith.constant 97 : index
    %143 = memref.load %arg2[%c97] : memref<98xf32, #tpu.memory_space<smem>>
    %cst_33 = arith.constant 0.000000e+00 : f32
    %144 = vector.broadcast %cst_33 : f32 to vector<2x16x16xf32>
    %145 = vector.extract_strided_slice %43 {offsets = [0, 0, 0], sizes = [2, 22, 16], strides = [1, 1, 1]} : vector<2x22x22xf32> to vector<2x22x16xf32>
    %146 = vector.extract_strided_slice %45 {offsets = [0, 0, 0], sizes = [2, 22, 16], strides = [1, 1, 1]} : vector<2x22x22xf32> to vector<2x22x16xf32>
    %147 = vector.extract_strided_slice %145 {offsets = [0, 0, 0], sizes = [2, 16, 16], strides = [1, 1, 1]} : vector<2x22x16xf32> to vector<2x16x16xf32>
    %148 = vector.broadcast %46 : f32 to vector<2x16x16xf32>
    %149 = arith.mulf %148, %147 : vector<2x16x16xf32>
    %150 = arith.addf %144, %149 : vector<2x16x16xf32>
    %151 = vector.extract_strided_slice %146 {offsets = [0, 0, 0], sizes = [2, 16, 16], strides = [1, 1, 1]} : vector<2x22x16xf32> to vector<2x16x16xf32>
    %152 = vector.broadcast %95 : f32 to vector<2x16x16xf32>
    %153 = arith.mulf %152, %151 : vector<2x16x16xf32>
    %154 = arith.addf %150, %153 : vector<2x16x16xf32>
    %155 = vector.extract_strided_slice %145 {offsets = [0, 1, 0], sizes = [2, 16, 16], strides = [1, 1, 1]} : vector<2x22x16xf32> to vector<2x16x16xf32>
    %156 = vector.broadcast %53 : f32 to vector<2x16x16xf32>
    %157 = arith.mulf %156, %155 : vector<2x16x16xf32>
    %158 = arith.addf %154, %157 : vector<2x16x16xf32>
    %159 = vector.extract_strided_slice %146 {offsets = [0, 1, 0], sizes = [2, 16, 16], strides = [1, 1, 1]} : vector<2x22x16xf32> to vector<2x16x16xf32>
    %160 = vector.broadcast %102 : f32 to vector<2x16x16xf32>
    %161 = arith.mulf %160, %159 : vector<2x16x16xf32>
    %162 = arith.addf %158, %161 : vector<2x16x16xf32>
    %163 = vector.extract_strided_slice %145 {offsets = [0, 2, 0], sizes = [2, 16, 16], strides = [1, 1, 1]} : vector<2x22x16xf32> to vector<2x16x16xf32>
    %164 = vector.broadcast %60 : f32 to vector<2x16x16xf32>
    %165 = arith.mulf %164, %163 : vector<2x16x16xf32>
    %166 = arith.addf %162, %165 : vector<2x16x16xf32>
    %167 = vector.extract_strided_slice %146 {offsets = [0, 2, 0], sizes = [2, 16, 16], strides = [1, 1, 1]} : vector<2x22x16xf32> to vector<2x16x16xf32>
    %168 = vector.broadcast %109 : f32 to vector<2x16x16xf32>
    %169 = arith.mulf %168, %167 : vector<2x16x16xf32>
    %170 = arith.addf %166, %169 : vector<2x16x16xf32>
    %171 = vector.extract_strided_slice %145 {offsets = [0, 3, 0], sizes = [2, 16, 16], strides = [1, 1, 1]} : vector<2x22x16xf32> to vector<2x16x16xf32>
    %172 = vector.broadcast %67 : f32 to vector<2x16x16xf32>
    %173 = arith.mulf %172, %171 : vector<2x16x16xf32>
    %174 = arith.addf %170, %173 : vector<2x16x16xf32>
    %175 = vector.extract_strided_slice %146 {offsets = [0, 3, 0], sizes = [2, 16, 16], strides = [1, 1, 1]} : vector<2x22x16xf32> to vector<2x16x16xf32>
    %176 = vector.broadcast %116 : f32 to vector<2x16x16xf32>
    %177 = arith.mulf %176, %175 : vector<2x16x16xf32>
    %178 = arith.addf %174, %177 : vector<2x16x16xf32>
    %179 = vector.extract_strided_slice %145 {offsets = [0, 4, 0], sizes = [2, 16, 16], strides = [1, 1, 1]} : vector<2x22x16xf32> to vector<2x16x16xf32>
    %180 = vector.broadcast %74 : f32 to vector<2x16x16xf32>
    %181 = arith.mulf %180, %179 : vector<2x16x16xf32>
    %182 = arith.addf %178, %181 : vector<2x16x16xf32>
    %183 = vector.extract_strided_slice %146 {offsets = [0, 4, 0], sizes = [2, 16, 16], strides = [1, 1, 1]} : vector<2x22x16xf32> to vector<2x16x16xf32>
    %184 = vector.broadcast %123 : f32 to vector<2x16x16xf32>
    %185 = arith.mulf %184, %183 : vector<2x16x16xf32>
    %186 = arith.addf %182, %185 : vector<2x16x16xf32>
    %187 = vector.extract_strided_slice %145 {offsets = [0, 5, 0], sizes = [2, 16, 16], strides = [1, 1, 1]} : vector<2x22x16xf32> to vector<2x16x16xf32>
    %188 = vector.broadcast %81 : f32 to vector<2x16x16xf32>
    %189 = arith.mulf %188, %187 : vector<2x16x16xf32>
    %190 = arith.addf %186, %189 : vector<2x16x16xf32>
    %191 = vector.extract_strided_slice %146 {offsets = [0, 5, 0], sizes = [2, 16, 16], strides = [1, 1, 1]} : vector<2x22x16xf32> to vector<2x16x16xf32>
    %192 = vector.broadcast %130 : f32 to vector<2x16x16xf32>
    %193 = arith.mulf %192, %191 : vector<2x16x16xf32>
    %194 = arith.addf %190, %193 : vector<2x16x16xf32>
    %195 = vector.extract_strided_slice %145 {offsets = [0, 6, 0], sizes = [2, 16, 16], strides = [1, 1, 1]} : vector<2x22x16xf32> to vector<2x16x16xf32>
    %196 = vector.broadcast %88 : f32 to vector<2x16x16xf32>
    %197 = arith.mulf %196, %195 : vector<2x16x16xf32>
    %198 = arith.addf %194, %197 : vector<2x16x16xf32>
    %199 = vector.extract_strided_slice %146 {offsets = [0, 6, 0], sizes = [2, 16, 16], strides = [1, 1, 1]} : vector<2x22x16xf32> to vector<2x16x16xf32>
    %200 = vector.broadcast %137 : f32 to vector<2x16x16xf32>
    %201 = arith.mulf %200, %199 : vector<2x16x16xf32>
    %202 = arith.addf %198, %201 : vector<2x16x16xf32>
    %203 = vector.extract_strided_slice %43 {offsets = [0, 0, 1], sizes = [2, 22, 16], strides = [1, 1, 1]} : vector<2x22x22xf32> to vector<2x22x16xf32>
    %204 = vector.extract_strided_slice %45 {offsets = [0, 0, 1], sizes = [2, 22, 16], strides = [1, 1, 1]} : vector<2x22x22xf32> to vector<2x22x16xf32>
    %205 = vector.extract_strided_slice %203 {offsets = [0, 0, 0], sizes = [2, 16, 16], strides = [1, 1, 1]} : vector<2x22x16xf32> to vector<2x16x16xf32>
    %206 = vector.broadcast %47 : f32 to vector<2x16x16xf32>
    %207 = arith.mulf %206, %205 : vector<2x16x16xf32>
    %208 = arith.addf %202, %207 : vector<2x16x16xf32>
    %209 = vector.extract_strided_slice %204 {offsets = [0, 0, 0], sizes = [2, 16, 16], strides = [1, 1, 1]} : vector<2x22x16xf32> to vector<2x16x16xf32>
    %210 = vector.broadcast %96 : f32 to vector<2x16x16xf32>
    %211 = arith.mulf %210, %209 : vector<2x16x16xf32>
    %212 = arith.addf %208, %211 : vector<2x16x16xf32>
    %213 = vector.extract_strided_slice %203 {offsets = [0, 1, 0], sizes = [2, 16, 16], strides = [1, 1, 1]} : vector<2x22x16xf32> to vector<2x16x16xf32>
    %214 = vector.broadcast %54 : f32 to vector<2x16x16xf32>
    %215 = arith.mulf %214, %213 : vector<2x16x16xf32>
    %216 = arith.addf %212, %215 : vector<2x16x16xf32>
    %217 = vector.extract_strided_slice %204 {offsets = [0, 1, 0], sizes = [2, 16, 16], strides = [1, 1, 1]} : vector<2x22x16xf32> to vector<2x16x16xf32>
    %218 = vector.broadcast %103 : f32 to vector<2x16x16xf32>
    %219 = arith.mulf %218, %217 : vector<2x16x16xf32>
    %220 = arith.addf %216, %219 : vector<2x16x16xf32>
    %221 = vector.extract_strided_slice %203 {offsets = [0, 2, 0], sizes = [2, 16, 16], strides = [1, 1, 1]} : vector<2x22x16xf32> to vector<2x16x16xf32>
    %222 = vector.broadcast %61 : f32 to vector<2x16x16xf32>
    %223 = arith.mulf %222, %221 : vector<2x16x16xf32>
    %224 = arith.addf %220, %223 : vector<2x16x16xf32>
    %225 = vector.extract_strided_slice %204 {offsets = [0, 2, 0], sizes = [2, 16, 16], strides = [1, 1, 1]} : vector<2x22x16xf32> to vector<2x16x16xf32>
    %226 = vector.broadcast %110 : f32 to vector<2x16x16xf32>
    %227 = arith.mulf %226, %225 : vector<2x16x16xf32>
    %228 = arith.addf %224, %227 : vector<2x16x16xf32>
    %229 = vector.extract_strided_slice %203 {offsets = [0, 3, 0], sizes = [2, 16, 16], strides = [1, 1, 1]} : vector<2x22x16xf32> to vector<2x16x16xf32>
    %230 = vector.broadcast %68 : f32 to vector<2x16x16xf32>
    %231 = arith.mulf %230, %229 : vector<2x16x16xf32>
    %232 = arith.addf %228, %231 : vector<2x16x16xf32>
    %233 = vector.extract_strided_slice %204 {offsets = [0, 3, 0], sizes = [2, 16, 16], strides = [1, 1, 1]} : vector<2x22x16xf32> to vector<2x16x16xf32>
    %234 = vector.broadcast %117 : f32 to vector<2x16x16xf32>
    %235 = arith.mulf %234, %233 : vector<2x16x16xf32>
    %236 = arith.addf %232, %235 : vector<2x16x16xf32>
    %237 = vector.extract_strided_slice %203 {offsets = [0, 4, 0], sizes = [2, 16, 16], strides = [1, 1, 1]} : vector<2x22x16xf32> to vector<2x16x16xf32>
    %238 = vector.broadcast %75 : f32 to vector<2x16x16xf32>
    %239 = arith.mulf %238, %237 : vector<2x16x16xf32>
    %240 = arith.addf %236, %239 : vector<2x16x16xf32>
    %241 = vector.extract_strided_slice %204 {offsets = [0, 4, 0], sizes = [2, 16, 16], strides = [1, 1, 1]} : vector<2x22x16xf32> to vector<2x16x16xf32>
    %242 = vector.broadcast %124 : f32 to vector<2x16x16xf32>
    %243 = arith.mulf %242, %241 : vector<2x16x16xf32>
    %244 = arith.addf %240, %243 : vector<2x16x16xf32>
    %245 = vector.extract_strided_slice %203 {offsets = [0, 5, 0], sizes = [2, 16, 16], strides = [1, 1, 1]} : vector<2x22x16xf32> to vector<2x16x16xf32>
    %246 = vector.broadcast %82 : f32 to vector<2x16x16xf32>
    %247 = arith.mulf %246, %245 : vector<2x16x16xf32>
    %248 = arith.addf %244, %247 : vector<2x16x16xf32>
    %249 = vector.extract_strided_slice %204 {offsets = [0, 5, 0], sizes = [2, 16, 16], strides = [1, 1, 1]} : vector<2x22x16xf32> to vector<2x16x16xf32>
    %250 = vector.broadcast %131 : f32 to vector<2x16x16xf32>
    %251 = arith.mulf %250, %249 : vector<2x16x16xf32>
    %252 = arith.addf %248, %251 : vector<2x16x16xf32>
    %253 = vector.extract_strided_slice %203 {offsets = [0, 6, 0], sizes = [2, 16, 16], strides = [1, 1, 1]} : vector<2x22x16xf32> to vector<2x16x16xf32>
    %254 = vector.broadcast %89 : f32 to vector<2x16x16xf32>
    %255 = arith.mulf %254, %253 : vector<2x16x16xf32>
    %256 = arith.addf %252, %255 : vector<2x16x16xf32>
    %257 = vector.extract_strided_slice %204 {offsets = [0, 6, 0], sizes = [2, 16, 16], strides = [1, 1, 1]} : vector<2x22x16xf32> to vector<2x16x16xf32>
    %258 = vector.broadcast %138 : f32 to vector<2x16x16xf32>
    %259 = arith.mulf %258, %257 : vector<2x16x16xf32>
    %260 = arith.addf %256, %259 : vector<2x16x16xf32>
    %261 = vector.extract_strided_slice %43 {offsets = [0, 0, 2], sizes = [2, 22, 16], strides = [1, 1, 1]} : vector<2x22x22xf32> to vector<2x22x16xf32>
    %262 = vector.extract_strided_slice %45 {offsets = [0, 0, 2], sizes = [2, 22, 16], strides = [1, 1, 1]} : vector<2x22x22xf32> to vector<2x22x16xf32>
    %263 = vector.extract_strided_slice %261 {offsets = [0, 0, 0], sizes = [2, 16, 16], strides = [1, 1, 1]} : vector<2x22x16xf32> to vector<2x16x16xf32>
    %264 = vector.broadcast %48 : f32 to vector<2x16x16xf32>
    %265 = arith.mulf %264, %263 : vector<2x16x16xf32>
    %266 = arith.addf %260, %265 : vector<2x16x16xf32>
    %267 = vector.extract_strided_slice %262 {offsets = [0, 0, 0], sizes = [2, 16, 16], strides = [1, 1, 1]} : vector<2x22x16xf32> to vector<2x16x16xf32>
    %268 = vector.broadcast %97 : f32 to vector<2x16x16xf32>
    %269 = arith.mulf %268, %267 : vector<2x16x16xf32>
    %270 = arith.addf %266, %269 : vector<2x16x16xf32>
    %271 = vector.extract_strided_slice %261 {offsets = [0, 1, 0], sizes = [2, 16, 16], strides = [1, 1, 1]} : vector<2x22x16xf32> to vector<2x16x16xf32>
    %272 = vector.broadcast %55 : f32 to vector<2x16x16xf32>
    %273 = arith.mulf %272, %271 : vector<2x16x16xf32>
    %274 = arith.addf %270, %273 : vector<2x16x16xf32>
    %275 = vector.extract_strided_slice %262 {offsets = [0, 1, 0], sizes = [2, 16, 16], strides = [1, 1, 1]} : vector<2x22x16xf32> to vector<2x16x16xf32>
    %276 = vector.broadcast %104 : f32 to vector<2x16x16xf32>
    %277 = arith.mulf %276, %275 : vector<2x16x16xf32>
    %278 = arith.addf %274, %277 : vector<2x16x16xf32>
    %279 = vector.extract_strided_slice %261 {offsets = [0, 2, 0], sizes = [2, 16, 16], strides = [1, 1, 1]} : vector<2x22x16xf32> to vector<2x16x16xf32>
    %280 = vector.broadcast %62 : f32 to vector<2x16x16xf32>
    %281 = arith.mulf %280, %279 : vector<2x16x16xf32>
    %282 = arith.addf %278, %281 : vector<2x16x16xf32>
    %283 = vector.extract_strided_slice %262 {offsets = [0, 2, 0], sizes = [2, 16, 16], strides = [1, 1, 1]} : vector<2x22x16xf32> to vector<2x16x16xf32>
    %284 = vector.broadcast %111 : f32 to vector<2x16x16xf32>
    %285 = arith.mulf %284, %283 : vector<2x16x16xf32>
    %286 = arith.addf %282, %285 : vector<2x16x16xf32>
    %287 = vector.extract_strided_slice %261 {offsets = [0, 3, 0], sizes = [2, 16, 16], strides = [1, 1, 1]} : vector<2x22x16xf32> to vector<2x16x16xf32>
    %288 = vector.broadcast %69 : f32 to vector<2x16x16xf32>
    %289 = arith.mulf %288, %287 : vector<2x16x16xf32>
    %290 = arith.addf %286, %289 : vector<2x16x16xf32>
    %291 = vector.extract_strided_slice %262 {offsets = [0, 3, 0], sizes = [2, 16, 16], strides = [1, 1, 1]} : vector<2x22x16xf32> to vector<2x16x16xf32>
    %292 = vector.broadcast %118 : f32 to vector<2x16x16xf32>
    %293 = arith.mulf %292, %291 : vector<2x16x16xf32>
    %294 = arith.addf %290, %293 : vector<2x16x16xf32>
    %295 = vector.extract_strided_slice %261 {offsets = [0, 4, 0], sizes = [2, 16, 16], strides = [1, 1, 1]} : vector<2x22x16xf32> to vector<2x16x16xf32>
    %296 = vector.broadcast %76 : f32 to vector<2x16x16xf32>
    %297 = arith.mulf %296, %295 : vector<2x16x16xf32>
    %298 = arith.addf %294, %297 : vector<2x16x16xf32>
    %299 = vector.extract_strided_slice %262 {offsets = [0, 4, 0], sizes = [2, 16, 16], strides = [1, 1, 1]} : vector<2x22x16xf32> to vector<2x16x16xf32>
    %300 = vector.broadcast %125 : f32 to vector<2x16x16xf32>
    %301 = arith.mulf %300, %299 : vector<2x16x16xf32>
    %302 = arith.addf %298, %301 : vector<2x16x16xf32>
    %303 = vector.extract_strided_slice %261 {offsets = [0, 5, 0], sizes = [2, 16, 16], strides = [1, 1, 1]} : vector<2x22x16xf32> to vector<2x16x16xf32>
    %304 = vector.broadcast %83 : f32 to vector<2x16x16xf32>
    %305 = arith.mulf %304, %303 : vector<2x16x16xf32>
    %306 = arith.addf %302, %305 : vector<2x16x16xf32>
    %307 = vector.extract_strided_slice %262 {offsets = [0, 5, 0], sizes = [2, 16, 16], strides = [1, 1, 1]} : vector<2x22x16xf32> to vector<2x16x16xf32>
    %308 = vector.broadcast %132 : f32 to vector<2x16x16xf32>
    %309 = arith.mulf %308, %307 : vector<2x16x16xf32>
    %310 = arith.addf %306, %309 : vector<2x16x16xf32>
    %311 = vector.extract_strided_slice %261 {offsets = [0, 6, 0], sizes = [2, 16, 16], strides = [1, 1, 1]} : vector<2x22x16xf32> to vector<2x16x16xf32>
    %312 = vector.broadcast %90 : f32 to vector<2x16x16xf32>
    %313 = arith.mulf %312, %311 : vector<2x16x16xf32>
    %314 = arith.addf %310, %313 : vector<2x16x16xf32>
    %315 = vector.extract_strided_slice %262 {offsets = [0, 6, 0], sizes = [2, 16, 16], strides = [1, 1, 1]} : vector<2x22x16xf32> to vector<2x16x16xf32>
    %316 = vector.broadcast %139 : f32 to vector<2x16x16xf32>
    %317 = arith.mulf %316, %315 : vector<2x16x16xf32>
    %318 = arith.addf %314, %317 : vector<2x16x16xf32>
    %319 = vector.extract_strided_slice %43 {offsets = [0, 0, 3], sizes = [2, 22, 16], strides = [1, 1, 1]} : vector<2x22x22xf32> to vector<2x22x16xf32>
    %320 = vector.extract_strided_slice %45 {offsets = [0, 0, 3], sizes = [2, 22, 16], strides = [1, 1, 1]} : vector<2x22x22xf32> to vector<2x22x16xf32>
    %321 = vector.extract_strided_slice %319 {offsets = [0, 0, 0], sizes = [2, 16, 16], strides = [1, 1, 1]} : vector<2x22x16xf32> to vector<2x16x16xf32>
    %322 = vector.broadcast %49 : f32 to vector<2x16x16xf32>
    %323 = arith.mulf %322, %321 : vector<2x16x16xf32>
    %324 = arith.addf %318, %323 : vector<2x16x16xf32>
    %325 = vector.extract_strided_slice %320 {offsets = [0, 0, 0], sizes = [2, 16, 16], strides = [1, 1, 1]} : vector<2x22x16xf32> to vector<2x16x16xf32>
    %326 = vector.broadcast %98 : f32 to vector<2x16x16xf32>
    %327 = arith.mulf %326, %325 : vector<2x16x16xf32>
    %328 = arith.addf %324, %327 : vector<2x16x16xf32>
    %329 = vector.extract_strided_slice %319 {offsets = [0, 1, 0], sizes = [2, 16, 16], strides = [1, 1, 1]} : vector<2x22x16xf32> to vector<2x16x16xf32>
    %330 = vector.broadcast %56 : f32 to vector<2x16x16xf32>
    %331 = arith.mulf %330, %329 : vector<2x16x16xf32>
    %332 = arith.addf %328, %331 : vector<2x16x16xf32>
    %333 = vector.extract_strided_slice %320 {offsets = [0, 1, 0], sizes = [2, 16, 16], strides = [1, 1, 1]} : vector<2x22x16xf32> to vector<2x16x16xf32>
    %334 = vector.broadcast %105 : f32 to vector<2x16x16xf32>
    %335 = arith.mulf %334, %333 : vector<2x16x16xf32>
    %336 = arith.addf %332, %335 : vector<2x16x16xf32>
    %337 = vector.extract_strided_slice %319 {offsets = [0, 2, 0], sizes = [2, 16, 16], strides = [1, 1, 1]} : vector<2x22x16xf32> to vector<2x16x16xf32>
    %338 = vector.broadcast %63 : f32 to vector<2x16x16xf32>
    %339 = arith.mulf %338, %337 : vector<2x16x16xf32>
    %340 = arith.addf %336, %339 : vector<2x16x16xf32>
    %341 = vector.extract_strided_slice %320 {offsets = [0, 2, 0], sizes = [2, 16, 16], strides = [1, 1, 1]} : vector<2x22x16xf32> to vector<2x16x16xf32>
    %342 = vector.broadcast %112 : f32 to vector<2x16x16xf32>
    %343 = arith.mulf %342, %341 : vector<2x16x16xf32>
    %344 = arith.addf %340, %343 : vector<2x16x16xf32>
    %345 = vector.extract_strided_slice %319 {offsets = [0, 3, 0], sizes = [2, 16, 16], strides = [1, 1, 1]} : vector<2x22x16xf32> to vector<2x16x16xf32>
    %346 = vector.broadcast %70 : f32 to vector<2x16x16xf32>
    %347 = arith.mulf %346, %345 : vector<2x16x16xf32>
    %348 = arith.addf %344, %347 : vector<2x16x16xf32>
    %349 = vector.extract_strided_slice %320 {offsets = [0, 3, 0], sizes = [2, 16, 16], strides = [1, 1, 1]} : vector<2x22x16xf32> to vector<2x16x16xf32>
    %350 = vector.broadcast %119 : f32 to vector<2x16x16xf32>
    %351 = arith.mulf %350, %349 : vector<2x16x16xf32>
    %352 = arith.addf %348, %351 : vector<2x16x16xf32>
    %353 = vector.extract_strided_slice %319 {offsets = [0, 4, 0], sizes = [2, 16, 16], strides = [1, 1, 1]} : vector<2x22x16xf32> to vector<2x16x16xf32>
    %354 = vector.broadcast %77 : f32 to vector<2x16x16xf32>
    %355 = arith.mulf %354, %353 : vector<2x16x16xf32>
    %356 = arith.addf %352, %355 : vector<2x16x16xf32>
    %357 = vector.extract_strided_slice %320 {offsets = [0, 4, 0], sizes = [2, 16, 16], strides = [1, 1, 1]} : vector<2x22x16xf32> to vector<2x16x16xf32>
    %358 = vector.broadcast %126 : f32 to vector<2x16x16xf32>
    %359 = arith.mulf %358, %357 : vector<2x16x16xf32>
    %360 = arith.addf %356, %359 : vector<2x16x16xf32>
    %361 = vector.extract_strided_slice %319 {offsets = [0, 5, 0], sizes = [2, 16, 16], strides = [1, 1, 1]} : vector<2x22x16xf32> to vector<2x16x16xf32>
    %362 = vector.broadcast %84 : f32 to vector<2x16x16xf32>
    %363 = arith.mulf %362, %361 : vector<2x16x16xf32>
    %364 = arith.addf %360, %363 : vector<2x16x16xf32>
    %365 = vector.extract_strided_slice %320 {offsets = [0, 5, 0], sizes = [2, 16, 16], strides = [1, 1, 1]} : vector<2x22x16xf32> to vector<2x16x16xf32>
    %366 = vector.broadcast %133 : f32 to vector<2x16x16xf32>
    %367 = arith.mulf %366, %365 : vector<2x16x16xf32>
    %368 = arith.addf %364, %367 : vector<2x16x16xf32>
    %369 = vector.extract_strided_slice %319 {offsets = [0, 6, 0], sizes = [2, 16, 16], strides = [1, 1, 1]} : vector<2x22x16xf32> to vector<2x16x16xf32>
    %370 = vector.broadcast %91 : f32 to vector<2x16x16xf32>
    %371 = arith.mulf %370, %369 : vector<2x16x16xf32>
    %372 = arith.addf %368, %371 : vector<2x16x16xf32>
    %373 = vector.extract_strided_slice %320 {offsets = [0, 6, 0], sizes = [2, 16, 16], strides = [1, 1, 1]} : vector<2x22x16xf32> to vector<2x16x16xf32>
    %374 = vector.broadcast %140 : f32 to vector<2x16x16xf32>
    %375 = arith.mulf %374, %373 : vector<2x16x16xf32>
    %376 = arith.addf %372, %375 : vector<2x16x16xf32>
    %377 = vector.extract_strided_slice %43 {offsets = [0, 0, 4], sizes = [2, 22, 16], strides = [1, 1, 1]} : vector<2x22x22xf32> to vector<2x22x16xf32>
    %378 = vector.extract_strided_slice %45 {offsets = [0, 0, 4], sizes = [2, 22, 16], strides = [1, 1, 1]} : vector<2x22x22xf32> to vector<2x22x16xf32>
    %379 = vector.extract_strided_slice %377 {offsets = [0, 0, 0], sizes = [2, 16, 16], strides = [1, 1, 1]} : vector<2x22x16xf32> to vector<2x16x16xf32>
    %380 = vector.broadcast %50 : f32 to vector<2x16x16xf32>
    %381 = arith.mulf %380, %379 : vector<2x16x16xf32>
    %382 = arith.addf %376, %381 : vector<2x16x16xf32>
    %383 = vector.extract_strided_slice %378 {offsets = [0, 0, 0], sizes = [2, 16, 16], strides = [1, 1, 1]} : vector<2x22x16xf32> to vector<2x16x16xf32>
    %384 = vector.broadcast %99 : f32 to vector<2x16x16xf32>
    %385 = arith.mulf %384, %383 : vector<2x16x16xf32>
    %386 = arith.addf %382, %385 : vector<2x16x16xf32>
    %387 = vector.extract_strided_slice %377 {offsets = [0, 1, 0], sizes = [2, 16, 16], strides = [1, 1, 1]} : vector<2x22x16xf32> to vector<2x16x16xf32>
    %388 = vector.broadcast %57 : f32 to vector<2x16x16xf32>
    %389 = arith.mulf %388, %387 : vector<2x16x16xf32>
    %390 = arith.addf %386, %389 : vector<2x16x16xf32>
    %391 = vector.extract_strided_slice %378 {offsets = [0, 1, 0], sizes = [2, 16, 16], strides = [1, 1, 1]} : vector<2x22x16xf32> to vector<2x16x16xf32>
    %392 = vector.broadcast %106 : f32 to vector<2x16x16xf32>
    %393 = arith.mulf %392, %391 : vector<2x16x16xf32>
    %394 = arith.addf %390, %393 : vector<2x16x16xf32>
    %395 = vector.extract_strided_slice %377 {offsets = [0, 2, 0], sizes = [2, 16, 16], strides = [1, 1, 1]} : vector<2x22x16xf32> to vector<2x16x16xf32>
    %396 = vector.broadcast %64 : f32 to vector<2x16x16xf32>
    %397 = arith.mulf %396, %395 : vector<2x16x16xf32>
    %398 = arith.addf %394, %397 : vector<2x16x16xf32>
    %399 = vector.extract_strided_slice %378 {offsets = [0, 2, 0], sizes = [2, 16, 16], strides = [1, 1, 1]} : vector<2x22x16xf32> to vector<2x16x16xf32>
    %400 = vector.broadcast %113 : f32 to vector<2x16x16xf32>
    %401 = arith.mulf %400, %399 : vector<2x16x16xf32>
    %402 = arith.addf %398, %401 : vector<2x16x16xf32>
    %403 = vector.extract_strided_slice %377 {offsets = [0, 3, 0], sizes = [2, 16, 16], strides = [1, 1, 1]} : vector<2x22x16xf32> to vector<2x16x16xf32>
    %404 = vector.broadcast %71 : f32 to vector<2x16x16xf32>
    %405 = arith.mulf %404, %403 : vector<2x16x16xf32>
    %406 = arith.addf %402, %405 : vector<2x16x16xf32>
    %407 = vector.extract_strided_slice %378 {offsets = [0, 3, 0], sizes = [2, 16, 16], strides = [1, 1, 1]} : vector<2x22x16xf32> to vector<2x16x16xf32>
    %408 = vector.broadcast %120 : f32 to vector<2x16x16xf32>
    %409 = arith.mulf %408, %407 : vector<2x16x16xf32>
    %410 = arith.addf %406, %409 : vector<2x16x16xf32>
    %411 = vector.extract_strided_slice %377 {offsets = [0, 4, 0], sizes = [2, 16, 16], strides = [1, 1, 1]} : vector<2x22x16xf32> to vector<2x16x16xf32>
    %412 = vector.broadcast %78 : f32 to vector<2x16x16xf32>
    %413 = arith.mulf %412, %411 : vector<2x16x16xf32>
    %414 = arith.addf %410, %413 : vector<2x16x16xf32>
    %415 = vector.extract_strided_slice %378 {offsets = [0, 4, 0], sizes = [2, 16, 16], strides = [1, 1, 1]} : vector<2x22x16xf32> to vector<2x16x16xf32>
    %416 = vector.broadcast %127 : f32 to vector<2x16x16xf32>
    %417 = arith.mulf %416, %415 : vector<2x16x16xf32>
    %418 = arith.addf %414, %417 : vector<2x16x16xf32>
    %419 = vector.extract_strided_slice %377 {offsets = [0, 5, 0], sizes = [2, 16, 16], strides = [1, 1, 1]} : vector<2x22x16xf32> to vector<2x16x16xf32>
    %420 = vector.broadcast %85 : f32 to vector<2x16x16xf32>
    %421 = arith.mulf %420, %419 : vector<2x16x16xf32>
    %422 = arith.addf %418, %421 : vector<2x16x16xf32>
    %423 = vector.extract_strided_slice %378 {offsets = [0, 5, 0], sizes = [2, 16, 16], strides = [1, 1, 1]} : vector<2x22x16xf32> to vector<2x16x16xf32>
    %424 = vector.broadcast %134 : f32 to vector<2x16x16xf32>
    %425 = arith.mulf %424, %423 : vector<2x16x16xf32>
    %426 = arith.addf %422, %425 : vector<2x16x16xf32>
    %427 = vector.extract_strided_slice %377 {offsets = [0, 6, 0], sizes = [2, 16, 16], strides = [1, 1, 1]} : vector<2x22x16xf32> to vector<2x16x16xf32>
    %428 = vector.broadcast %92 : f32 to vector<2x16x16xf32>
    %429 = arith.mulf %428, %427 : vector<2x16x16xf32>
    %430 = arith.addf %426, %429 : vector<2x16x16xf32>
    %431 = vector.extract_strided_slice %378 {offsets = [0, 6, 0], sizes = [2, 16, 16], strides = [1, 1, 1]} : vector<2x22x16xf32> to vector<2x16x16xf32>
    %432 = vector.broadcast %141 : f32 to vector<2x16x16xf32>
    %433 = arith.mulf %432, %431 : vector<2x16x16xf32>
    %434 = arith.addf %430, %433 : vector<2x16x16xf32>
    %435 = vector.extract_strided_slice %43 {offsets = [0, 0, 5], sizes = [2, 22, 16], strides = [1, 1, 1]} : vector<2x22x22xf32> to vector<2x22x16xf32>
    %436 = vector.extract_strided_slice %45 {offsets = [0, 0, 5], sizes = [2, 22, 16], strides = [1, 1, 1]} : vector<2x22x22xf32> to vector<2x22x16xf32>
    %437 = vector.extract_strided_slice %435 {offsets = [0, 0, 0], sizes = [2, 16, 16], strides = [1, 1, 1]} : vector<2x22x16xf32> to vector<2x16x16xf32>
    %438 = vector.broadcast %51 : f32 to vector<2x16x16xf32>
    %439 = arith.mulf %438, %437 : vector<2x16x16xf32>
    %440 = arith.addf %434, %439 : vector<2x16x16xf32>
    %441 = vector.extract_strided_slice %436 {offsets = [0, 0, 0], sizes = [2, 16, 16], strides = [1, 1, 1]} : vector<2x22x16xf32> to vector<2x16x16xf32>
    %442 = vector.broadcast %100 : f32 to vector<2x16x16xf32>
    %443 = arith.mulf %442, %441 : vector<2x16x16xf32>
    %444 = arith.addf %440, %443 : vector<2x16x16xf32>
    %445 = vector.extract_strided_slice %435 {offsets = [0, 1, 0], sizes = [2, 16, 16], strides = [1, 1, 1]} : vector<2x22x16xf32> to vector<2x16x16xf32>
    %446 = vector.broadcast %58 : f32 to vector<2x16x16xf32>
    %447 = arith.mulf %446, %445 : vector<2x16x16xf32>
    %448 = arith.addf %444, %447 : vector<2x16x16xf32>
    %449 = vector.extract_strided_slice %436 {offsets = [0, 1, 0], sizes = [2, 16, 16], strides = [1, 1, 1]} : vector<2x22x16xf32> to vector<2x16x16xf32>
    %450 = vector.broadcast %107 : f32 to vector<2x16x16xf32>
    %451 = arith.mulf %450, %449 : vector<2x16x16xf32>
    %452 = arith.addf %448, %451 : vector<2x16x16xf32>
    %453 = vector.extract_strided_slice %435 {offsets = [0, 2, 0], sizes = [2, 16, 16], strides = [1, 1, 1]} : vector<2x22x16xf32> to vector<2x16x16xf32>
    %454 = vector.broadcast %65 : f32 to vector<2x16x16xf32>
    %455 = arith.mulf %454, %453 : vector<2x16x16xf32>
    %456 = arith.addf %452, %455 : vector<2x16x16xf32>
    %457 = vector.extract_strided_slice %436 {offsets = [0, 2, 0], sizes = [2, 16, 16], strides = [1, 1, 1]} : vector<2x22x16xf32> to vector<2x16x16xf32>
    %458 = vector.broadcast %114 : f32 to vector<2x16x16xf32>
    %459 = arith.mulf %458, %457 : vector<2x16x16xf32>
    %460 = arith.addf %456, %459 : vector<2x16x16xf32>
    %461 = vector.extract_strided_slice %435 {offsets = [0, 3, 0], sizes = [2, 16, 16], strides = [1, 1, 1]} : vector<2x22x16xf32> to vector<2x16x16xf32>
    %462 = vector.broadcast %72 : f32 to vector<2x16x16xf32>
    %463 = arith.mulf %462, %461 : vector<2x16x16xf32>
    %464 = arith.addf %460, %463 : vector<2x16x16xf32>
    %465 = vector.extract_strided_slice %436 {offsets = [0, 3, 0], sizes = [2, 16, 16], strides = [1, 1, 1]} : vector<2x22x16xf32> to vector<2x16x16xf32>
    %466 = vector.broadcast %121 : f32 to vector<2x16x16xf32>
    %467 = arith.mulf %466, %465 : vector<2x16x16xf32>
    %468 = arith.addf %464, %467 : vector<2x16x16xf32>
    %469 = vector.extract_strided_slice %435 {offsets = [0, 4, 0], sizes = [2, 16, 16], strides = [1, 1, 1]} : vector<2x22x16xf32> to vector<2x16x16xf32>
    %470 = vector.broadcast %79 : f32 to vector<2x16x16xf32>
    %471 = arith.mulf %470, %469 : vector<2x16x16xf32>
    %472 = arith.addf %468, %471 : vector<2x16x16xf32>
    %473 = vector.extract_strided_slice %436 {offsets = [0, 4, 0], sizes = [2, 16, 16], strides = [1, 1, 1]} : vector<2x22x16xf32> to vector<2x16x16xf32>
    %474 = vector.broadcast %128 : f32 to vector<2x16x16xf32>
    %475 = arith.mulf %474, %473 : vector<2x16x16xf32>
    %476 = arith.addf %472, %475 : vector<2x16x16xf32>
    %477 = vector.extract_strided_slice %435 {offsets = [0, 5, 0], sizes = [2, 16, 16], strides = [1, 1, 1]} : vector<2x22x16xf32> to vector<2x16x16xf32>
    %478 = vector.broadcast %86 : f32 to vector<2x16x16xf32>
    %479 = arith.mulf %478, %477 : vector<2x16x16xf32>
    %480 = arith.addf %476, %479 : vector<2x16x16xf32>
    %481 = vector.extract_strided_slice %436 {offsets = [0, 5, 0], sizes = [2, 16, 16], strides = [1, 1, 1]} : vector<2x22x16xf32> to vector<2x16x16xf32>
    %482 = vector.broadcast %135 : f32 to vector<2x16x16xf32>
    %483 = arith.mulf %482, %481 : vector<2x16x16xf32>
    %484 = arith.addf %480, %483 : vector<2x16x16xf32>
    %485 = vector.extract_strided_slice %435 {offsets = [0, 6, 0], sizes = [2, 16, 16], strides = [1, 1, 1]} : vector<2x22x16xf32> to vector<2x16x16xf32>
    %486 = vector.broadcast %93 : f32 to vector<2x16x16xf32>
    %487 = arith.mulf %486, %485 : vector<2x16x16xf32>
    %488 = arith.addf %484, %487 : vector<2x16x16xf32>
    %489 = vector.extract_strided_slice %436 {offsets = [0, 6, 0], sizes = [2, 16, 16], strides = [1, 1, 1]} : vector<2x22x16xf32> to vector<2x16x16xf32>
    %490 = vector.broadcast %142 : f32 to vector<2x16x16xf32>
    %491 = arith.mulf %490, %489 : vector<2x16x16xf32>
    %492 = arith.addf %488, %491 : vector<2x16x16xf32>
    %493 = vector.extract_strided_slice %43 {offsets = [0, 0, 6], sizes = [2, 22, 16], strides = [1, 1, 1]} : vector<2x22x22xf32> to vector<2x22x16xf32>
    %494 = vector.extract_strided_slice %45 {offsets = [0, 0, 6], sizes = [2, 22, 16], strides = [1, 1, 1]} : vector<2x22x22xf32> to vector<2x22x16xf32>
    %495 = vector.extract_strided_slice %493 {offsets = [0, 0, 0], sizes = [2, 16, 16], strides = [1, 1, 1]} : vector<2x22x16xf32> to vector<2x16x16xf32>
    %496 = vector.broadcast %52 : f32 to vector<2x16x16xf32>
    %497 = arith.mulf %496, %495 : vector<2x16x16xf32>
    %498 = arith.addf %492, %497 : vector<2x16x16xf32>
    %499 = vector.extract_strided_slice %494 {offsets = [0, 0, 0], sizes = [2, 16, 16], strides = [1, 1, 1]} : vector<2x22x16xf32> to vector<2x16x16xf32>
    %500 = vector.broadcast %101 : f32 to vector<2x16x16xf32>
    %501 = arith.mulf %500, %499 : vector<2x16x16xf32>
    %502 = arith.addf %498, %501 : vector<2x16x16xf32>
    %503 = vector.extract_strided_slice %493 {offsets = [0, 1, 0], sizes = [2, 16, 16], strides = [1, 1, 1]} : vector<2x22x16xf32> to vector<2x16x16xf32>
    %504 = vector.broadcast %59 : f32 to vector<2x16x16xf32>
    %505 = arith.mulf %504, %503 : vector<2x16x16xf32>
    %506 = arith.addf %502, %505 : vector<2x16x16xf32>
    %507 = vector.extract_strided_slice %494 {offsets = [0, 1, 0], sizes = [2, 16, 16], strides = [1, 1, 1]} : vector<2x22x16xf32> to vector<2x16x16xf32>
    %508 = vector.broadcast %108 : f32 to vector<2x16x16xf32>
    %509 = arith.mulf %508, %507 : vector<2x16x16xf32>
    %510 = arith.addf %506, %509 : vector<2x16x16xf32>
    %511 = vector.extract_strided_slice %493 {offsets = [0, 2, 0], sizes = [2, 16, 16], strides = [1, 1, 1]} : vector<2x22x16xf32> to vector<2x16x16xf32>
    %512 = vector.broadcast %66 : f32 to vector<2x16x16xf32>
    %513 = arith.mulf %512, %511 : vector<2x16x16xf32>
    %514 = arith.addf %510, %513 : vector<2x16x16xf32>
    %515 = vector.extract_strided_slice %494 {offsets = [0, 2, 0], sizes = [2, 16, 16], strides = [1, 1, 1]} : vector<2x22x16xf32> to vector<2x16x16xf32>
    %516 = vector.broadcast %115 : f32 to vector<2x16x16xf32>
    %517 = arith.mulf %516, %515 : vector<2x16x16xf32>
    %518 = arith.addf %514, %517 : vector<2x16x16xf32>
    %519 = vector.extract_strided_slice %493 {offsets = [0, 3, 0], sizes = [2, 16, 16], strides = [1, 1, 1]} : vector<2x22x16xf32> to vector<2x16x16xf32>
    %520 = vector.broadcast %73 : f32 to vector<2x16x16xf32>
    %521 = arith.mulf %520, %519 : vector<2x16x16xf32>
    %522 = arith.addf %518, %521 : vector<2x16x16xf32>
    %523 = vector.extract_strided_slice %494 {offsets = [0, 3, 0], sizes = [2, 16, 16], strides = [1, 1, 1]} : vector<2x22x16xf32> to vector<2x16x16xf32>
    %524 = vector.broadcast %122 : f32 to vector<2x16x16xf32>
    %525 = arith.mulf %524, %523 : vector<2x16x16xf32>
    %526 = arith.addf %522, %525 : vector<2x16x16xf32>
    %527 = vector.extract_strided_slice %493 {offsets = [0, 4, 0], sizes = [2, 16, 16], strides = [1, 1, 1]} : vector<2x22x16xf32> to vector<2x16x16xf32>
    %528 = vector.broadcast %80 : f32 to vector<2x16x16xf32>
    %529 = arith.mulf %528, %527 : vector<2x16x16xf32>
    %530 = arith.addf %526, %529 : vector<2x16x16xf32>
    %531 = vector.extract_strided_slice %494 {offsets = [0, 4, 0], sizes = [2, 16, 16], strides = [1, 1, 1]} : vector<2x22x16xf32> to vector<2x16x16xf32>
    %532 = vector.broadcast %129 : f32 to vector<2x16x16xf32>
    %533 = arith.mulf %532, %531 : vector<2x16x16xf32>
    %534 = arith.addf %530, %533 : vector<2x16x16xf32>
    %535 = vector.extract_strided_slice %493 {offsets = [0, 5, 0], sizes = [2, 16, 16], strides = [1, 1, 1]} : vector<2x22x16xf32> to vector<2x16x16xf32>
    %536 = vector.broadcast %87 : f32 to vector<2x16x16xf32>
    %537 = arith.mulf %536, %535 : vector<2x16x16xf32>
    %538 = arith.addf %534, %537 : vector<2x16x16xf32>
    %539 = vector.extract_strided_slice %494 {offsets = [0, 5, 0], sizes = [2, 16, 16], strides = [1, 1, 1]} : vector<2x22x16xf32> to vector<2x16x16xf32>
    %540 = vector.broadcast %136 : f32 to vector<2x16x16xf32>
    %541 = arith.mulf %540, %539 : vector<2x16x16xf32>
    %542 = arith.addf %538, %541 : vector<2x16x16xf32>
    %543 = vector.extract_strided_slice %493 {offsets = [0, 6, 0], sizes = [2, 16, 16], strides = [1, 1, 1]} : vector<2x22x16xf32> to vector<2x16x16xf32>
    %544 = vector.broadcast %94 : f32 to vector<2x16x16xf32>
    %545 = arith.mulf %544, %543 : vector<2x16x16xf32>
    %546 = arith.addf %542, %545 : vector<2x16x16xf32>
    %547 = vector.extract_strided_slice %494 {offsets = [0, 6, 0], sizes = [2, 16, 16], strides = [1, 1, 1]} : vector<2x22x16xf32> to vector<2x16x16xf32>
    %548 = vector.broadcast %143 : f32 to vector<2x16x16xf32>
    %549 = arith.mulf %548, %547 : vector<2x16x16xf32>
    %550 = arith.addf %546, %549 : vector<2x16x16xf32>
    %551 = arith.negf %550 : vector<2x16x16xf32>
    %552 = math.exp %551 : vector<2x16x16xf32>
    %cst_34 = arith.constant 1.000000e+00 : f32
    %553 = vector.broadcast %cst_34 : f32 to vector<2x16x16xf32>
    %554 = arith.addf %553, %552 : vector<2x16x16xf32>
    %555 = arith.divf %553, %554 : vector<2x16x16xf32>
    %556 = vector.shape_cast %555 : vector<2x16x16xf32> to vector<2x1x256xf32>
    %557 = vector.broadcast %556 : vector<2x1x256xf32> to vector<2x4x256xf32>
    %558 = arith.mulf %27, %557 : vector<2x4x256xf32>
    %c0_35 = arith.constant 0 : index
    %c0_36 = arith.constant 0 : index
    %c0_37 = arith.constant 0 : index
    %559 = vector.load %arg4[%c0_35, %c0_36, %c0_37] : memref<2x4x256xf32, #tpu.memory_space<vmem>>, vector<2x4x256xf32>
    tpu.vector_store %arg4[%c0_35, %c0_36, %c0_37], %558 {strides = array<i32>} : memref<2x4x256xf32, #tpu.memory_space<vmem>>, vector<2x4x256xf32>,
    return
  }
  func.func @transform_0(%arg0: i32) -> i32 {
    %c0_i32 = arith.constant 0 : i32
    %c0_i32_0 = arith.constant 0 : i32
    return %c0_i32 : i32
  }
  func.func @transform_1(%arg0: i32) -> i32 {
    %c0_i32 = arith.constant 0 : i32
    %c0_i32_0 = arith.constant 0 : i32
    return %c0_i32 : i32
  }
  func.func @transform_2(%arg0: i32) -> (i32, i32, i32) {
    %c0_i32 = arith.constant 0 : i32
    %c0_i32_0 = arith.constant 0 : i32
    %c0_i32_1 = arith.constant 0 : i32
    return %arg0, %c0_i32, %c0_i32_0 : i32, i32, i32
  }
  func.func @transform_3(%arg0: i32) -> (i32, i32, i32) {
    %c0_i32 = arith.constant 0 : i32
    %c0_i32_0 = arith.constant 0 : i32
    %c0_i32_1 = arith.constant 0 : i32
    return %arg0, %c0_i32, %c0_i32_0 : i32, i32, i32
  }
}

</mosaic_0001>

<llo_original>
// kernel: tpu_custom_call.1
$region0: #{tpu_custom_call.1}
  #allocation0 [shape = 'u32[]', space=smem, size = 0x4, offset = 0x4, fixed_abs, tag = 'smem constant byte address 0x4 - core index']
  #allocation1 [shape = 'u32[72,128]{1,0:T(1,128)}', space=vmem, size = 0x9000, scoped, tag = 'internal scratch']
  #allocation2 [shape = 'f32[2,2,22,22]{3,2,1,0:T(8,128)}', space=vmem, size = 0xc000, scoped, tag = 'scratch operand']
  %s0 = inlined_call_operand.hbm [shape: f32[3], index: 0, kind: input, shape index: {}]
  %s1 = inlined_call_operand.hbm [shape: f32[98], index: 1, kind: input, shape index: {}]
  %s2 = inlined_call_operand.hbm [shape: f32[2,4,256], index: 2, kind: input, shape index: {}]
  %s3 = inlined_call_operand.hbm [shape: f32[2,4,256], index: 3, kind: output, shape index: {}]
  %s4 = sld [smem:[#allocation0]]
  $region34: #{tpu_custom_call.1} parent=0
    _
  %s6 = ssub.s32 1, %s4
  %s7 = scalar_select 0, %s6, %s4
  $region1: #{tpu_custom_call.1} parent=0
    #allocation3 [shape = 'u8[512]{0}', space=smem, size = 0x200, scoped, tag = 'input window, operand 0, single buffered']
    #allocation4 [shape = 's32[1]{0}', space=sflag, size = 0x4, scoped, tag = 'scoped memory for tpu_custom_call.1']
    #allocation5 [shape = 's32[1]{0}', space=sflag, size = 0x4, scoped, tag = 'scoped memory for tpu_custom_call.1']
    #allocation6 [shape = 's32[1]{0}', space=sflag, size = 0x4, scoped, tag = 'scoped memory for tpu_custom_call.1']
    #allocation7 [shape = 'u8[512]{0}', space=smem, size = 0x200, scoped, tag = 'input window, operand 1, single buffered']
    #allocation8 [shape = 's32[1]{0}', space=sflag, size = 0x4, scoped, tag = 'scoped memory for tpu_custom_call.1']
    #allocation9 [shape = 'u8[8192]{0}', space=vmem, size = 0x2000, scoped, tag = 'input window, operand 2, single buffered']
    #allocation10 [shape = 'u8[8192]{0}', space=vmem, size = 0x2000, scoped, tag = 'output window, operand 0, single buffered']
    %8 = vsyncpa [#allocation6], 0
    %9 = vsyncpa [#allocation8], 0
    %10 = vsyncpa [#allocation4], 0
    %11 = vsyncpa [#allocation5], 0
    // Predicated region
    $region2: #{tpu_custom_call.1} parent=1 // pred_check
      _
    $region3: #{tpu_custom_call.1} parent=1 // pred_check_branch
      %13 = sbr.rel (0) target = $region5
    $region4: #{tpu_custom_call.1} parent=1 // pred_region
      %15 = vsyncadd [#allocation6], 0
      %s17 = sshll.u32 %s0, 4
      %s18 = int_to_ptr.hbm [resolvable:$true] %s17
      %20 = dma.hbm_to_smem %s18, 16, [#allocation3], [#allocation6]
    $region5: #{tpu_custom_call.1} parent=1 // pred_fallthru
      _
    // Predicated region
    $region6: #{tpu_custom_call.1} parent=1 // pred_check
      _
    $region7: #{tpu_custom_call.1} parent=1 // pred_check_branch
      %22 = sbr.rel (0) target = $region9
    $region8: #{tpu_custom_call.1} parent=1 // pred_region
      %24 = vsyncadd [#allocation8], 0
      %s26 = sshll.u32 %s1, 4
      %s27 = int_to_ptr.hbm [resolvable:$true] %s26
      %29 = dma.hbm_to_smem %s27, 16, [#allocation7], [#allocation8]
    $region9: #{tpu_custom_call.1} parent=1 // pred_fallthru
      _
    // Predicated region
    $region10: #{tpu_custom_call.1} parent=1 // pred_check
      _
    $region11: #{tpu_custom_call.1} parent=1 // pred_check_branch
      %31 = sbr.rel (0) target = $region13
    $region12: #{tpu_custom_call.1} parent=1 // pred_region
      %33 = vsyncadd [#allocation4], 0
      %s34 = sshll.u32 %s2, 4
      %s35 = int_to_ptr.hbm [resolvable:$true] %s34
      %s36 = sshll.u32 [#allocation9], 4
      %s37 = int_to_ptr.vmem [resolvable:$true] %s36
      %42 = dma.hbm_to_vmem [thread:$0]  %s35, 256, %s37, [#allocation4], 128, 128, 8
    $region13: #{tpu_custom_call.1} parent=1 // pred_fallthru
      _
    // Predicated region
    $region14: #{tpu_custom_call.1} parent=1 // pred_check
      _
    $region15: #{tpu_custom_call.1} parent=1 // pred_check_branch
      %44 = sbr.rel (0) target = $region17
    $region16: #{tpu_custom_call.1} parent=1 // pred_region
      %46 = dma.done [#allocation6], 16
    $region17: #{tpu_custom_call.1} parent=1 // pred_fallthru
      _
    // Predicated region
    $region18: #{tpu_custom_call.1} parent=1 // pred_check
      _
    $region19: #{tpu_custom_call.1} parent=1 // pred_check_branch
      %48 = sbr.rel (0) target = $region21
    $region20: #{tpu_custom_call.1} parent=1 // pred_region
      %50 = dma.done [#allocation8], 16
    $region21: #{tpu_custom_call.1} parent=1 // pred_fallthru
      _
    // Predicated region
    $region22: #{tpu_custom_call.1} parent=1 // pred_check
      _
    $region23: #{tpu_custom_call.1} parent=1 // pred_check_branch
      %52 = sbr.rel (0) target = $region25
    $region24: #{tpu_custom_call.1} parent=1 // pred_region
      %54 = dma.done [#allocation4], 256
    $region25: #{tpu_custom_call.1} parent=1 // pred_fallthru
      _
    %55 = sfence
    %v56 = vld [vmem:[#allocation9] sm:$0xff]
    %v57 = vld [vmem:[#allocation9 + $0x8] sm:$0xff]
    %60 = vst [vmem:[#allocation1] ss:$2 sm:$0xff] %v56
    %v61 = vld.sshfl [vmem:[#allocation1] sm:$0xff pattern:$0x75316420]
    %v62 = vld.sshfl [vmem:[#allocation1 + $0x8] sm:$0xff pattern:$0x75316420]
    %s63 = scalar_lea.vmem [#allocation1], 16
    %64 = vst [vmem:[%s63] ss:$2 sm:$0xff] %v57
    %v65 = vld.sshfl [vmem:[#allocation1 + $0x10] sm:$0xff pattern:$0x75316420]
    %v66 = vld.sshfl [vmem:[#allocation1 + $0x18] sm:$0xff pattern:$0x75316420]
    %vm71 = vcmask 1043456
    %v72 = vsel %vm71, %v61, 0.0
    %v73 = vsel %vm71, %v62, 0.0
    %v74 = vadd.f32 %v72, %v73
    %75 = vadd.xlane.f32.xlu0 %v74
    %v76 = vpop.xlane.xlu0 %75
    %v77 = vsel %vm71, %v65, 0.0
    %v78 = vsel %vm71, %v66, 0.0
    %v79 = vadd.f32 %v77, %v78
    %80 = vadd.xlane.f32.xlu0 %v79
    %v81 = vpop.xlane.xlu0 %80
    %v82 = vrcp.pop 256.0
    %v83 = vmul.f32 256.0, %v82
    %v84 = vsub.f32 1.0, %v83
    %v85 = vmul.f32 %v82, %v84
    %v86 = vadd.f32 %v82, %v85
    %vm87 = vweird.f32 %v82
    %v88 = vsel %vm87, %v82, %v86
    %v89 = vmul.f32 %v76, %v88
    %v90 = vmul.f32 %v81, %v88
    %v93 = vlaneseq
    %v94 = vand.u32 %v93, 127
    %v95 = vadd.s32 %v94, 4294967295
    %v96 = vperm.slane %v89, %v95
    %v97 = vperm.slane %v90, %v95
    %vm98 = vcmask 1041409
    %v99 = vsel %vm98, %v97, %v96
    %vm101 = vcmask 7168
    %v102 = vsel %vm101, 0.0, %v99
    %v103 = vadd.s32 %v94, 1
    %v104 = vperm.slane %v89, %v103
    %v105 = vperm.slane %v90, %v103
    %vm106 = vcmask 1042434
    %v107 = vsel %vm106, %v105, %v104
    %vm109 = vcmask 23552
    %v110 = vsel %vm109, %v107, 0.0
    %s111 = sld [smem:[#allocation3]]
    %v112 = vstv %s111
    %v113 = vmul.f32 %v112, %v102
    %s114 = sld [smem:[#allocation3 + $0x1]]
    %v115 = vstv %s114
    %v116 = vmul.f32 %v115, %v89
    %v117 = vmul.f32 %v115, %v90
    %v120 = vperm.slane %v116, %v94
    %v121 = vperm.slane %v117, %v94
    %v122 = vsel %vm98, %v121, %v120
    %v124 = vadd.f32 %v113, %v122
    %s125 = sld [smem:[#allocation3 + $0x2]]
    %v126 = vstv %s125
    %v127 = vmul.f32 %v126, %v110
    %v129 = vrot.slane %v127, 1
    %v131 = vadd.f32 %v124, %v129
    %v132 = vxor.u32 %v131, 2147483648
    %v133 = vmul.f32 %v132, 1.442695
    %v134 = vpow.pop %v133
    %v135 = vadd.f32 %v134, 1.0
    %v136 = vrcp.pop %v135
    %v137 = vmul.f32 %v135, %v136
    %v138 = vsub.f32 1.0, %v137
    %v139 = vmul.f32 %v136, %v138
    %v140 = vadd.f32 %v136, %v139
    %vm141 = vweird.f32 %v135
    %vm142 = vweird.f32 %v136
    %vm143 = vmor %vm141, %vm142
    %v144 = vsel %vm143, %v136, %v140
    %v145 = vand.u32 2147483647, %v135
    %vm146 = vcmp.eq.f32.partialorder %v145, 8.507059e+37
    %v147 = vand.u32 %v135, 2147483648
    %v148 = vor.u32 1.1754944e-38, %v147
    %v149 = vsel %vm146, %v148, %v144
    %v150 = vmul.f32 1.0, %v149
    %v151 = vperm.slane %v150, 0
    %v152 = vlaneseq
    %v153 = vshrl.u32 %v152, 7
    %155 = vset.pattern.permute.xlu0 %v153
    %156 = vperm.xlu0 %155, %v151
    %v157 = vpop.permute.xlu0 %156
    %v158 = vperm.slane %v150, 1
    %v159 = vlaneseq
    %v160 = vshrl.u32 %v159, 7
    %162 = vset.pattern.permute.xlu0 %v160
    %163 = vperm.xlu0 %162, %v158
    %v164 = vpop.permute.xlu0 %163
    %v168 = vunpack.c.l.s4 839922192
    %v169 = vunpack.c.0.s8 %v168
    %v170 = vperm.slane %v157, %v169
    %v172 = vunpack.c.l.s4 839922192
    %v173 = vunpack.c.0.s8 %v172
    %v174 = vperm.slane %v164, %v173
    %v177 = vmul.f32 %v56, %v170
    %v178 = vmul.f32 %v57, %v174
    %181 = vst [vmem:[#allocation1] ss:$2 sm:$0xff] %v177
    %v182 = vld.sshfl [vmem:[#allocation1] sm:$0xff pattern:$0x75316420]
    %v183 = vld.sshfl [vmem:[#allocation1 + $0x8] sm:$0xff pattern:$0x75316420]
    %s184 = scalar_lea.vmem [#allocation1], 16
    %185 = vst [vmem:[%s184] ss:$2 sm:$0xff] %v178
    %v186 = vld.sshfl [vmem:[#allocation1 + $0x10] sm:$0xff pattern:$0x75316420]
    %v187 = vld.sshfl [vmem:[#allocation1 + $0x18] sm:$0xff pattern:$0x75316420]
    %v192 = vsel %vm71, %v182, 0.0
    %v193 = vrot.slane %v192, 4
    %v194 = vadd.f32 %v192, %v193
    %v195 = vrot.slane %v194, 2
    %v196 = vadd.f32 %v194, %v195
    %v197 = vrot.slane %v196, 1
    %v198 = vadd.f32 %v196, %v197
    %v199 = vsel %vm71, %v183, 0.0
    %v200 = vrot.slane %v199, 4
    %v201 = vadd.f32 %v199, %v200
    %v202 = vrot.slane %v201, 2
    %v203 = vadd.f32 %v201, %v202
    %v204 = vrot.slane %v203, 1
    %v205 = vadd.f32 %v203, %v204
    %v206 = vsel %vm71, %v186, 0.0
    %v207 = vrot.slane %v206, 4
    %v208 = vadd.f32 %v206, %v207
    %v209 = vrot.slane %v208, 2
    %v210 = vadd.f32 %v208, %v209
    %v211 = vrot.slane %v210, 1
    %v212 = vadd.f32 %v210, %v211
    %v213 = vsel %vm71, %v187, 0.0
    %v214 = vrot.slane %v213, 4
    %v215 = vadd.f32 %v213, %v214
    %v216 = vrot.slane %v215, 2
    %v217 = vadd.f32 %v215, %v216
    %v218 = vrot.slane %v217, 1
    %v219 = vadd.f32 %v217, %v218
    %v220 = vrcp.pop 4.0
    %v221 = vmul.f32 4.0, %v220
    %v222 = vsub.f32 1.0, %v221
    %v223 = vmul.f32 %v220, %v222
    %v224 = vadd.f32 %v220, %v223
    %vm225 = vweird.f32 %v220
    %v226 = vsel %vm225, %v220, %v224
    %v227 = vmul.f32 %v198, %v226
    %v228 = vmul.f32 %v205, %v226
    %v229 = vmul.f32 %v212, %v226
    %v230 = vmul.f32 %v219, %v226
    %231 = vst [vmem:[#allocation1] ss:$2 sm:$0xff] %v177
    %v232 = vld.sshfl [vmem:[#allocation1] sm:$0xff pattern:$0x75316420]
    %v233 = vld.sshfl [vmem:[#allocation1 + $0x8] sm:$0xff pattern:$0x75316420]
    %s234 = scalar_lea.vmem [#allocation1], 16
    %235 = vst [vmem:[%s234] ss:$2 sm:$0xff] %v178
    %v236 = vld.sshfl [vmem:[#allocation1 + $0x10] sm:$0xff pattern:$0x75316420]
    %v237 = vld.sshfl [vmem:[#allocation1 + $0x18] sm:$0xff pattern:$0x75316420]
    %v242 = vsel %vm71, %v232, -inf
    %v243 = vrot.slane %v242, 4
    %v244 = vmax.f32 %v242, %v243
    %v245 = vrot.slane %v244, 2
    %v246 = vmax.f32 %v244, %v245
    %v247 = vrot.slane %v246, 1
    %v248 = vmax.f32 %v246, %v247
    %v249 = vsel %vm71, %v233, -inf
    %v250 = vrot.slane %v249, 4
    %v251 = vmax.f32 %v249, %v250
    %v252 = vrot.slane %v251, 2
    %v253 = vmax.f32 %v251, %v252
    %v254 = vrot.slane %v253, 1
    %v255 = vmax.f32 %v253, %v254
    %v256 = vsel %vm71, %v236, -inf
    %v257 = vrot.slane %v256, 4
    %v258 = vmax.f32 %v256, %v257
    %v259 = vrot.slane %v258, 2
    %v260 = vmax.f32 %v258, %v259
    %v261 = vrot.slane %v260, 1
    %v262 = vmax.f32 %v260, %v261
    %v263 = vsel %vm71, %v237, -inf
    %v264 = vrot.slane %v263, 4
    %v265 = vmax.f32 %v263, %v264
    %v266 = vrot.slane %v265, 2
    %v267 = vmax.f32 %v265, %v266
    %v268 = vrot.slane %v267, 1
    %v269 = vmax.f32 %v267, %v268
    %vm270 = vcmask 179200
    %271 = vst.msk [vmem:[#allocation2] sm:$0xff] %vm270, 0.0
    %272 = vst.msk [vmem:[#allocation2 + $0x8] sm:$0xff] %vm270, 0.0
    %vm273 = vcmask 177152
    %274 = vst.msk [vmem:[#allocation2 + $0x10] sm:$0x3f] %vm273, 0.0
    %275 = vst.msk [vmem:[#allocation2 + $0x18] sm:$0xff] %vm270, 0.0
    %276 = vst.msk [vmem:[#allocation2 + $0x20] sm:$0xff] %vm270, 0.0
    %277 = vst.msk [vmem:[#allocation2 + $0x28] sm:$0x3f] %vm273, 0.0
    %278 = vst.msk [vmem:[#allocation2 + $0x30] sm:$0xff] %vm270, 0.0
    %279 = vst.msk [vmem:[#allocation2 + $0x38] sm:$0xff] %vm270, 0.0
    %280 = vst.msk [vmem:[#allocation2 + $0x40] sm:$0x3f] %vm273, 0.0
    %281 = vst.msk [vmem:[#allocation2 + $0x48] sm:$0xff] %vm270, 0.0
    %282 = vst.msk [vmem:[#allocation2 + $0x50] sm:$0xff] %vm270, 0.0
    %283 = vst.msk [vmem:[#allocation2 + $0x58] sm:$0x3f] %vm273, 0.0
    %286 = vrot.lane.b32.xlu0 %v227, 112
    %v287 = vpop.permute.xlu0 %286
    %288 = vrot.lane.b32.xlu0 %v229, 112
    %v289 = vpop.permute.xlu0 %288
    %290 = vrot.lane.b32.xlu0 %v227, 96
    %v291 = vpop.permute.xlu0 %290
    %292 = vrot.lane.b32.xlu0 %v229, 96
    %v293 = vpop.permute.xlu0 %292
    %294 = vrot.lane.b32.xlu0 %v227, 80
    %v295 = vpop.permute.xlu0 %294
    %296 = vrot.lane.b32.xlu0 %v229, 80
    %v297 = vpop.permute.xlu0 %296
    %298 = vrot.lane.b32.xlu0 %v227, 64
    %v299 = vpop.permute.xlu0 %298
    %300 = vrot.lane.b32.xlu0 %v229, 64
    %v301 = vpop.permute.xlu0 %300
    %302 = vrot.lane.b32.xlu0 %v227, 48
    %v303 = vpop.permute.xlu0 %302
    %304 = vrot.lane.b32.xlu0 %v229, 48
    %v305 = vpop.permute.xlu0 %304
    %306 = vrot.lane.b32.xlu0 %v227, 32
    %v307 = vpop.permute.xlu0 %306
    %308 = vrot.lane.b32.xlu0 %v229, 32
    %v309 = vpop.permute.xlu0 %308
    %310 = vrot.lane.b32.xlu0 %v227, 16
    %v311 = vpop.permute.xlu0 %310
    %312 = vrot.lane.b32.xlu0 %v229, 16
    %v313 = vpop.permute.xlu0 %312
    %316 = vrot.lane.b32.xlu0 %v228, 112
    %v317 = vpop.permute.xlu0 %316
    %318 = vrot.lane.b32.xlu0 %v230, 112
    %v319 = vpop.permute.xlu0 %318
    %320 = vrot.lane.b32.xlu0 %v228, 96
    %v321 = vpop.permute.xlu0 %320
    %322 = vrot.lane.b32.xlu0 %v230, 96
    %v323 = vpop.permute.xlu0 %322
    %324 = vrot.lane.b32.xlu0 %v228, 80
    %v325 = vpop.permute.xlu0 %324
    %326 = vrot.lane.b32.xlu0 %v230, 80
    %v327 = vpop.permute.xlu0 %326
    %328 = vrot.lane.b32.xlu0 %v228, 64
    %v329 = vpop.permute.xlu0 %328
    %330 = vrot.lane.b32.xlu0 %v230, 64
    %v331 = vpop.permute.xlu0 %330
    %332 = vrot.lane.b32.xlu0 %v228, 48
    %v333 = vpop.permute.xlu0 %332
    %334 = vrot.lane.b32.xlu0 %v230, 48
    %v335 = vpop.permute.xlu0 %334
    %336 = vrot.lane.b32.xlu0 %v228, 32
    %v337 = vpop.permute.xlu0 %336
    %338 = vrot.lane.b32.xlu0 %v230, 32
    %v339 = vpop.permute.xlu0 %338
    %340 = vrot.lane.b32.xlu0 %v228, 16
    %v341 = vpop.permute.xlu0 %340
    %342 = vrot.lane.b32.xlu0 %v230, 16
    %v343 = vpop.permute.xlu0 %342
    %v344 = vrot.slane %v229, 7
    %v345 = vsel %vm98, %v344, %v227
    %v346 = vrot.slane %v289, 7
    %v347 = vsel %vm98, %v346, %v287
    %v348 = vrot.slane %v293, 7
    %v349 = vsel %vm98, %v348, %v291
    %v350 = vrot.slane %v297, 7
    %v351 = vsel %vm98, %v350, %v295
    %v352 = vrot.slane %v301, 7
    %v353 = vsel %vm98, %v352, %v299
    %v354 = vrot.slane %v305, 7
    %v355 = vsel %vm98, %v354, %v303
    %v356 = vrot.slane %v309, 7
    %v357 = vsel %vm98, %v356, %v307
    %v358 = vrot.slane %v313, 7
    %v359 = vsel %vm98, %v358, %v311
    %v360 = vrot.slane %v230, 7
    %v361 = vsel %vm98, %v360, %v228
    %v362 = vrot.slane %v319, 7
    %v363 = vsel %vm98, %v362, %v317
    %v364 = vrot.slane %v323, 7
    %v365 = vsel %vm98, %v364, %v321
    %v366 = vrot.slane %v327, 7
    %v367 = vsel %vm98, %v366, %v325
    %v368 = vrot.slane %v331, 7
    %v369 = vsel %vm98, %v368, %v329
    %v370 = vrot.slane %v335, 7
    %v371 = vsel %vm98, %v370, %v333
    %v372 = vrot.slane %v339, 7
    %v373 = vsel %vm98, %v372, %v337
    %v374 = vrot.slane %v343, 7
    %v375 = vsel %vm98, %v374, %v341
    %v392 = vrot.slane %v349, 4
    %vm393 = vcmask 1047556
    %v394 = vsel %vm393, %v392, %v345
    %v396 = vunpack.c.l.s4 1983009808
    %v397 = vunpack.c.0.s8 %v396
    %v398 = vperm.slane %v394, %v397
    %v399 = vrot.slane %v351, 4
    %v400 = vsel %vm393, %v399, %v347
    %v402 = vunpack.c.l.s4 1983009808
    %v403 = vunpack.c.0.s8 %v402
    %v404 = vperm.slane %v400, %v403
    %v405 = vrot.slane %v357, 4
    %v406 = vsel %vm393, %v405, %v353
    %v408 = vunpack.c.l.s4 1983009808
    %v409 = vunpack.c.0.s8 %v408
    %v410 = vperm.slane %v406, %v409
    %v411 = vrot.slane %v359, 4
    %v412 = vsel %vm393, %v411, %v355
    %v414 = vunpack.c.l.s4 1983009808
    %v415 = vunpack.c.0.s8 %v414
    %v416 = vperm.slane %v412, %v415
    %v417 = vrot.slane %v404, 4
    %v418 = vsel %vm393, %v417, %v398
    %v420 = vunpack.c.l.s4 1934713408
    %v421 = vunpack.c.0.s8 %v420
    %v422 = vperm.slane %v418, %v421
    %v423 = vrot.slane %v416, 4
    %v424 = vsel %vm393, %v423, %v410
    %v426 = vunpack.c.l.s4 1934713408
    %v427 = vunpack.c.0.s8 %v426
    %v428 = vperm.slane %v424, %v427
    %v429 = vrot.slane %v428, 4
    %v430 = vsel %vm393, %v429, %v422
    %v431 = vrot.slane %v422, 4
    %v432 = vsel %vm393, %v428, %v431
    %v433 = vrot.slane %v365, 4
    %v434 = vsel %vm393, %v433, %v361
    %v436 = vunpack.c.l.s4 1983009808
    %v437 = vunpack.c.0.s8 %v436
    %v438 = vperm.slane %v434, %v437
    %v439 = vrot.slane %v367, 4
    %v440 = vsel %vm393, %v439, %v363
    %v442 = vunpack.c.l.s4 1983009808
    %v443 = vunpack.c.0.s8 %v442
    %v444 = vperm.slane %v440, %v443
    %v445 = vrot.slane %v373, 4
    %v446 = vsel %vm393, %v445, %v369
    %v448 = vunpack.c.l.s4 1983009808
    %v449 = vunpack.c.0.s8 %v448
    %v450 = vperm.slane %v446, %v449
    %v451 = vrot.slane %v375, 4
    %v452 = vsel %vm393, %v451, %v371
    %v454 = vunpack.c.l.s4 1983009808
    %v455 = vunpack.c.0.s8 %v454
    %v456 = vperm.slane %v452, %v455
    %v457 = vrot.slane %v444, 4
    %v458 = vsel %vm393, %v457, %v438
    %v460 = vunpack.c.l.s4 1934713408
    %v461 = vunpack.c.0.s8 %v460
    %v462 = vperm.slane %v458, %v461
    %v463 = vrot.slane %v456, 4
    %v464 = vsel %vm393, %v463, %v450
    %v466 = vunpack.c.l.s4 1934713408
    %v467 = vunpack.c.0.s8 %v466
    %v468 = vperm.slane %v464, %v467
    %v469 = vrot.slane %v468, 4
    %v470 = vsel %vm393, %v469, %v462
    %v471 = vrot.slane %v462, 4
    %v472 = vsel %vm393, %v468, %v471
    %477 = vrot.lane.b32.xlu0 %v430, 3
    %v478 = vpop.permute.xlu0 %477
    %479 = vrot.lane.b32.xlu0 %v470, 3
    %v480 = vpop.permute.xlu0 %479
    %481 = vrot.lane.b32.xlu0 %v432, 3
    %v482 = vpop.permute.xlu0 %481
    %483 = vrot.lane.b32.xlu0 %v472, 3
    %v484 = vpop.permute.xlu0 %483
    %vm489 = vcmask 154648
    %490 = vst.msk [vmem:[#allocation2 + $0x3] sm:$0xff] %vm489, %v478
    %491 = vst.msk [vmem:[#allocation2 + $0xb] sm:$0xff] %vm489, %v480
    %492 = vst.msk [vmem:[#allocation2 + $0x1b] sm:$0xff] %vm489, %v482
    %493 = vst.msk [vmem:[#allocation2 + $0x23] sm:$0xff] %vm489, %v484
    %496 = vrot.lane.b32.xlu0 %v248, 112
    %v497 = vpop.permute.xlu0 %496
    %498 = vrot.lane.b32.xlu0 %v262, 112
    %v499 = vpop.permute.xlu0 %498
    %500 = vrot.lane.b32.xlu0 %v248, 96
    %v501 = vpop.permute.xlu0 %500
    %502 = vrot.lane.b32.xlu0 %v262, 96
    %v503 = vpop.permute.xlu0 %502
    %504 = vrot.lane.b32.xlu0 %v248, 80
    %v505 = vpop.permute.xlu0 %504
    %506 = vrot.lane.b32.xlu0 %v262, 80
    %v507 = vpop.permute.xlu0 %506
    %508 = vrot.lane.b32.xlu0 %v248, 64
    %v509 = vpop.permute.xlu0 %508
    %510 = vrot.lane.b32.xlu0 %v262, 64
    %v511 = vpop.permute.xlu0 %510
    %512 = vrot.lane.b32.xlu0 %v248, 48
    %v513 = vpop.permute.xlu0 %512
    %514 = vrot.lane.b32.xlu0 %v262, 48
    %v515 = vpop.permute.xlu0 %514
    %516 = vrot.lane.b32.xlu0 %v248, 32
    %v517 = vpop.permute.xlu0 %516
    %518 = vrot.lane.b32.xlu0 %v262, 32
    %v519 = vpop.permute.xlu0 %518
    %520 = vrot.lane.b32.xlu0 %v248, 16
    %v521 = vpop.permute.xlu0 %520
    %522 = vrot.lane.b32.xlu0 %v262, 16
    %v523 = vpop.permute.xlu0 %522
    %526 = vrot.lane.b32.xlu0 %v255, 112
    %v527 = vpop.permute.xlu0 %526
    %528 = vrot.lane.b32.xlu0 %v269, 112
    %v529 = vpop.permute.xlu0 %528
    %530 = vrot.lane.b32.xlu0 %v255, 96
    %v531 = vpop.permute.xlu0 %530
    %532 = vrot.lane.b32.xlu0 %v269, 96
    %v533 = vpop.permute.xlu0 %532
    %534 = vrot.lane.b32.xlu0 %v255, 80
    %v535 = vpop.permute.xlu0 %534
    %536 = vrot.lane.b32.xlu0 %v269, 80
    %v537 = vpop.permute.xlu0 %536
    %538 = vrot.lane.b32.xlu0 %v255, 64
    %v539 = vpop.permute.xlu0 %538
    %540 = vrot.lane.b32.xlu0 %v269, 64
    %v541 = vpop.permute.xlu0 %540
    %542 = vrot.lane.b32.xlu0 %v255, 48
    %v543 = vpop.permute.xlu0 %542
    %544 = vrot.lane.b32.xlu0 %v269, 48
    %v545 = vpop.permute.xlu0 %544
    %546 = vrot.lane.b32.xlu0 %v255, 32
    %v547 = vpop.permute.xlu0 %546
    %548 = vrot.lane.b32.xlu0 %v269, 32
    %v549 = vpop.permute.xlu0 %548
    %550 = vrot.lane.b32.xlu0 %v255, 16
    %v551 = vpop.permute.xlu0 %550
    %552 = vrot.lane.b32.xlu0 %v269, 16
    %v553 = vpop.permute.xlu0 %552
    %v554 = vrot.slane %v262, 7
    %v555 = vsel %vm98, %v554, %v248
    %v556 = vrot.slane %v499, 7
    %v557 = vsel %vm98, %v556, %v497
    %v558 = vrot.slane %v503, 7
    %v559 = vsel %vm98, %v558, %v501
    %v560 = vrot.slane %v507, 7
    %v561 = vsel %vm98, %v560, %v505
    %v562 = vrot.slane %v511, 7
    %v563 = vsel %vm98, %v562, %v509
    %v564 = vrot.slane %v515, 7
    %v565 = vsel %vm98, %v564, %v513
    %v566 = vrot.slane %v519, 7
    %v567 = vsel %vm98, %v566, %v517
    %v568 = vrot.slane %v523, 7
    %v569 = vsel %vm98, %v568, %v521
    %v570 = vrot.slane %v269, 7
    %v571 = vsel %vm98, %v570, %v255
    %v572 = vrot.slane %v529, 7
    %v573 = vsel %vm98, %v572, %v527
    %v574 = vrot.slane %v533, 7
    %v575 = vsel %vm98, %v574, %v531
    %v576 = vrot.slane %v537, 7
    %v577 = vsel %vm98, %v576, %v535
    %v578 = vrot.slane %v541, 7
    %v579 = vsel %vm98, %v578, %v539
    %v580 = vrot.slane %v545, 7
    %v581 = vsel %vm98, %v580, %v543
    %v582 = vrot.slane %v549, 7
    %v583 = vsel %vm98, %v582, %v547
    %v584 = vrot.slane %v553, 7
    %v585 = vsel %vm98, %v584, %v551
    %v602 = vrot.slane %v559, 4
    %v603 = vsel %vm393, %v602, %v555
    %v605 = vunpack.c.l.s4 1983009808
    %v606 = vunpack.c.0.s8 %v605
    %v607 = vperm.slane %v603, %v606
    %v608 = vrot.slane %v561, 4
    %v609 = vsel %vm393, %v608, %v557
    %v611 = vunpack.c.l.s4 1983009808
    %v612 = vunpack.c.0.s8 %v611
    %v613 = vperm.slane %v609, %v612
    %v614 = vrot.slane %v567, 4
    %v615 = vsel %vm393, %v614, %v563
    %v617 = vunpack.c.l.s4 1983009808
    %v618 = vunpack.c.0.s8 %v617
    %v619 = vperm.slane %v615, %v618
    %v620 = vrot.slane %v569, 4
    %v621 = vsel %vm393, %v620, %v565
    %v623 = vunpack.c.l.s4 1983009808
    %v624 = vunpack.c.0.s8 %v623
    %v625 = vperm.slane %v621, %v624
    %v626 = vrot.slane %v613, 4
    %v627 = vsel %vm393, %v626, %v607
    %v629 = vunpack.c.l.s4 1934713408
    %v630 = vunpack.c.0.s8 %v629
    %v631 = vperm.slane %v627, %v630
    %v632 = vrot.slane %v625, 4
    %v633 = vsel %vm393, %v632, %v619
    %v635 = vunpack.c.l.s4 1934713408
    %v636 = vunpack.c.0.s8 %v635
    %v637 = vperm.slane %v633, %v636
    %v638 = vrot.slane %v637, 4
    %v639 = vsel %vm393, %v638, %v631
    %v640 = vrot.slane %v631, 4
    %v641 = vsel %vm393, %v637, %v640
    %v642 = vrot.slane %v575, 4
    %v643 = vsel %vm393, %v642, %v571
    %v645 = vunpack.c.l.s4 1983009808
    %v646 = vunpack.c.0.s8 %v645
    %v647 = vperm.slane %v643, %v646
    %v648 = vrot.slane %v577, 4
    %v649 = vsel %vm393, %v648, %v573
    %v651 = vunpack.c.l.s4 1983009808
    %v652 = vunpack.c.0.s8 %v651
    %v653 = vperm.slane %v649, %v652
    %v654 = vrot.slane %v583, 4
    %v655 = vsel %vm393, %v654, %v579
    %v657 = vunpack.c.l.s4 1983009808
    %v658 = vunpack.c.0.s8 %v657
    %v659 = vperm.slane %v655, %v658
    %v660 = vrot.slane %v585, 4
    %v661 = vsel %vm393, %v660, %v581
    %v663 = vunpack.c.l.s4 1983009808
    %v664 = vunpack.c.0.s8 %v663
    %v665 = vperm.slane %v661, %v664
    %v666 = vrot.slane %v653, 4
    %v667 = vsel %vm393, %v666, %v647
    %v669 = vunpack.c.l.s4 1934713408
    %v670 = vunpack.c.0.s8 %v669
    %v671 = vperm.slane %v667, %v670
    %v672 = vrot.slane %v665, 4
    %v673 = vsel %vm393, %v672, %v659
    %v675 = vunpack.c.l.s4 1934713408
    %v676 = vunpack.c.0.s8 %v675
    %v677 = vperm.slane %v673, %v676
    %v678 = vrot.slane %v677, 4
    %v679 = vsel %vm393, %v678, %v671
    %v680 = vrot.slane %v671, 4
    %v681 = vsel %vm393, %v677, %v680
    %686 = vrot.lane.b32.xlu0 %v639, 3
    %v687 = vpop.permute.xlu0 %686
    %688 = vrot.lane.b32.xlu0 %v679, 3
    %v689 = vpop.permute.xlu0 %688
    %690 = vrot.lane.b32.xlu0 %v641, 3
    %v691 = vpop.permute.xlu0 %690
    %692 = vrot.lane.b32.xlu0 %v681, 3
    %v693 = vpop.permute.xlu0 %692
    %s698 = scalar_lea.vmem [#allocation2], 48
    %699 = vst.msk [vmem:[%s698 + $0x3] sm:$0xff] %vm489, %v687
    %700 = vst.msk [vmem:[%s698 + $0xb] sm:$0xff] %vm489, %v689
    %701 = vst.msk [vmem:[%s698 + $0x1b] sm:$0xff] %vm489, %v691
    %702 = vst.msk [vmem:[%s698 + $0x23] sm:$0xff] %vm489, %v693
    %v703 = vld [vmem:[#allocation2] sm:$0xff]
    %v704 = vld [vmem:[#allocation2 + $0x8] sm:$0xff]
    %v705 = vld [vmem:[#allocation2 + $0x10] sm:$0x3f]
    %v706 = vld [vmem:[#allocation2 + $0x18] sm:$0xff]
    %v707 = vld [vmem:[#allocation2 + $0x20] sm:$0xff]
    %v708 = vld [vmem:[#allocation2 + $0x28] sm:$0x3f]
    %v709 = vld [vmem:[%s698] sm:$0xff]
    %v710 = vld [vmem:[%s698 + $0x8] sm:$0xff]
    %v711 = vld [vmem:[%s698 + $0x10] sm:$0x3f]
    %v712 = vld [vmem:[%s698 + $0x18] sm:$0xff]
    %v713 = vld [vmem:[%s698 + $0x20] sm:$0xff]
    %v714 = vld [vmem:[%s698 + $0x28] sm:$0x3f]
    %s715 = sld [smem:[#allocation7]]
    %s716 = sld [smem:[#allocation7 + $0x1]]
    %s717 = sld [smem:[#allocation7 + $0x2]]
    %s718 = sld [smem:[#allocation7 + $0x3]]
    %s719 = sld [smem:[#allocation7 + $0x4]]
    %s720 = sld [smem:[#allocation7 + $0x5]]
    %s721 = sld [smem:[#allocation7 + $0x6]]
    %s722 = sld [smem:[#allocation7 + $0x7]]
    %s723 = sld [smem:[#allocation7 + $0x8]]
    %s724 = sld [smem:[#allocation7 + $0x9]]
    %s725 = sld [smem:[#allocation7 + $0xa]]
    %s726 = sld [smem:[#allocation7 + $0xb]]
    %s727 = sld [smem:[#allocation7 + $0xc]]
    %s728 = sld [smem:[#allocation7 + $0xd]]
    %s729 = sld [smem:[#allocation7 + $0xe]]
    %s730 = sld [smem:[#allocation7 + $0xf]]
    %s731 = sld [smem:[#allocation7 + $0x10]]
    %s732 = sld [smem:[#allocation7 + $0x11]]
    %s733 = sld [smem:[#allocation7 + $0x12]]
    %s734 = sld [smem:[#allocation7 + $0x13]]
    %s735 = sld [smem:[#allocation7 + $0x14]]
    %s736 = sld [smem:[#allocation7 + $0x15]]
    %s737 = sld [smem:[#allocation7 + $0x16]]
    %s738 = sld [smem:[#allocation7 + $0x17]]
    %s739 = sld [smem:[#allocation7 + $0x18]]
    %s740 = sld [smem:[#allocation7 + $0x19]]
    %s741 = sld [smem:[#allocation7 + $0x1a]]
    %s742 = sld [smem:[#allocation7 + $0x1b]]
    %s743 = sld [smem:[#allocation7 + $0x1c]]
    %s744 = sld [smem:[#allocation7 + $0x1d]]
    %s745 = sld [smem:[#allocation7 + $0x1e]]
    %s746 = sld [smem:[#allocation7 + $0x1f]]
    %s747 = sld [smem:[#allocation7 + $0x20]]
    %s748 = sld [smem:[#allocation7 + $0x21]]
    %s749 = sld [smem:[#allocation7 + $0x22]]
    %s750 = sld [smem:[#allocation7 + $0x23]]
    %s751 = sld [smem:[#allocation7 + $0x24]]
    %s752 = sld [smem:[#allocation7 + $0x25]]
    %s753 = sld [smem:[#allocation7 + $0x26]]
    %s754 = sld [smem:[#allocation7 + $0x27]]
    %s755 = sld [smem:[#allocation7 + $0x28]]
    %s756 = sld [smem:[#allocation7 + $0x29]]
    %s757 = sld [smem:[#allocation7 + $0x2a]]
    %s758 = sld [smem:[#allocation7 + $0x2b]]
    %s759 = sld [smem:[#allocation7 + $0x2c]]
    %s760 = sld [smem:[#allocation7 + $0x2d]]
    %s761 = sld [smem:[#allocation7 + $0x2e]]
    %s762 = sld [smem:[#allocation7 + $0x2f]]
    %s763 = sld [smem:[#allocation7 + $0x30]]
    %s764 = sld [smem:[#allocation7 + $0x31]]
    %s765 = sld [smem:[#allocation7 + $0x32]]
    %s766 = sld [smem:[#allocation7 + $0x33]]
    %s767 = sld [smem:[#allocation7 + $0x34]]
    %s768 = sld [smem:[#allocation7 + $0x35]]
    %s769 = sld [smem:[#allocation7 + $0x36]]
    %s770 = sld [smem:[#allocation7 + $0x37]]
    %s771 = sld [smem:[#allocation7 + $0x38]]
    %s772 = sld [smem:[#allocation7 + $0x39]]
    %s773 = sld [smem:[#allocation7 + $0x3a]]
    %s774 = sld [smem:[#allocation7 + $0x3b]]
    %s775 = sld [smem:[#allocation7 + $0x3c]]
    %s776 = sld [smem:[#allocation7 + $0x3d]]
    %s777 = sld [smem:[#allocation7 + $0x3e]]
    %s778 = sld [smem:[#allocation7 + $0x3f]]
    %s779 = sld [smem:[#allocation7 + $0x40]]
    %s780 = sld [smem:[#allocation7 + $0x41]]
    %s781 = sld [smem:[#allocation7 + $0x42]]
    %s782 = sld [smem:[#allocation7 + $0x43]]
    %s783 = sld [smem:[#allocation7 + $0x44]]
    %s784 = sld [smem:[#allocation7 + $0x45]]
    %s785 = sld [smem:[#allocation7 + $0x46]]
    %s786 = sld [smem:[#allocation7 + $0x47]]
    %s787 = sld [smem:[#allocation7 + $0x48]]
    %s788 = sld [smem:[#allocation7 + $0x49]]
    %s789 = sld [smem:[#allocation7 + $0x4a]]
    %s790 = sld [smem:[#allocation7 + $0x4b]]
    %s791 = sld [smem:[#allocation7 + $0x4c]]
    %s792 = sld [smem:[#allocation7 + $0x4d]]
    %s793 = sld [smem:[#allocation7 + $0x4e]]
    %s794 = sld [smem:[#allocation7 + $0x4f]]
    %s795 = sld [smem:[#allocation7 + $0x50]]
    %s796 = sld [smem:[#allocation7 + $0x51]]
    %s797 = sld [smem:[#allocation7 + $0x52]]
    %s798 = sld [smem:[#allocation7 + $0x53]]
    %s799 = sld [smem:[#allocation7 + $0x54]]
    %s800 = sld [smem:[#allocation7 + $0x55]]
    %s801 = sld [smem:[#allocation7 + $0x56]]
    %s802 = sld [smem:[#allocation7 + $0x57]]
    %s803 = sld [smem:[#allocation7 + $0x58]]
    %s804 = sld [smem:[#allocation7 + $0x59]]
    %s805 = sld [smem:[#allocation7 + $0x5a]]
    %s806 = sld [smem:[#allocation7 + $0x5b]]
    %s807 = sld [smem:[#allocation7 + $0x5c]]
    %s808 = sld [smem:[#allocation7 + $0x5d]]
    %s809 = sld [smem:[#allocation7 + $0x5e]]
    %s810 = sld [smem:[#allocation7 + $0x5f]]
    %s811 = sld [smem:[#allocation7 + $0x60]]
    %s812 = sld [smem:[#allocation7 + $0x61]]
    %v813 = vstv %s715
    %v814 = vmul.f32 %v813, %v703
    %v815 = vmul.f32 %v813, %v704
    %v816 = vmul.f32 %v813, %v706
    %v817 = vmul.f32 %v813, %v707
    %v818 = vadd.f32 %v814, 0.0
    %v819 = vadd.f32 %v815, 0.0
    %v820 = vadd.f32 %v816, 0.0
    %v821 = vadd.f32 %v817, 0.0
    %v822 = vstv %s764
    %v823 = vmul.f32 %v822, %v709
    %v824 = vmul.f32 %v822, %v710
    %v825 = vmul.f32 %v822, %v712
    %v826 = vmul.f32 %v822, %v713
    %v827 = vadd.f32 %v818, %v823
    %v828 = vadd.f32 %v819, %v824
    %v829 = vadd.f32 %v820, %v825
    %v830 = vadd.f32 %v821, %v826
    %v831 = vstv %s722
    %v832 = vmul.f32 %v831, %v703
    %v833 = vmul.f32 %v831, %v704
    %v834 = vmul.f32 %v831, %v705
    %v835 = vmul.f32 %v831, %v706
    %v836 = vmul.f32 %v831, %v707
    %v837 = vmul.f32 %v831, %v708
    %vm844 = vcmask 1046528
    %v845 = vrot.slane %v832, 1
    %v846 = vrot.slane %v833, 1
    %v847 = vsel %vm844, %v845, %v846
    %v848 = vrot.slane %v834, 1
    %v849 = vsel %vm844, %v846, %v848
    %v850 = vrot.slane %v835, 1
    %v851 = vrot.slane %v836, 1
    %v852 = vsel %vm844, %v850, %v851
    %v853 = vrot.slane %v837, 1
    %v854 = vsel %vm844, %v851, %v853
    %v859 = vadd.f32 %v827, %v847
    %v860 = vadd.f32 %v828, %v849
    %v861 = vadd.f32 %v829, %v852
    %v862 = vadd.f32 %v830, %v854
    %v863 = vstv %s771
    %v864 = vmul.f32 %v863, %v709
    %v865 = vmul.f32 %v863, %v710
    %v866 = vmul.f32 %v863, %v711
    %v867 = vmul.f32 %v863, %v712
    %v868 = vmul.f32 %v863, %v713
    %v869 = vmul.f32 %v863, %v714
    %v876 = vrot.slane %v864, 1
    %v877 = vrot.slane %v865, 1
    %v878 = vsel %vm844, %v876, %v877
    %v879 = vrot.slane %v866, 1
    %v880 = vsel %vm844, %v877, %v879
    %v881 = vrot.slane %v867, 1
    %v882 = vrot.slane %v868, 1
    %v883 = vsel %vm844, %v881, %v882
    %v884 = vrot.slane %v869, 1
    %v885 = vsel %vm844, %v882, %v884
    %v890 = vadd.f32 %v859, %v878
    %v891 = vadd.f32 %v860, %v880
    %v892 = vadd.f32 %v861, %v883
    %v893 = vadd.f32 %v862, %v885
    %v894 = vstv %s729
    %v895 = vmul.f32 %v894, %v703
    %v896 = vmul.f32 %v894, %v704
    %v897 = vmul.f32 %v894, %v705
    %v898 = vmul.f32 %v894, %v706
    %v899 = vmul.f32 %v894, %v707
    %v900 = vmul.f32 %v894, %v708
    %vm907 = vcmask 1045504
    %v908 = vrot.slane %v895, 2
    %v909 = vrot.slane %v896, 2
    %v910 = vsel %vm907, %v908, %v909
    %v911 = vrot.slane %v897, 2
    %v912 = vsel %vm907, %v909, %v911
    %v913 = vrot.slane %v898, 2
    %v914 = vrot.slane %v899, 2
    %v915 = vsel %vm907, %v913, %v914
    %v916 = vrot.slane %v900, 2
    %v917 = vsel %vm907, %v914, %v916
    %v922 = vadd.f32 %v890, %v910
    %v923 = vadd.f32 %v891, %v912
    %v924 = vadd.f32 %v892, %v915
    %v925 = vadd.f32 %v893, %v917
    %v926 = vstv %s778
    %v927 = vmul.f32 %v926, %v709
    %v928 = vmul.f32 %v926, %v710
    %v929 = vmul.f32 %v926, %v711
    %v930 = vmul.f32 %v926, %v712
    %v931 = vmul.f32 %v926, %v713
    %v932 = vmul.f32 %v926, %v714
    %v939 = vrot.slane %v927, 2
    %v940 = vrot.slane %v928, 2
    %v941 = vsel %vm907, %v939, %v940
    %v942 = vrot.slane %v929, 2
    %v943 = vsel %vm907, %v940, %v942
    %v944 = vrot.slane %v930, 2
    %v945 = vrot.slane %v931, 2
    %v946 = vsel %vm907, %v944, %v945
    %v947 = vrot.slane %v932, 2
    %v948 = vsel %vm907, %v945, %v947
    %v953 = vadd.f32 %v922, %v941
    %v954 = vadd.f32 %v923, %v943
    %v955 = vadd.f32 %v924, %v946
    %v956 = vadd.f32 %v925, %v948
    %v957 = vstv %s736
    %v958 = vmul.f32 %v957, %v703
    %v959 = vmul.f32 %v957, %v704
    %v960 = vmul.f32 %v957, %v705
    %v961 = vmul.f32 %v957, %v706
    %v962 = vmul.f32 %v957, %v707
    %v963 = vmul.f32 %v957, %v708
    %vm970 = vcmask 1044480
    %v971 = vrot.slane %v958, 3
    %v972 = vrot.slane %v959, 3
    %v973 = vsel %vm970, %v971, %v972
    %v974 = vrot.slane %v960, 3
    %v975 = vsel %vm970, %v972, %v974
    %v976 = vrot.slane %v961, 3
    %v977 = vrot.slane %v962, 3
    %v978 = vsel %vm970, %v976, %v977
    %v979 = vrot.slane %v963, 3
    %v980 = vsel %vm970, %v977, %v979
    %v985 = vadd.f32 %v953, %v973
    %v986 = vadd.f32 %v954, %v975
    %v987 = vadd.f32 %v955, %v978
    %v988 = vadd.f32 %v956, %v980
    %v989 = vstv %s785
    %v990 = vmul.f32 %v989, %v709
    %v991 = vmul.f32 %v989, %v710
    %v992 = vmul.f32 %v989, %v711
    %v993 = vmul.f32 %v989, %v712
    %v994 = vmul.f32 %v989, %v713
    %v995 = vmul.f32 %v989, %v714
    %v1002 = vrot.slane %v990, 3
    %v1003 = vrot.slane %v991, 3
    %v1004 = vsel %vm970, %v1002, %v1003
    %v1005 = vrot.slane %v992, 3
    %v1006 = vsel %vm970, %v1003, %v1005
    %v1007 = vrot.slane %v993, 3
    %v1008 = vrot.slane %v994, 3
    %v1009 = vsel %vm970, %v1007, %v1008
    %v1010 = vrot.slane %v995, 3
    %v1011 = vsel %vm970, %v1008, %v1010
    %v1016 = vadd.f32 %v985, %v1004
    %v1017 = vadd.f32 %v986, %v1006
    %v1018 = vadd.f32 %v987, %v1009
    %v1019 = vadd.f32 %v988, %v1011
    %v1020 = vstv %s743
    %v1021 = vmul.f32 %v1020, %v703
    %v1022 = vmul.f32 %v1020, %v704
    %v1023 = vmul.f32 %v1020, %v705
    %v1024 = vmul.f32 %v1020, %v706
    %v1025 = vmul.f32 %v1020, %v707
    %v1026 = vmul.f32 %v1020, %v708
    %v1033 = vrot.slane %v1021, 4
    %v1034 = vrot.slane %v1022, 4
    %v1035 = vsel %vm71, %v1033, %v1034
    %v1036 = vrot.slane %v1023, 4
    %v1037 = vsel %vm71, %v1034, %v1036
    %v1038 = vrot.slane %v1024, 4
    %v1039 = vrot.slane %v1025, 4
    %v1040 = vsel %vm71, %v1038, %v1039
    %v1041 = vrot.slane %v1026, 4
    %v1042 = vsel %vm71, %v1039, %v1041
    %v1047 = vadd.f32 %v1016, %v1035
    %v1048 = vadd.f32 %v1017, %v1037
    %v1049 = vadd.f32 %v1018, %v1040
    %v1050 = vadd.f32 %v1019, %v1042
    %v1051 = vstv %s792
    %v1052 = vmul.f32 %v1051, %v709
    %v1053 = vmul.f32 %v1051, %v710
    %v1054 = vmul.f32 %v1051, %v711
    %v1055 = vmul.f32 %v1051, %v712
    %v1056 = vmul.f32 %v1051, %v713
    %v1057 = vmul.f32 %v1051, %v714
    %v1064 = vrot.slane %v1052, 4
    %v1065 = vrot.slane %v1053, 4
    %v1066 = vsel %vm71, %v1064, %v1065
    %v1067 = vrot.slane %v1054, 4
    %v1068 = vsel %vm71, %v1065, %v1067
    %v1069 = vrot.slane %v1055, 4
    %v1070 = vrot.slane %v1056, 4
    %v1071 = vsel %vm71, %v1069, %v1070
    %v1072 = vrot.slane %v1057, 4
    %v1073 = vsel %vm71, %v1070, %v1072
    %v1078 = vadd.f32 %v1047, %v1066
    %v1079 = vadd.f32 %v1048, %v1068
    %v1080 = vadd.f32 %v1049, %v1071
    %v1081 = vadd.f32 %v1050, %v1073
    %v1082 = vstv %s750
    %v1083 = vmul.f32 %v1082, %v703
    %v1084 = vmul.f32 %v1082, %v704
    %v1085 = vmul.f32 %v1082, %v705
    %v1086 = vmul.f32 %v1082, %v706
    %v1087 = vmul.f32 %v1082, %v707
    %v1088 = vmul.f32 %v1082, %v708
    %vm1095 = vcmask 1042432
    %v1096 = vrot.slane %v1083, 5
    %v1097 = vrot.slane %v1084, 5
    %v1098 = vsel %vm1095, %v1096, %v1097
    %v1099 = vrot.slane %v1085, 5
    %v1100 = vsel %vm1095, %v1097, %v1099
    %v1101 = vrot.slane %v1086, 5
    %v1102 = vrot.slane %v1087, 5
    %v1103 = vsel %vm1095, %v1101, %v1102
    %v1104 = vrot.slane %v1088, 5
    %v1105 = vsel %vm1095, %v1102, %v1104
    %v1110 = vadd.f32 %v1078, %v1098
    %v1111 = vadd.f32 %v1079, %v1100
    %v1112 = vadd.f32 %v1080, %v1103
    %v1113 = vadd.f32 %v1081, %v1105
    %v1114 = vstv %s799
    %v1115 = vmul.f32 %v1114, %v709
    %v1116 = vmul.f32 %v1114, %v710
    %v1117 = vmul.f32 %v1114, %v711
    %v1118 = vmul.f32 %v1114, %v712
    %v1119 = vmul.f32 %v1114, %v713
    %v1120 = vmul.f32 %v1114, %v714
    %v1127 = vrot.slane %v1115, 5
    %v1128 = vrot.slane %v1116, 5
    %v1129 = vsel %vm1095, %v1127, %v1128
    %v1130 = vrot.slane %v1117, 5
    %v1131 = vsel %vm1095, %v1128, %v1130
    %v1132 = vrot.slane %v1118, 5
    %v1133 = vrot.slane %v1119, 5
    %v1134 = vsel %vm1095, %v1132, %v1133
    %v1135 = vrot.slane %v1120, 5
    %v1136 = vsel %vm1095, %v1133, %v1135
    %v1141 = vadd.f32 %v1110, %v1129
    %v1142 = vadd.f32 %v1111, %v1131
    %v1143 = vadd.f32 %v1112, %v1134
    %v1144 = vadd.f32 %v1113, %v1136
    %v1145 = vstv %s757
    %v1146 = vmul.f32 %v1145, %v703
    %v1147 = vmul.f32 %v1145, %v704
    %v1148 = vmul.f32 %v1145, %v705
    %v1149 = vmul.f32 %v1145, %v706
    %v1150 = vmul.f32 %v1145, %v707
    %v1151 = vmul.f32 %v1145, %v708
    %vm1158 = vcmask 1041408
    %v1159 = vrot.slane %v1146, 6
    %v1160 = vrot.slane %v1147, 6
    %v1161 = vsel %vm1158, %v1159, %v1160
    %v1162 = vrot.slane %v1148, 6
    %v1163 = vsel %vm1158, %v1160, %v1162
    %v1164 = vrot.slane %v1149, 6
    %v1165 = vrot.slane %v1150, 6
    %v1166 = vsel %vm1158, %v1164, %v1165
    %v1167 = vrot.slane %v1151, 6
    %v1168 = vsel %vm1158, %v1165, %v1167
    %v1173 = vadd.f32 %v1141, %v1161
    %v1174 = vadd.f32 %v1142, %v1163
    %v1175 = vadd.f32 %v1143, %v1166
    %v1176 = vadd.f32 %v1144, %v1168
    %v1177 = vstv %s806
    %v1178 = vmul.f32 %v1177, %v709
    %v1179 = vmul.f32 %v1177, %v710
    %v1180 = vmul.f32 %v1177, %v711
    %v1181 = vmul.f32 %v1177, %v712
    %v1182 = vmul.f32 %v1177, %v713
    %v1183 = vmul.f32 %v1177, %v714
    %v1190 = vrot.slane %v1178, 6
    %v1191 = vrot.slane %v1179, 6
    %v1192 = vsel %vm1158, %v1190, %v1191
    %v1193 = vrot.slane %v1180, 6
    %v1194 = vsel %vm1158, %v1191, %v1193
    %v1195 = vrot.slane %v1181, 6
    %v1196 = vrot.slane %v1182, 6
    %v1197 = vsel %vm1158, %v1195, %v1196
    %v1198 = vrot.slane %v1183, 6
    %v1199 = vsel %vm1158, %v1196, %v1198
    %v1204 = vadd.f32 %v1173, %v1192
    %v1205 = vadd.f32 %v1174, %v1194
    %v1206 = vadd.f32 %v1175, %v1197
    %v1207 = vadd.f32 %v1176, %v1199
    %v1208 = vstv %s716
    %v1209 = vmul.f32 %v1208, %v703
    %v1210 = vmul.f32 %v1208, %v704
    %v1211 = vmul.f32 %v1208, %v706
    %v1212 = vmul.f32 %v1208, %v707
    %1217 = vrot.lane.b32.xlu0 %v1209, 127
    %v1218 = vpop.permute.xlu0 %1217
    %1219 = vrot.lane.b32.xlu0 %v1210, 127
    %v1220 = vpop.permute.xlu0 %1219
    %1221 = vrot.lane.b32.xlu0 %v1211, 127
    %v1222 = vpop.permute.xlu0 %1221
    %1223 = vrot.lane.b32.xlu0 %v1212, 127
    %v1224 = vpop.permute.xlu0 %1223
    %v1229 = vadd.f32 %v1204, %v1218
    %v1230 = vadd.f32 %v1205, %v1220
    %v1231 = vadd.f32 %v1206, %v1222
    %v1232 = vadd.f32 %v1207, %v1224
    %v1233 = vstv %s765
    %v1234 = vmul.f32 %v1233, %v709
    %v1235 = vmul.f32 %v1233, %v710
    %v1236 = vmul.f32 %v1233, %v712
    %v1237 = vmul.f32 %v1233, %v713
    %1242 = vrot.lane.b32.xlu0 %v1234, 127
    %v1243 = vpop.permute.xlu0 %1242
    %1244 = vrot.lane.b32.xlu0 %v1235, 127
    %v1245 = vpop.permute.xlu0 %1244
    %1246 = vrot.lane.b32.xlu0 %v1236, 127
    %v1247 = vpop.permute.xlu0 %1246
    %1248 = vrot.lane.b32.xlu0 %v1237, 127
    %v1249 = vpop.permute.xlu0 %1248
    %v1254 = vadd.f32 %v1229, %v1243
    %v1255 = vadd.f32 %v1230, %v1245
    %v1256 = vadd.f32 %v1231, %v1247
    %v1257 = vadd.f32 %v1232, %v1249
    %v1258 = vstv %s723
    %v1259 = vmul.f32 %v1258, %v703
    %v1260 = vmul.f32 %v1258, %v704
    %v1261 = vmul.f32 %v1258, %v705
    %v1262 = vmul.f32 %v1258, %v706
    %v1263 = vmul.f32 %v1258, %v707
    %v1264 = vmul.f32 %v1258, %v708
    %v1271 = vrot.slane %v1259, 1
    %v1272 = vrot.slane %v1260, 1
    %v1273 = vsel %vm844, %v1271, %v1272
    %v1274 = vrot.slane %v1261, 1
    %v1275 = vsel %vm844, %v1272, %v1274
    %v1276 = vrot.slane %v1262, 1
    %v1277 = vrot.slane %v1263, 1
    %v1278 = vsel %vm844, %v1276, %v1277
    %v1279 = vrot.slane %v1264, 1
    %v1280 = vsel %vm844, %v1277, %v1279
    %1281 = vrot.lane.b32.xlu0 %v1273, 127
    %v1282 = vpop.permute.xlu0 %1281
    %1283 = vrot.lane.b32.xlu0 %v1275, 127
    %v1284 = vpop.permute.xlu0 %1283
    %1285 = vrot.lane.b32.xlu0 %v1278, 127
    %v1286 = vpop.permute.xlu0 %1285
    %1287 = vrot.lane.b32.xlu0 %v1280, 127
    %v1288 = vpop.permute.xlu0 %1287
    %v1293 = vadd.f32 %v1254, %v1282
    %v1294 = vadd.f32 %v1255, %v1284
    %v1295 = vadd.f32 %v1256, %v1286
    %v1296 = vadd.f32 %v1257, %v1288
    %v1297 = vstv %s772
    %v1298 = vmul.f32 %v1297, %v709
    %v1299 = vmul.f32 %v1297, %v710
    %v1300 = vmul.f32 %v1297, %v711
    %v1301 = vmul.f32 %v1297, %v712
    %v1302 = vmul.f32 %v1297, %v713
    %v1303 = vmul.f32 %v1297, %v714
    %v1310 = vrot.slane %v1298, 1
    %v1311 = vrot.slane %v1299, 1
    %v1312 = vsel %vm844, %v1310, %v1311
    %v1313 = vrot.slane %v1300, 1
    %v1314 = vsel %vm844, %v1311, %v1313
    %v1315 = vrot.slane %v1301, 1
    %v1316 = vrot.slane %v1302, 1
    %v1317 = vsel %vm844, %v1315, %v1316
    %v1318 = vrot.slane %v1303, 1
    %v1319 = vsel %vm844, %v1316, %v1318
    %1320 = vrot.lane.b32.xlu0 %v1312, 127
    %v1321 = vpop.permute.xlu0 %1320
    %1322 = vrot.lane.b32.xlu0 %v1314, 127
    %v1323 = vpop.permute.xlu0 %1322
    %1324 = vrot.lane.b32.xlu0 %v1317, 127
    %v1325 = vpop.permute.xlu0 %1324
    %1326 = vrot.lane.b32.xlu0 %v1319, 127
    %v1327 = vpop.permute.xlu0 %1326
    %v1332 = vadd.f32 %v1293, %v1321
    %v1333 = vadd.f32 %v1294, %v1323
    %v1334 = vadd.f32 %v1295, %v1325
    %v1335 = vadd.f32 %v1296, %v1327
    %v1336 = vstv %s730
    %v1337 = vmul.f32 %v1336, %v703
    %v1338 = vmul.f32 %v1336, %v704
    %v1339 = vmul.f32 %v1336, %v705
    %v1340 = vmul.f32 %v1336, %v706
    %v1341 = vmul.f32 %v1336, %v707
    %v1342 = vmul.f32 %v1336, %v708
    %v1349 = vrot.slane %v1337, 2
    %v1350 = vrot.slane %v1338, 2
    %v1351 = vsel %vm907, %v1349, %v1350
    %v1352 = vrot.slane %v1339, 2
    %v1353 = vsel %vm907, %v1350, %v1352
    %v1354 = vrot.slane %v1340, 2
    %v1355 = vrot.slane %v1341, 2
    %v1356 = vsel %vm907, %v1354, %v1355
    %v1357 = vrot.slane %v1342, 2
    %v1358 = vsel %vm907, %v1355, %v1357
    %1359 = vrot.lane.b32.xlu0 %v1351, 127
    %v1360 = vpop.permute.xlu0 %1359
    %1361 = vrot.lane.b32.xlu0 %v1353, 127
    %v1362 = vpop.permute.xlu0 %1361
    %1363 = vrot.lane.b32.xlu0 %v1356, 127
    %v1364 = vpop.permute.xlu0 %1363
    %1365 = vrot.lane.b32.xlu0 %v1358, 127
    %v1366 = vpop.permute.xlu0 %1365
    %v1371 = vadd.f32 %v1332, %v1360
    %v1372 = vadd.f32 %v1333, %v1362
    %v1373 = vadd.f32 %v1334, %v1364
    %v1374 = vadd.f32 %v1335, %v1366
    %v1375 = vstv %s779
    %v1376 = vmul.f32 %v1375, %v709
    %v1377 = vmul.f32 %v1375, %v710
    %v1378 = vmul.f32 %v1375, %v711
    %v1379 = vmul.f32 %v1375, %v712
    %v1380 = vmul.f32 %v1375, %v713
    %v1381 = vmul.f32 %v1375, %v714
    %v1388 = vrot.slane %v1376, 2
    %v1389 = vrot.slane %v1377, 2
    %v1390 = vsel %vm907, %v1388, %v1389
    %v1391 = vrot.slane %v1378, 2
    %v1392 = vsel %vm907, %v1389, %v1391
    %v1393 = vrot.slane %v1379, 2
    %v1394 = vrot.slane %v1380, 2
    %v1395 = vsel %vm907, %v1393, %v1394
    %v1396 = vrot.slane %v1381, 2
    %v1397 = vsel %vm907, %v1394, %v1396
    %1398 = vrot.lane.b32.xlu0 %v1390, 127
    %v1399 = vpop.permute.xlu0 %1398
    %1400 = vrot.lane.b32.xlu0 %v1392, 127
    %v1401 = vpop.permute.xlu0 %1400
    %1402 = vrot.lane.b32.xlu0 %v1395, 127
    %v1403 = vpop.permute.xlu0 %1402
    %1404 = vrot.lane.b32.xlu0 %v1397, 127
    %v1405 = vpop.permute.xlu0 %1404
    %v1410 = vadd.f32 %v1371, %v1399
    %v1411 = vadd.f32 %v1372, %v1401
    %v1412 = vadd.f32 %v1373, %v1403
    %v1413 = vadd.f32 %v1374, %v1405
    %v1414 = vstv %s737
    %v1415 = vmul.f32 %v1414, %v703
    %v1416 = vmul.f32 %v1414, %v704
    %v1417 = vmul.f32 %v1414, %v705
    %v1418 = vmul.f32 %v1414, %v706
    %v1419 = vmul.f32 %v1414, %v707
    %v1420 = vmul.f32 %v1414, %v708
    %v1427 = vrot.slane %v1415, 3
    %v1428 = vrot.slane %v1416, 3
    %v1429 = vsel %vm970, %v1427, %v1428
    %v1430 = vrot.slane %v1417, 3
    %v1431 = vsel %vm970, %v1428, %v1430
    %v1432 = vrot.slane %v1418, 3
    %v1433 = vrot.slane %v1419, 3
    %v1434 = vsel %vm970, %v1432, %v1433
    %v1435 = vrot.slane %v1420, 3
    %v1436 = vsel %vm970, %v1433, %v1435
    %1437 = vrot.lane.b32.xlu0 %v1429, 127
    %v1438 = vpop.permute.xlu0 %1437
    %1439 = vrot.lane.b32.xlu0 %v1431, 127
    %v1440 = vpop.permute.xlu0 %1439
    %1441 = vrot.lane.b32.xlu0 %v1434, 127
    %v1442 = vpop.permute.xlu0 %1441
    %1443 = vrot.lane.b32.xlu0 %v1436, 127
    %v1444 = vpop.permute.xlu0 %1443
    %v1449 = vadd.f32 %v1410, %v1438
    %v1450 = vadd.f32 %v1411, %v1440
    %v1451 = vadd.f32 %v1412, %v1442
    %v1452 = vadd.f32 %v1413, %v1444
    %v1453 = vstv %s786
    %v1454 = vmul.f32 %v1453, %v709
    %v1455 = vmul.f32 %v1453, %v710
    %v1456 = vmul.f32 %v1453, %v711
    %v1457 = vmul.f32 %v1453, %v712
    %v1458 = vmul.f32 %v1453, %v713
    %v1459 = vmul.f32 %v1453, %v714
    %v1466 = vrot.slane %v1454, 3
    %v1467 = vrot.slane %v1455, 3
    %v1468 = vsel %vm970, %v1466, %v1467
    %v1469 = vrot.slane %v1456, 3
    %v1470 = vsel %vm970, %v1467, %v1469
    %v1471 = vrot.slane %v1457, 3
    %v1472 = vrot.slane %v1458, 3
    %v1473 = vsel %vm970, %v1471, %v1472
    %v1474 = vrot.slane %v1459, 3
    %v1475 = vsel %vm970, %v1472, %v1474
    %1476 = vrot.lane.b32.xlu0 %v1468, 127
    %v1477 = vpop.permute.xlu0 %1476
    %1478 = vrot.lane.b32.xlu0 %v1470, 127
    %v1479 = vpop.permute.xlu0 %1478
    %1480 = vrot.lane.b32.xlu0 %v1473, 127
    %v1481 = vpop.permute.xlu0 %1480
    %1482 = vrot.lane.b32.xlu0 %v1475, 127
    %v1483 = vpop.permute.xlu0 %1482
    %v1488 = vadd.f32 %v1449, %v1477
    %v1489 = vadd.f32 %v1450, %v1479
    %v1490 = vadd.f32 %v1451, %v1481
    %v1491 = vadd.f32 %v1452, %v1483
    %v1492 = vstv %s744
    %v1493 = vmul.f32 %v1492, %v703
    %v1494 = vmul.f32 %v1492, %v704
    %v1495 = vmul.f32 %v1492, %v705
    %v1496 = vmul.f32 %v1492, %v706
    %v1497 = vmul.f32 %v1492, %v707
    %v1498 = vmul.f32 %v1492, %v708
    %v1505 = vrot.slane %v1493, 4
    %v1506 = vrot.slane %v1494, 4
    %v1507 = vsel %vm71, %v1505, %v1506
    %v1508 = vrot.slane %v1495, 4
    %v1509 = vsel %vm71, %v1506, %v1508
    %v1510 = vrot.slane %v1496, 4
    %v1511 = vrot.slane %v1497, 4
    %v1512 = vsel %vm71, %v1510, %v1511
    %v1513 = vrot.slane %v1498, 4
    %v1514 = vsel %vm71, %v1511, %v1513
    %1515 = vrot.lane.b32.xlu0 %v1507, 127
    %v1516 = vpop.permute.xlu0 %1515
    %1517 = vrot.lane.b32.xlu0 %v1509, 127
    %v1518 = vpop.permute.xlu0 %1517
    %1519 = vrot.lane.b32.xlu0 %v1512, 127
    %v1520 = vpop.permute.xlu0 %1519
    %1521 = vrot.lane.b32.xlu0 %v1514, 127
    %v1522 = vpop.permute.xlu0 %1521
    %v1527 = vadd.f32 %v1488, %v1516
    %v1528 = vadd.f32 %v1489, %v1518
    %v1529 = vadd.f32 %v1490, %v1520
    %v1530 = vadd.f32 %v1491, %v1522
    %v1531 = vstv %s793
    %v1532 = vmul.f32 %v1531, %v709
    %v1533 = vmul.f32 %v1531, %v710
    %v1534 = vmul.f32 %v1531, %v711
    %v1535 = vmul.f32 %v1531, %v712
    %v1536 = vmul.f32 %v1531, %v713
    %v1537 = vmul.f32 %v1531, %v714
    %v1544 = vrot.slane %v1532, 4
    %v1545 = vrot.slane %v1533, 4
    %v1546 = vsel %vm71, %v1544, %v1545
    %v1547 = vrot.slane %v1534, 4
    %v1548 = vsel %vm71, %v1545, %v1547
    %v1549 = vrot.slane %v1535, 4
    %v1550 = vrot.slane %v1536, 4
    %v1551 = vsel %vm71, %v1549, %v1550
    %v1552 = vrot.slane %v1537, 4
    %v1553 = vsel %vm71, %v1550, %v1552
    %1554 = vrot.lane.b32.xlu0 %v1546, 127
    %v1555 = vpop.permute.xlu0 %1554
    %1556 = vrot.lane.b32.xlu0 %v1548, 127
    %v1557 = vpop.permute.xlu0 %1556
    %1558 = vrot.lane.b32.xlu0 %v1551, 127
    %v1559 = vpop.permute.xlu0 %1558
    %1560 = vrot.lane.b32.xlu0 %v1553, 127
    %v1561 = vpop.permute.xlu0 %1560
    %v1566 = vadd.f32 %v1527, %v1555
    %v1567 = vadd.f32 %v1528, %v1557
    %v1568 = vadd.f32 %v1529, %v1559
    %v1569 = vadd.f32 %v1530, %v1561
    %v1570 = vstv %s751
    %v1571 = vmul.f32 %v1570, %v703
    %v1572 = vmul.f32 %v1570, %v704
    %v1573 = vmul.f32 %v1570, %v705
    %v1574 = vmul.f32 %v1570, %v706
    %v1575 = vmul.f32 %v1570, %v707
    %v1576 = vmul.f32 %v1570, %v708
    %v1583 = vrot.slane %v1571, 5
    %v1584 = vrot.slane %v1572, 5
    %v1585 = vsel %vm1095, %v1583, %v1584
    %v1586 = vrot.slane %v1573, 5
    %v1587 = vsel %vm1095, %v1584, %v1586
    %v1588 = vrot.slane %v1574, 5
    %v1589 = vrot.slane %v1575, 5
    %v1590 = vsel %vm1095, %v1588, %v1589
    %v1591 = vrot.slane %v1576, 5
    %v1592 = vsel %vm1095, %v1589, %v1591
    %1593 = vrot.lane.b32.xlu0 %v1585, 127
    %v1594 = vpop.permute.xlu0 %1593
    %1595 = vrot.lane.b32.xlu0 %v1587, 127
    %v1596 = vpop.permute.xlu0 %1595
    %1597 = vrot.lane.b32.xlu0 %v1590, 127
    %v1598 = vpop.permute.xlu0 %1597
    %1599 = vrot.lane.b32.xlu0 %v1592, 127
    %v1600 = vpop.permute.xlu0 %1599
    %v1605 = vadd.f32 %v1566, %v1594
    %v1606 = vadd.f32 %v1567, %v1596
    %v1607 = vadd.f32 %v1568, %v1598
    %v1608 = vadd.f32 %v1569, %v1600
    %v1609 = vstv %s800
    %v1610 = vmul.f32 %v1609, %v709
    %v1611 = vmul.f32 %v1609, %v710
    %v1612 = vmul.f32 %v1609, %v711
    %v1613 = vmul.f32 %v1609, %v712
    %v1614 = vmul.f32 %v1609, %v713
    %v1615 = vmul.f32 %v1609, %v714
    %v1622 = vrot.slane %v1610, 5
    %v1623 = vrot.slane %v1611, 5
    %v1624 = vsel %vm1095, %v1622, %v1623
    %v1625 = vrot.slane %v1612, 5
    %v1626 = vsel %vm1095, %v1623, %v1625
    %v1627 = vrot.slane %v1613, 5
    %v1628 = vrot.slane %v1614, 5
    %v1629 = vsel %vm1095, %v1627, %v1628
    %v1630 = vrot.slane %v1615, 5
    %v1631 = vsel %vm1095, %v1628, %v1630
    %1632 = vrot.lane.b32.xlu0 %v1624, 127
    %v1633 = vpop.permute.xlu0 %1632
    %1634 = vrot.lane.b32.xlu0 %v1626, 127
    %v1635 = vpop.permute.xlu0 %1634
    %1636 = vrot.lane.b32.xlu0 %v1629, 127
    %v1637 = vpop.permute.xlu0 %1636
    %1638 = vrot.lane.b32.xlu0 %v1631, 127
    %v1639 = vpop.permute.xlu0 %1638
    %v1644 = vadd.f32 %v1605, %v1633
    %v1645 = vadd.f32 %v1606, %v1635
    %v1646 = vadd.f32 %v1607, %v1637
    %v1647 = vadd.f32 %v1608, %v1639
    %v1648 = vstv %s758
    %v1649 = vmul.f32 %v1648, %v703
    %v1650 = vmul.f32 %v1648, %v704
    %v1651 = vmul.f32 %v1648, %v705
    %v1652 = vmul.f32 %v1648, %v706
    %v1653 = vmul.f32 %v1648, %v707
    %v1654 = vmul.f32 %v1648, %v708
    %v1661 = vrot.slane %v1649, 6
    %v1662 = vrot.slane %v1650, 6
    %v1663 = vsel %vm1158, %v1661, %v1662
    %v1664 = vrot.slane %v1651, 6
    %v1665 = vsel %vm1158, %v1662, %v1664
    %v1666 = vrot.slane %v1652, 6
    %v1667 = vrot.slane %v1653, 6
    %v1668 = vsel %vm1158, %v1666, %v1667
    %v1669 = vrot.slane %v1654, 6
    %v1670 = vsel %vm1158, %v1667, %v1669
    %1671 = vrot.lane.b32.xlu0 %v1663, 127
    %v1672 = vpop.permute.xlu0 %1671
    %1673 = vrot.lane.b32.xlu0 %v1665, 127
    %v1674 = vpop.permute.xlu0 %1673
    %1675 = vrot.lane.b32.xlu0 %v1668, 127
    %v1676 = vpop.permute.xlu0 %1675
    %1677 = vrot.lane.b32.xlu0 %v1670, 127
    %v1678 = vpop.permute.xlu0 %1677
    %v1683 = vadd.f32 %v1644, %v1672
    %v1684 = vadd.f32 %v1645, %v1674
    %v1685 = vadd.f32 %v1646, %v1676
    %v1686 = vadd.f32 %v1647, %v1678
    %v1687 = vstv %s807
    %v1688 = vmul.f32 %v1687, %v709
    %v1689 = vmul.f32 %v1687, %v710
    %v1690 = vmul.f32 %v1687, %v711
    %v1691 = vmul.f32 %v1687, %v712
    %v1692 = vmul.f32 %v1687, %v713
    %v1693 = vmul.f32 %v1687, %v714
    %v1700 = vrot.slane %v1688, 6
    %v1701 = vrot.slane %v1689, 6
    %v1702 = vsel %vm1158, %v1700, %v1701
    %v1703 = vrot.slane %v1690, 6
    %v1704 = vsel %vm1158, %v1701, %v1703
    %v1705 = vrot.slane %v1691, 6
    %v1706 = vrot.slane %v1692, 6
    %v1707 = vsel %vm1158, %v1705, %v1706
    %v1708 = vrot.slane %v1693, 6
    %v1709 = vsel %vm1158, %v1706, %v1708
    %1710 = vrot.lane.b32.xlu0 %v1702, 127
    %v1711 = vpop.permute.xlu0 %1710
    %1712 = vrot.lane.b32.xlu0 %v1704, 127
    %v1713 = vpop.permute.xlu0 %1712
    %1714 = vrot.lane.b32.xlu0 %v1707, 127
    %v1715 = vpop.permute.xlu0 %1714
    %1716 = vrot.lane.b32.xlu0 %v1709, 127
    %v1717 = vpop.permute.xlu0 %1716
    %v1722 = vadd.f32 %v1683, %v1711
    %v1723 = vadd.f32 %v1684, %v1713
    %v1724 = vadd.f32 %v1685, %v1715
    %v1725 = vadd.f32 %v1686, %v1717
    %v1726 = vstv %s717
    %v1727 = vmul.f32 %v1726, %v703
    %v1728 = vmul.f32 %v1726, %v704
    %v1729 = vmul.f32 %v1726, %v706
    %v1730 = vmul.f32 %v1726, %v707
    %1735 = vrot.lane.b32.xlu0 %v1727, 126
    %v1736 = vpop.permute.xlu0 %1735
    %1737 = vrot.lane.b32.xlu0 %v1728, 126
    %v1738 = vpop.permute.xlu0 %1737
    %1739 = vrot.lane.b32.xlu0 %v1729, 126
    %v1740 = vpop.permute.xlu0 %1739
    %1741 = vrot.lane.b32.xlu0 %v1730, 126
    %v1742 = vpop.permute.xlu0 %1741
    %v1747 = vadd.f32 %v1722, %v1736
    %v1748 = vadd.f32 %v1723, %v1738
    %v1749 = vadd.f32 %v1724, %v1740
    %v1750 = vadd.f32 %v1725, %v1742
    %v1751 = vstv %s766
    %v1752 = vmul.f32 %v1751, %v709
    %v1753 = vmul.f32 %v1751, %v710
    %v1754 = vmul.f32 %v1751, %v712
    %v1755 = vmul.f32 %v1751, %v713
    %1760 = vrot.lane.b32.xlu0 %v1752, 126
    %v1761 = vpop.permute.xlu0 %1760
    %1762 = vrot.lane.b32.xlu0 %v1753, 126
    %v1763 = vpop.permute.xlu0 %1762
    %1764 = vrot.lane.b32.xlu0 %v1754, 126
    %v1765 = vpop.permute.xlu0 %1764
    %1766 = vrot.lane.b32.xlu0 %v1755, 126
    %v1767 = vpop.permute.xlu0 %1766
    %v1772 = vadd.f32 %v1747, %v1761
    %v1773 = vadd.f32 %v1748, %v1763
    %v1774 = vadd.f32 %v1749, %v1765
    %v1775 = vadd.f32 %v1750, %v1767
    %v1776 = vstv %s724
    %v1777 = vmul.f32 %v1776, %v703
    %v1778 = vmul.f32 %v1776, %v704
    %v1779 = vmul.f32 %v1776, %v705
    %v1780 = vmul.f32 %v1776, %v706
    %v1781 = vmul.f32 %v1776, %v707
    %v1782 = vmul.f32 %v1776, %v708
    %v1789 = vrot.slane %v1777, 1
    %v1790 = vrot.slane %v1778, 1
    %v1791 = vsel %vm844, %v1789, %v1790
    %v1792 = vrot.slane %v1779, 1
    %v1793 = vsel %vm844, %v1790, %v1792
    %v1794 = vrot.slane %v1780, 1
    %v1795 = vrot.slane %v1781, 1
    %v1796 = vsel %vm844, %v1794, %v1795
    %v1797 = vrot.slane %v1782, 1
    %v1798 = vsel %vm844, %v1795, %v1797
    %1799 = vrot.lane.b32.xlu0 %v1791, 126
    %v1800 = vpop.permute.xlu0 %1799
    %1801 = vrot.lane.b32.xlu0 %v1793, 126
    %v1802 = vpop.permute.xlu0 %1801
    %1803 = vrot.lane.b32.xlu0 %v1796, 126
    %v1804 = vpop.permute.xlu0 %1803
    %1805 = vrot.lane.b32.xlu0 %v1798, 126
    %v1806 = vpop.permute.xlu0 %1805
    %v1811 = vadd.f32 %v1772, %v1800
    %v1812 = vadd.f32 %v1773, %v1802
    %v1813 = vadd.f32 %v1774, %v1804
    %v1814 = vadd.f32 %v1775, %v1806
    %v1815 = vstv %s773
    %v1816 = vmul.f32 %v1815, %v709
    %v1817 = vmul.f32 %v1815, %v710
    %v1818 = vmul.f32 %v1815, %v711
    %v1819 = vmul.f32 %v1815, %v712
    %v1820 = vmul.f32 %v1815, %v713
    %v1821 = vmul.f32 %v1815, %v714
    %v1828 = vrot.slane %v1816, 1
    %v1829 = vrot.slane %v1817, 1
    %v1830 = vsel %vm844, %v1828, %v1829
    %v1831 = vrot.slane %v1818, 1
    %v1832 = vsel %vm844, %v1829, %v1831
    %v1833 = vrot.slane %v1819, 1
    %v1834 = vrot.slane %v1820, 1
    %v1835 = vsel %vm844, %v1833, %v1834
    %v1836 = vrot.slane %v1821, 1
    %v1837 = vsel %vm844, %v1834, %v1836
    %1838 = vrot.lane.b32.xlu0 %v1830, 126
    %v1839 = vpop.permute.xlu0 %1838
    %1840 = vrot.lane.b32.xlu0 %v1832, 126
    %v1841 = vpop.permute.xlu0 %1840
    %1842 = vrot.lane.b32.xlu0 %v1835, 126
    %v1843 = vpop.permute.xlu0 %1842
    %1844 = vrot.lane.b32.xlu0 %v1837, 126
    %v1845 = vpop.permute.xlu0 %1844
    %v1850 = vadd.f32 %v1811, %v1839
    %v1851 = vadd.f32 %v1812, %v1841
    %v1852 = vadd.f32 %v1813, %v1843
    %v1853 = vadd.f32 %v1814, %v1845
    %v1854 = vstv %s731
    %v1855 = vmul.f32 %v1854, %v703
    %v1856 = vmul.f32 %v1854, %v704
    %v1857 = vmul.f32 %v1854, %v705
    %v1858 = vmul.f32 %v1854, %v706
    %v1859 = vmul.f32 %v1854, %v707
    %v1860 = vmul.f32 %v1854, %v708
    %v1867 = vrot.slane %v1855, 2
    %v1868 = vrot.slane %v1856, 2
    %v1869 = vsel %vm907, %v1867, %v1868
    %v1870 = vrot.slane %v1857, 2
    %v1871 = vsel %vm907, %v1868, %v1870
    %v1872 = vrot.slane %v1858, 2
    %v1873 = vrot.slane %v1859, 2
    %v1874 = vsel %vm907, %v1872, %v1873
    %v1875 = vrot.slane %v1860, 2
    %v1876 = vsel %vm907, %v1873, %v1875
    %1877 = vrot.lane.b32.xlu0 %v1869, 126
    %v1878 = vpop.permute.xlu0 %1877
    %1879 = vrot.lane.b32.xlu0 %v1871, 126
    %v1880 = vpop.permute.xlu0 %1879
    %1881 = vrot.lane.b32.xlu0 %v1874, 126
    %v1882 = vpop.permute.xlu0 %1881
    %1883 = vrot.lane.b32.xlu0 %v1876, 126
    %v1884 = vpop.permute.xlu0 %1883
    %v1889 = vadd.f32 %v1850, %v1878
    %v1890 = vadd.f32 %v1851, %v1880
    %v1891 = vadd.f32 %v1852, %v1882
    %v1892 = vadd.f32 %v1853, %v1884
    %v1893 = vstv %s780
    %v1894 = vmul.f32 %v1893, %v709
    %v1895 = vmul.f32 %v1893, %v710
    %v1896 = vmul.f32 %v1893, %v711
    %v1897 = vmul.f32 %v1893, %v712
    %v1898 = vmul.f32 %v1893, %v713
    %v1899 = vmul.f32 %v1893, %v714
    %v1906 = vrot.slane %v1894, 2
    %v1907 = vrot.slane %v1895, 2
    %v1908 = vsel %vm907, %v1906, %v1907
    %v1909 = vrot.slane %v1896, 2
    %v1910 = vsel %vm907, %v1907, %v1909
    %v1911 = vrot.slane %v1897, 2
    %v1912 = vrot.slane %v1898, 2
    %v1913 = vsel %vm907, %v1911, %v1912
    %v1914 = vrot.slane %v1899, 2
    %v1915 = vsel %vm907, %v1912, %v1914
    %1916 = vrot.lane.b32.xlu0 %v1908, 126
    %v1917 = vpop.permute.xlu0 %1916
    %1918 = vrot.lane.b32.xlu0 %v1910, 126
    %v1919 = vpop.permute.xlu0 %1918
    %1920 = vrot.lane.b32.xlu0 %v1913, 126
    %v1921 = vpop.permute.xlu0 %1920
    %1922 = vrot.lane.b32.xlu0 %v1915, 126
    %v1923 = vpop.permute.xlu0 %1922
    %v1928 = vadd.f32 %v1889, %v1917
    %v1929 = vadd.f32 %v1890, %v1919
    %v1930 = vadd.f32 %v1891, %v1921
    %v1931 = vadd.f32 %v1892, %v1923
    %v1932 = vstv %s738
    %v1933 = vmul.f32 %v1932, %v703
    %v1934 = vmul.f32 %v1932, %v704
    %v1935 = vmul.f32 %v1932, %v705
    %v1936 = vmul.f32 %v1932, %v706
    %v1937 = vmul.f32 %v1932, %v707
    %v1938 = vmul.f32 %v1932, %v708
    %v1945 = vrot.slane %v1933, 3
    %v1946 = vrot.slane %v1934, 3
    %v1947 = vsel %vm970, %v1945, %v1946
    %v1948 = vrot.slane %v1935, 3
    %v1949 = vsel %vm970, %v1946, %v1948
    %v1950 = vrot.slane %v1936, 3
    %v1951 = vrot.slane %v1937, 3
    %v1952 = vsel %vm970, %v1950, %v1951
    %v1953 = vrot.slane %v1938, 3
    %v1954 = vsel %vm970, %v1951, %v1953
    %1955 = vrot.lane.b32.xlu0 %v1947, 126
    %v1956 = vpop.permute.xlu0 %1955
    %1957 = vrot.lane.b32.xlu0 %v1949, 126
    %v1958 = vpop.permute.xlu0 %1957
    %1959 = vrot.lane.b32.xlu0 %v1952, 126
    %v1960 = vpop.permute.xlu0 %1959
    %1961 = vrot.lane.b32.xlu0 %v1954, 126
    %v1962 = vpop.permute.xlu0 %1961
    %v1967 = vadd.f32 %v1928, %v1956
    %v1968 = vadd.f32 %v1929, %v1958
    %v1969 = vadd.f32 %v1930, %v1960
    %v1970 = vadd.f32 %v1931, %v1962
    %v1971 = vstv %s787
    %v1972 = vmul.f32 %v1971, %v709
    %v1973 = vmul.f32 %v1971, %v710
    %v1974 = vmul.f32 %v1971, %v711
    %v1975 = vmul.f32 %v1971, %v712
    %v1976 = vmul.f32 %v1971, %v713
    %v1977 = vmul.f32 %v1971, %v714
    %v1984 = vrot.slane %v1972, 3
    %v1985 = vrot.slane %v1973, 3
    %v1986 = vsel %vm970, %v1984, %v1985
    %v1987 = vrot.slane %v1974, 3
    %v1988 = vsel %vm970, %v1985, %v1987
    %v1989 = vrot.slane %v1975, 3
    %v1990 = vrot.slane %v1976, 3
    %v1991 = vsel %vm970, %v1989, %v1990
    %v1992 = vrot.slane %v1977, 3
    %v1993 = vsel %vm970, %v1990, %v1992
    %1994 = vrot.lane.b32.xlu0 %v1986, 126
    %v1995 = vpop.permute.xlu0 %1994
    %1996 = vrot.lane.b32.xlu0 %v1988, 126
    %v1997 = vpop.permute.xlu0 %1996
    %1998 = vrot.lane.b32.xlu0 %v1991, 126
    %v1999 = vpop.permute.xlu0 %1998
    %2000 = vrot.lane.b32.xlu0 %v1993, 126
    %v2001 = vpop.permute.xlu0 %2000
    %v2006 = vadd.f32 %v1967, %v1995
    %v2007 = vadd.f32 %v1968, %v1997
    %v2008 = vadd.f32 %v1969, %v1999
    %v2009 = vadd.f32 %v1970, %v2001
    %v2010 = vstv %s745
    %v2011 = vmul.f32 %v2010, %v703
    %v2012 = vmul.f32 %v2010, %v704
    %v2013 = vmul.f32 %v2010, %v705
    %v2014 = vmul.f32 %v2010, %v706
    %v2015 = vmul.f32 %v2010, %v707
    %v2016 = vmul.f32 %v2010, %v708
    %v2023 = vrot.slane %v2011, 4
    %v2024 = vrot.slane %v2012, 4
    %v2025 = vsel %vm71, %v2023, %v2024
    %v2026 = vrot.slane %v2013, 4
    %v2027 = vsel %vm71, %v2024, %v2026
    %v2028 = vrot.slane %v2014, 4
    %v2029 = vrot.slane %v2015, 4
    %v2030 = vsel %vm71, %v2028, %v2029
    %v2031 = vrot.slane %v2016, 4
    %v2032 = vsel %vm71, %v2029, %v2031
    %2033 = vrot.lane.b32.xlu0 %v2025, 126
    %v2034 = vpop.permute.xlu0 %2033
    %2035 = vrot.lane.b32.xlu0 %v2027, 126
    %v2036 = vpop.permute.xlu0 %2035
    %2037 = vrot.lane.b32.xlu0 %v2030, 126
    %v2038 = vpop.permute.xlu0 %2037
    %2039 = vrot.lane.b32.xlu0 %v2032, 126
    %v2040 = vpop.permute.xlu0 %2039
    %v2045 = vadd.f32 %v2006, %v2034
    %v2046 = vadd.f32 %v2007, %v2036
    %v2047 = vadd.f32 %v2008, %v2038
    %v2048 = vadd.f32 %v2009, %v2040
    %v2049 = vstv %s794
    %v2050 = vmul.f32 %v2049, %v709
    %v2051 = vmul.f32 %v2049, %v710
    %v2052 = vmul.f32 %v2049, %v711
    %v2053 = vmul.f32 %v2049, %v712
    %v2054 = vmul.f32 %v2049, %v713
    %v2055 = vmul.f32 %v2049, %v714
    %v2062 = vrot.slane %v2050, 4
    %v2063 = vrot.slane %v2051, 4
    %v2064 = vsel %vm71, %v2062, %v2063
    %v2065 = vrot.slane %v2052, 4
    %v2066 = vsel %vm71, %v2063, %v2065
    %v2067 = vrot.slane %v2053, 4
    %v2068 = vrot.slane %v2054, 4
    %v2069 = vsel %vm71, %v2067, %v2068
    %v2070 = vrot.slane %v2055, 4
    %v2071 = vsel %vm71, %v2068, %v2070
    %2072 = vrot.lane.b32.xlu0 %v2064, 126
    %v2073 = vpop.permute.xlu0 %2072
    %2074 = vrot.lane.b32.xlu0 %v2066, 126
    %v2075 = vpop.permute.xlu0 %2074
    %2076 = vrot.lane.b32.xlu0 %v2069, 126
    %v2077 = vpop.permute.xlu0 %2076
    %2078 = vrot.lane.b32.xlu0 %v2071, 126
    %v2079 = vpop.permute.xlu0 %2078
    %v2084 = vadd.f32 %v2045, %v2073
    %v2085 = vadd.f32 %v2046, %v2075
    %v2086 = vadd.f32 %v2047, %v2077
    %v2087 = vadd.f32 %v2048, %v2079
    %v2088 = vstv %s752
    %v2089 = vmul.f32 %v2088, %v703
    %v2090 = vmul.f32 %v2088, %v704
    %v2091 = vmul.f32 %v2088, %v705
    %v2092 = vmul.f32 %v2088, %v706
    %v2093 = vmul.f32 %v2088, %v707
    %v2094 = vmul.f32 %v2088, %v708
    %v2101 = vrot.slane %v2089, 5
    %v2102 = vrot.slane %v2090, 5
    %v2103 = vsel %vm1095, %v2101, %v2102
    %v2104 = vrot.slane %v2091, 5
    %v2105 = vsel %vm1095, %v2102, %v2104
    %v2106 = vrot.slane %v2092, 5
    %v2107 = vrot.slane %v2093, 5
    %v2108 = vsel %vm1095, %v2106, %v2107
    %v2109 = vrot.slane %v2094, 5
    %v2110 = vsel %vm1095, %v2107, %v2109
    %2111 = vrot.lane.b32.xlu0 %v2103, 126
    %v2112 = vpop.permute.xlu0 %2111
    %2113 = vrot.lane.b32.xlu0 %v2105, 126
    %v2114 = vpop.permute.xlu0 %2113
    %2115 = vrot.lane.b32.xlu0 %v2108, 126
    %v2116 = vpop.permute.xlu0 %2115
    %2117 = vrot.lane.b32.xlu0 %v2110, 126
    %v2118 = vpop.permute.xlu0 %2117
    %v2123 = vadd.f32 %v2084, %v2112
    %v2124 = vadd.f32 %v2085, %v2114
    %v2125 = vadd.f32 %v2086, %v2116
    %v2126 = vadd.f32 %v2087, %v2118
    %v2127 = vstv %s801
    %v2128 = vmul.f32 %v2127, %v709
    %v2129 = vmul.f32 %v2127, %v710
    %v2130 = vmul.f32 %v2127, %v711
    %v2131 = vmul.f32 %v2127, %v712
    %v2132 = vmul.f32 %v2127, %v713
    %v2133 = vmul.f32 %v2127, %v714
    %v2140 = vrot.slane %v2128, 5
    %v2141 = vrot.slane %v2129, 5
    %v2142 = vsel %vm1095, %v2140, %v2141
    %v2143 = vrot.slane %v2130, 5
    %v2144 = vsel %vm1095, %v2141, %v2143
    %v2145 = vrot.slane %v2131, 5
    %v2146 = vrot.slane %v2132, 5
    %v2147 = vsel %vm1095, %v2145, %v2146
    %v2148 = vrot.slane %v2133, 5
    %v2149 = vsel %vm1095, %v2146, %v2148
    %2150 = vrot.lane.b32.xlu0 %v2142, 126
    %v2151 = vpop.permute.xlu0 %2150
    %2152 = vrot.lane.b32.xlu0 %v2144, 126
    %v2153 = vpop.permute.xlu0 %2152
    %2154 = vrot.lane.b32.xlu0 %v2147, 126
    %v2155 = vpop.permute.xlu0 %2154
    %2156 = vrot.lane.b32.xlu0 %v2149, 126
    %v2157 = vpop.permute.xlu0 %2156
    %v2162 = vadd.f32 %v2123, %v2151
    %v2163 = vadd.f32 %v2124, %v2153
    %v2164 = vadd.f32 %v2125, %v2155
    %v2165 = vadd.f32 %v2126, %v2157
    %v2166 = vstv %s759
    %v2167 = vmul.f32 %v2166, %v703
    %v2168 = vmul.f32 %v2166, %v704
    %v2169 = vmul.f32 %v2166, %v705
    %v2170 = vmul.f32 %v2166, %v706
    %v2171 = vmul.f32 %v2166, %v707
    %v2172 = vmul.f32 %v2166, %v708
    %v2179 = vrot.slane %v2167, 6
    %v2180 = vrot.slane %v2168, 6
    %v2181 = vsel %vm1158, %v2179, %v2180
    %v2182 = vrot.slane %v2169, 6
    %v2183 = vsel %vm1158, %v2180, %v2182
    %v2184 = vrot.slane %v2170, 6
    %v2185 = vrot.slane %v2171, 6
    %v2186 = vsel %vm1158, %v2184, %v2185
    %v2187 = vrot.slane %v2172, 6
    %v2188 = vsel %vm1158, %v2185, %v2187
    %2189 = vrot.lane.b32.xlu0 %v2181, 126
    %v2190 = vpop.permute.xlu0 %2189
    %2191 = vrot.lane.b32.xlu0 %v2183, 126
    %v2192 = vpop.permute.xlu0 %2191
    %2193 = vrot.lane.b32.xlu0 %v2186, 126
    %v2194 = vpop.permute.xlu0 %2193
    %2195 = vrot.lane.b32.xlu0 %v2188, 126
    %v2196 = vpop.permute.xlu0 %2195
    %v2201 = vadd.f32 %v2162, %v2190
    %v2202 = vadd.f32 %v2163, %v2192
    %v2203 = vadd.f32 %v2164, %v2194
    %v2204 = vadd.f32 %v2165, %v2196
    %v2205 = vstv %s808
    %v2206 = vmul.f32 %v2205, %v709
    %v2207 = vmul.f32 %v2205, %v710
    %v2208 = vmul.f32 %v2205, %v711
    %v2209 = vmul.f32 %v2205, %v712
    %v2210 = vmul.f32 %v2205, %v713
    %v2211 = vmul.f32 %v2205, %v714
    %v2218 = vrot.slane %v2206, 6
    %v2219 = vrot.slane %v2207, 6
    %v2220 = vsel %vm1158, %v2218, %v2219
    %v2221 = vrot.slane %v2208, 6
    %v2222 = vsel %vm1158, %v2219, %v2221
    %v2223 = vrot.slane %v2209, 6
    %v2224 = vrot.slane %v2210, 6
    %v2225 = vsel %vm1158, %v2223, %v2224
    %v2226 = vrot.slane %v2211, 6
    %v2227 = vsel %vm1158, %v2224, %v2226
    %2228 = vrot.lane.b32.xlu0 %v2220, 126
    %v2229 = vpop.permute.xlu0 %2228
    %2230 = vrot.lane.b32.xlu0 %v2222, 126
    %v2231 = vpop.permute.xlu0 %2230
    %2232 = vrot.lane.b32.xlu0 %v2225, 126
    %v2233 = vpop.permute.xlu0 %2232
    %2234 = vrot.lane.b32.xlu0 %v2227, 126
    %v2235 = vpop.permute.xlu0 %2234
    %v2240 = vadd.f32 %v2201, %v2229
    %v2241 = vadd.f32 %v2202, %v2231
    %v2242 = vadd.f32 %v2203, %v2233
    %v2243 = vadd.f32 %v2204, %v2235
    %v2244 = vstv %s718
    %v2245 = vmul.f32 %v2244, %v703
    %v2246 = vmul.f32 %v2244, %v704
    %v2247 = vmul.f32 %v2244, %v706
    %v2248 = vmul.f32 %v2244, %v707
    %2253 = vrot.lane.b32.xlu0 %v2245, 125
    %v2254 = vpop.permute.xlu0 %2253
    %2255 = vrot.lane.b32.xlu0 %v2246, 125
    %v2256 = vpop.permute.xlu0 %2255
    %2257 = vrot.lane.b32.xlu0 %v2247, 125
    %v2258 = vpop.permute.xlu0 %2257
    %2259 = vrot.lane.b32.xlu0 %v2248, 125
    %v2260 = vpop.permute.xlu0 %2259
    %v2265 = vadd.f32 %v2240, %v2254
    %v2266 = vadd.f32 %v2241, %v2256
    %v2267 = vadd.f32 %v2242, %v2258
    %v2268 = vadd.f32 %v2243, %v2260
    %v2269 = vstv %s767
    %v2270 = vmul.f32 %v2269, %v709
    %v2271 = vmul.f32 %v2269, %v710
    %v2272 = vmul.f32 %v2269, %v712
    %v2273 = vmul.f32 %v2269, %v713
    %2278 = vrot.lane.b32.xlu0 %v2270, 125
    %v2279 = vpop.permute.xlu0 %2278
    %2280 = vrot.lane.b32.xlu0 %v2271, 125
    %v2281 = vpop.permute.xlu0 %2280
    %2282 = vrot.lane.b32.xlu0 %v2272, 125
    %v2283 = vpop.permute.xlu0 %2282
    %2284 = vrot.lane.b32.xlu0 %v2273, 125
    %v2285 = vpop.permute.xlu0 %2284
    %v2290 = vadd.f32 %v2265, %v2279
    %v2291 = vadd.f32 %v2266, %v2281
    %v2292 = vadd.f32 %v2267, %v2283
    %v2293 = vadd.f32 %v2268, %v2285
    %v2294 = vstv %s725
    %v2295 = vmul.f32 %v2294, %v703
    %v2296 = vmul.f32 %v2294, %v704
    %v2297 = vmul.f32 %v2294, %v705
    %v2298 = vmul.f32 %v2294, %v706
    %v2299 = vmul.f32 %v2294, %v707
    %v2300 = vmul.f32 %v2294, %v708
    %v2307 = vrot.slane %v2295, 1
    %v2308 = vrot.slane %v2296, 1
    %v2309 = vsel %vm844, %v2307, %v2308
    %v2310 = vrot.slane %v2297, 1
    %v2311 = vsel %vm844, %v2308, %v2310
    %v2312 = vrot.slane %v2298, 1
    %v2313 = vrot.slane %v2299, 1
    %v2314 = vsel %vm844, %v2312, %v2313
    %v2315 = vrot.slane %v2300, 1
    %v2316 = vsel %vm844, %v2313, %v2315
    %2317 = vrot.lane.b32.xlu0 %v2309, 125
    %v2318 = vpop.permute.xlu0 %2317
    %2319 = vrot.lane.b32.xlu0 %v2311, 125
    %v2320 = vpop.permute.xlu0 %2319
    %2321 = vrot.lane.b32.xlu0 %v2314, 125
    %v2322 = vpop.permute.xlu0 %2321
    %2323 = vrot.lane.b32.xlu0 %v2316, 125
    %v2324 = vpop.permute.xlu0 %2323
    %v2329 = vadd.f32 %v2290, %v2318
    %v2330 = vadd.f32 %v2291, %v2320
    %v2331 = vadd.f32 %v2292, %v2322
    %v2332 = vadd.f32 %v2293, %v2324
    %v2333 = vstv %s774
    %v2334 = vmul.f32 %v2333, %v709
    %v2335 = vmul.f32 %v2333, %v710
    %v2336 = vmul.f32 %v2333, %v711
    %v2337 = vmul.f32 %v2333, %v712
    %v2338 = vmul.f32 %v2333, %v713
    %v2339 = vmul.f32 %v2333, %v714
    %v2346 = vrot.slane %v2334, 1
    %v2347 = vrot.slane %v2335, 1
    %v2348 = vsel %vm844, %v2346, %v2347
    %v2349 = vrot.slane %v2336, 1
    %v2350 = vsel %vm844, %v2347, %v2349
    %v2351 = vrot.slane %v2337, 1
    %v2352 = vrot.slane %v2338, 1
    %v2353 = vsel %vm844, %v2351, %v2352
    %v2354 = vrot.slane %v2339, 1
    %v2355 = vsel %vm844, %v2352, %v2354
    %2356 = vrot.lane.b32.xlu0 %v2348, 125
    %v2357 = vpop.permute.xlu0 %2356
    %2358 = vrot.lane.b32.xlu0 %v2350, 125
    %v2359 = vpop.permute.xlu0 %2358
    %2360 = vrot.lane.b32.xlu0 %v2353, 125
    %v2361 = vpop.permute.xlu0 %2360
    %2362 = vrot.lane.b32.xlu0 %v2355, 125
    %v2363 = vpop.permute.xlu0 %2362
    %v2368 = vadd.f32 %v2329, %v2357
    %v2369 = vadd.f32 %v2330, %v2359
    %v2370 = vadd.f32 %v2331, %v2361
    %v2371 = vadd.f32 %v2332, %v2363
    %v2372 = vstv %s732
    %v2373 = vmul.f32 %v2372, %v703
    %v2374 = vmul.f32 %v2372, %v704
    %v2375 = vmul.f32 %v2372, %v705
    %v2376 = vmul.f32 %v2372, %v706
    %v2377 = vmul.f32 %v2372, %v707
    %v2378 = vmul.f32 %v2372, %v708
    %v2385 = vrot.slane %v2373, 2
    %v2386 = vrot.slane %v2374, 2
    %v2387 = vsel %vm907, %v2385, %v2386
    %v2388 = vrot.slane %v2375, 2
    %v2389 = vsel %vm907, %v2386, %v2388
    %v2390 = vrot.slane %v2376, 2
    %v2391 = vrot.slane %v2377, 2
    %v2392 = vsel %vm907, %v2390, %v2391
    %v2393 = vrot.slane %v2378, 2
    %v2394 = vsel %vm907, %v2391, %v2393
    %2395 = vrot.lane.b32.xlu0 %v2387, 125
    %v2396 = vpop.permute.xlu0 %2395
    %2397 = vrot.lane.b32.xlu0 %v2389, 125
    %v2398 = vpop.permute.xlu0 %2397
    %2399 = vrot.lane.b32.xlu0 %v2392, 125
    %v2400 = vpop.permute.xlu0 %2399
    %2401 = vrot.lane.b32.xlu0 %v2394, 125
    %v2402 = vpop.permute.xlu0 %2401
    %v2407 = vadd.f32 %v2368, %v2396
    %v2408 = vadd.f32 %v2369, %v2398
    %v2409 = vadd.f32 %v2370, %v2400
    %v2410 = vadd.f32 %v2371, %v2402
    %v2411 = vstv %s781
    %v2412 = vmul.f32 %v2411, %v709
    %v2413 = vmul.f32 %v2411, %v710
    %v2414 = vmul.f32 %v2411, %v711
    %v2415 = vmul.f32 %v2411, %v712
    %v2416 = vmul.f32 %v2411, %v713
    %v2417 = vmul.f32 %v2411, %v714
    %v2424 = vrot.slane %v2412, 2
    %v2425 = vrot.slane %v2413, 2
    %v2426 = vsel %vm907, %v2424, %v2425
    %v2427 = vrot.slane %v2414, 2
    %v2428 = vsel %vm907, %v2425, %v2427
    %v2429 = vrot.slane %v2415, 2
    %v2430 = vrot.slane %v2416, 2
    %v2431 = vsel %vm907, %v2429, %v2430
    %v2432 = vrot.slane %v2417, 2
    %v2433 = vsel %vm907, %v2430, %v2432
    %2434 = vrot.lane.b32.xlu0 %v2426, 125
    %v2435 = vpop.permute.xlu0 %2434
    %2436 = vrot.lane.b32.xlu0 %v2428, 125
    %v2437 = vpop.permute.xlu0 %2436
    %2438 = vrot.lane.b32.xlu0 %v2431, 125
    %v2439 = vpop.permute.xlu0 %2438
    %2440 = vrot.lane.b32.xlu0 %v2433, 125
    %v2441 = vpop.permute.xlu0 %2440
    %v2446 = vadd.f32 %v2407, %v2435
    %v2447 = vadd.f32 %v2408, %v2437
    %v2448 = vadd.f32 %v2409, %v2439
    %v2449 = vadd.f32 %v2410, %v2441
    %v2450 = vstv %s739
    %v2451 = vmul.f32 %v2450, %v703
    %v2452 = vmul.f32 %v2450, %v704
    %v2453 = vmul.f32 %v2450, %v705
    %v2454 = vmul.f32 %v2450, %v706
    %v2455 = vmul.f32 %v2450, %v707
    %v2456 = vmul.f32 %v2450, %v708
    %v2463 = vrot.slane %v2451, 3
    %v2464 = vrot.slane %v2452, 3
    %v2465 = vsel %vm970, %v2463, %v2464
    %v2466 = vrot.slane %v2453, 3
    %v2467 = vsel %vm970, %v2464, %v2466
    %v2468 = vrot.slane %v2454, 3
    %v2469 = vrot.slane %v2455, 3
    %v2470 = vsel %vm970, %v2468, %v2469
    %v2471 = vrot.slane %v2456, 3
    %v2472 = vsel %vm970, %v2469, %v2471
    %2473 = vrot.lane.b32.xlu0 %v2465, 125
    %v2474 = vpop.permute.xlu0 %2473
    %2475 = vrot.lane.b32.xlu0 %v2467, 125
    %v2476 = vpop.permute.xlu0 %2475
    %2477 = vrot.lane.b32.xlu0 %v2470, 125
    %v2478 = vpop.permute.xlu0 %2477
    %2479 = vrot.lane.b32.xlu0 %v2472, 125
    %v2480 = vpop.permute.xlu0 %2479
    %v2485 = vadd.f32 %v2446, %v2474
    %v2486 = vadd.f32 %v2447, %v2476
    %v2487 = vadd.f32 %v2448, %v2478
    %v2488 = vadd.f32 %v2449, %v2480
    %v2489 = vstv %s788
    %v2490 = vmul.f32 %v2489, %v709
    %v2491 = vmul.f32 %v2489, %v710
    %v2492 = vmul.f32 %v2489, %v711
    %v2493 = vmul.f32 %v2489, %v712
    %v2494 = vmul.f32 %v2489, %v713
    %v2495 = vmul.f32 %v2489, %v714
    %v2502 = vrot.slane %v2490, 3
    %v2503 = vrot.slane %v2491, 3
    %v2504 = vsel %vm970, %v2502, %v2503
    %v2505 = vrot.slane %v2492, 3
    %v2506 = vsel %vm970, %v2503, %v2505
    %v2507 = vrot.slane %v2493, 3
    %v2508 = vrot.slane %v2494, 3
    %v2509 = vsel %vm970, %v2507, %v2508
    %v2510 = vrot.slane %v2495, 3
    %v2511 = vsel %vm970, %v2508, %v2510
    %2512 = vrot.lane.b32.xlu0 %v2504, 125
    %v2513 = vpop.permute.xlu0 %2512
    %2514 = vrot.lane.b32.xlu0 %v2506, 125
    %v2515 = vpop.permute.xlu0 %2514
    %2516 = vrot.lane.b32.xlu0 %v2509, 125
    %v2517 = vpop.permute.xlu0 %2516
    %2518 = vrot.lane.b32.xlu0 %v2511, 125
    %v2519 = vpop.permute.xlu0 %2518
    %v2524 = vadd.f32 %v2485, %v2513
    %v2525 = vadd.f32 %v2486, %v2515
    %v2526 = vadd.f32 %v2487, %v2517
    %v2527 = vadd.f32 %v2488, %v2519
    %v2528 = vstv %s746
    %v2529 = vmul.f32 %v2528, %v703
    %v2530 = vmul.f32 %v2528, %v704
    %v2531 = vmul.f32 %v2528, %v705
    %v2532 = vmul.f32 %v2528, %v706
    %v2533 = vmul.f32 %v2528, %v707
    %v2534 = vmul.f32 %v2528, %v708
    %v2541 = vrot.slane %v2529, 4
    %v2542 = vrot.slane %v2530, 4
    %v2543 = vsel %vm71, %v2541, %v2542
    %v2544 = vrot.slane %v2531, 4
    %v2545 = vsel %vm71, %v2542, %v2544
    %v2546 = vrot.slane %v2532, 4
    %v2547 = vrot.slane %v2533, 4
    %v2548 = vsel %vm71, %v2546, %v2547
    %v2549 = vrot.slane %v2534, 4
    %v2550 = vsel %vm71, %v2547, %v2549
    %2551 = vrot.lane.b32.xlu0 %v2543, 125
    %v2552 = vpop.permute.xlu0 %2551
    %2553 = vrot.lane.b32.xlu0 %v2545, 125
    %v2554 = vpop.permute.xlu0 %2553
    %2555 = vrot.lane.b32.xlu0 %v2548, 125
    %v2556 = vpop.permute.xlu0 %2555
    %2557 = vrot.lane.b32.xlu0 %v2550, 125
    %v2558 = vpop.permute.xlu0 %2557
    %v2563 = vadd.f32 %v2524, %v2552
    %v2564 = vadd.f32 %v2525, %v2554
    %v2565 = vadd.f32 %v2526, %v2556
    %v2566 = vadd.f32 %v2527, %v2558
    %v2567 = vstv %s795
    %v2568 = vmul.f32 %v2567, %v709
    %v2569 = vmul.f32 %v2567, %v710
    %v2570 = vmul.f32 %v2567, %v711
    %v2571 = vmul.f32 %v2567, %v712
    %v2572 = vmul.f32 %v2567, %v713
    %v2573 = vmul.f32 %v2567, %v714
    %v2580 = vrot.slane %v2568, 4
    %v2581 = vrot.slane %v2569, 4
    %v2582 = vsel %vm71, %v2580, %v2581
    %v2583 = vrot.slane %v2570, 4
    %v2584 = vsel %vm71, %v2581, %v2583
    %v2585 = vrot.slane %v2571, 4
    %v2586 = vrot.slane %v2572, 4
    %v2587 = vsel %vm71, %v2585, %v2586
    %v2588 = vrot.slane %v2573, 4
    %v2589 = vsel %vm71, %v2586, %v2588
    %2590 = vrot.lane.b32.xlu0 %v2582, 125
    %v2591 = vpop.permute.xlu0 %2590
    %2592 = vrot.lane.b32.xlu0 %v2584, 125
    %v2593 = vpop.permute.xlu0 %2592
    %2594 = vrot.lane.b32.xlu0 %v2587, 125
    %v2595 = vpop.permute.xlu0 %2594
    %2596 = vrot.lane.b32.xlu0 %v2589, 125
    %v2597 = vpop.permute.xlu0 %2596
    %v2602 = vadd.f32 %v2563, %v2591
    %v2603 = vadd.f32 %v2564, %v2593
    %v2604 = vadd.f32 %v2565, %v2595
    %v2605 = vadd.f32 %v2566, %v2597
    %v2606 = vstv %s753
    %v2607 = vmul.f32 %v2606, %v703
    %v2608 = vmul.f32 %v2606, %v704
    %v2609 = vmul.f32 %v2606, %v705
    %v2610 = vmul.f32 %v2606, %v706
    %v2611 = vmul.f32 %v2606, %v707
    %v2612 = vmul.f32 %v2606, %v708
    %v2619 = vrot.slane %v2607, 5
    %v2620 = vrot.slane %v2608, 5
    %v2621 = vsel %vm1095, %v2619, %v2620
    %v2622 = vrot.slane %v2609, 5
    %v2623 = vsel %vm1095, %v2620, %v2622
    %v2624 = vrot.slane %v2610, 5
    %v2625 = vrot.slane %v2611, 5
    %v2626 = vsel %vm1095, %v2624, %v2625
    %v2627 = vrot.slane %v2612, 5
    %v2628 = vsel %vm1095, %v2625, %v2627
    %2629 = vrot.lane.b32.xlu0 %v2621, 125
    %v2630 = vpop.permute.xlu0 %2629
    %2631 = vrot.lane.b32.xlu0 %v2623, 125
    %v2632 = vpop.permute.xlu0 %2631
    %2633 = vrot.lane.b32.xlu0 %v2626, 125
    %v2634 = vpop.permute.xlu0 %2633
    %2635 = vrot.lane.b32.xlu0 %v2628, 125
    %v2636 = vpop.permute.xlu0 %2635
    %v2641 = vadd.f32 %v2602, %v2630
    %v2642 = vadd.f32 %v2603, %v2632
    %v2643 = vadd.f32 %v2604, %v2634
    %v2644 = vadd.f32 %v2605, %v2636
    %v2645 = vstv %s802
    %v2646 = vmul.f32 %v2645, %v709
    %v2647 = vmul.f32 %v2645, %v710
    %v2648 = vmul.f32 %v2645, %v711
    %v2649 = vmul.f32 %v2645, %v712
    %v2650 = vmul.f32 %v2645, %v713
    %v2651 = vmul.f32 %v2645, %v714
    %v2658 = vrot.slane %v2646, 5
    %v2659 = vrot.slane %v2647, 5
    %v2660 = vsel %vm1095, %v2658, %v2659
    %v2661 = vrot.slane %v2648, 5
    %v2662 = vsel %vm1095, %v2659, %v2661
    %v2663 = vrot.slane %v2649, 5
    %v2664 = vrot.slane %v2650, 5
    %v2665 = vsel %vm1095, %v2663, %v2664
    %v2666 = vrot.slane %v2651, 5
    %v2667 = vsel %vm1095, %v2664, %v2666
    %2668 = vrot.lane.b32.xlu0 %v2660, 125
    %v2669 = vpop.permute.xlu0 %2668
    %2670 = vrot.lane.b32.xlu0 %v2662, 125
    %v2671 = vpop.permute.xlu0 %2670
    %2672 = vrot.lane.b32.xlu0 %v2665, 125
    %v2673 = vpop.permute.xlu0 %2672
    %2674 = vrot.lane.b32.xlu0 %v2667, 125
    %v2675 = vpop.permute.xlu0 %2674
    %v2680 = vadd.f32 %v2641, %v2669
    %v2681 = vadd.f32 %v2642, %v2671
    %v2682 = vadd.f32 %v2643, %v2673
    %v2683 = vadd.f32 %v2644, %v2675
    %v2684 = vstv %s760
    %v2685 = vmul.f32 %v2684, %v703
    %v2686 = vmul.f32 %v2684, %v704
    %v2687 = vmul.f32 %v2684, %v705
    %v2688 = vmul.f32 %v2684, %v706
    %v2689 = vmul.f32 %v2684, %v707
    %v2690 = vmul.f32 %v2684, %v708
    %v2697 = vrot.slane %v2685, 6
    %v2698 = vrot.slane %v2686, 6
    %v2699 = vsel %vm1158, %v2697, %v2698
    %v2700 = vrot.slane %v2687, 6
    %v2701 = vsel %vm1158, %v2698, %v2700
    %v2702 = vrot.slane %v2688, 6
    %v2703 = vrot.slane %v2689, 6
    %v2704 = vsel %vm1158, %v2702, %v2703
    %v2705 = vrot.slane %v2690, 6
    %v2706 = vsel %vm1158, %v2703, %v2705
    %2707 = vrot.lane.b32.xlu0 %v2699, 125
    %v2708 = vpop.permute.xlu0 %2707
    %2709 = vrot.lane.b32.xlu0 %v2701, 125
    %v2710 = vpop.permute.xlu0 %2709
    %2711 = vrot.lane.b32.xlu0 %v2704, 125
    %v2712 = vpop.permute.xlu0 %2711
    %2713 = vrot.lane.b32.xlu0 %v2706, 125
    %v2714 = vpop.permute.xlu0 %2713
    %v2719 = vadd.f32 %v2680, %v2708
    %v2720 = vadd.f32 %v2681, %v2710
    %v2721 = vadd.f32 %v2682, %v2712
    %v2722 = vadd.f32 %v2683, %v2714
    %v2723 = vstv %s809
    %v2724 = vmul.f32 %v2723, %v709
    %v2725 = vmul.f32 %v2723, %v710
    %v2726 = vmul.f32 %v2723, %v711
    %v2727 = vmul.f32 %v2723, %v712
    %v2728 = vmul.f32 %v2723, %v713
    %v2729 = vmul.f32 %v2723, %v714
    %v2736 = vrot.slane %v2724, 6
    %v2737 = vrot.slane %v2725, 6
    %v2738 = vsel %vm1158, %v2736, %v2737
    %v2739 = vrot.slane %v2726, 6
    %v2740 = vsel %vm1158, %v2737, %v2739
    %v2741 = vrot.slane %v2727, 6
    %v2742 = vrot.slane %v2728, 6
    %v2743 = vsel %vm1158, %v2741, %v2742
    %v2744 = vrot.slane %v2729, 6
    %v2745 = vsel %vm1158, %v2742, %v2744
    %2746 = vrot.lane.b32.xlu0 %v2738, 125
    %v2747 = vpop.permute.xlu0 %2746
    %2748 = vrot.lane.b32.xlu0 %v2740, 125
    %v2749 = vpop.permute.xlu0 %2748
    %2750 = vrot.lane.b32.xlu0 %v2743, 125
    %v2751 = vpop.permute.xlu0 %2750
    %2752 = vrot.lane.b32.xlu0 %v2745, 125
    %v2753 = vpop.permute.xlu0 %2752
    %v2758 = vadd.f32 %v2719, %v2747
    %v2759 = vadd.f32 %v2720, %v2749
    %v2760 = vadd.f32 %v2721, %v2751
    %v2761 = vadd.f32 %v2722, %v2753
    %v2762 = vstv %s719
    %v2763 = vmul.f32 %v2762, %v703
    %v2764 = vmul.f32 %v2762, %v704
    %v2765 = vmul.f32 %v2762, %v706
    %v2766 = vmul.f32 %v2762, %v707
    %2771 = vrot.lane.b32.xlu0 %v2763, 124
    %v2772 = vpop.permute.xlu0 %2771
    %2773 = vrot.lane.b32.xlu0 %v2764, 124
    %v2774 = vpop.permute.xlu0 %2773
    %2775 = vrot.lane.b32.xlu0 %v2765, 124
    %v2776 = vpop.permute.xlu0 %2775
    %2777 = vrot.lane.b32.xlu0 %v2766, 124
    %v2778 = vpop.permute.xlu0 %2777
    %v2783 = vadd.f32 %v2758, %v2772
    %v2784 = vadd.f32 %v2759, %v2774
    %v2785 = vadd.f32 %v2760, %v2776
    %v2786 = vadd.f32 %v2761, %v2778
    %v2787 = vstv %s768
    %v2788 = vmul.f32 %v2787, %v709
    %v2789 = vmul.f32 %v2787, %v710
    %v2790 = vmul.f32 %v2787, %v712
    %v2791 = vmul.f32 %v2787, %v713
    %2796 = vrot.lane.b32.xlu0 %v2788, 124
    %v2797 = vpop.permute.xlu0 %2796
    %2798 = vrot.lane.b32.xlu0 %v2789, 124
    %v2799 = vpop.permute.xlu0 %2798
    %2800 = vrot.lane.b32.xlu0 %v2790, 124
    %v2801 = vpop.permute.xlu0 %2800
    %2802 = vrot.lane.b32.xlu0 %v2791, 124
    %v2803 = vpop.permute.xlu0 %2802
    %v2808 = vadd.f32 %v2783, %v2797
    %v2809 = vadd.f32 %v2784, %v2799
    %v2810 = vadd.f32 %v2785, %v2801
    %v2811 = vadd.f32 %v2786, %v2803
    %v2812 = vstv %s726
    %v2813 = vmul.f32 %v2812, %v703
    %v2814 = vmul.f32 %v2812, %v704
    %v2815 = vmul.f32 %v2812, %v705
    %v2816 = vmul.f32 %v2812, %v706
    %v2817 = vmul.f32 %v2812, %v707
    %v2818 = vmul.f32 %v2812, %v708
    %v2825 = vrot.slane %v2813, 1
    %v2826 = vrot.slane %v2814, 1
    %v2827 = vsel %vm844, %v2825, %v2826
    %v2828 = vrot.slane %v2815, 1
    %v2829 = vsel %vm844, %v2826, %v2828
    %v2830 = vrot.slane %v2816, 1
    %v2831 = vrot.slane %v2817, 1
    %v2832 = vsel %vm844, %v2830, %v2831
    %v2833 = vrot.slane %v2818, 1
    %v2834 = vsel %vm844, %v2831, %v2833
    %2835 = vrot.lane.b32.xlu0 %v2827, 124
    %v2836 = vpop.permute.xlu0 %2835
    %2837 = vrot.lane.b32.xlu0 %v2829, 124
    %v2838 = vpop.permute.xlu0 %2837
    %2839 = vrot.lane.b32.xlu0 %v2832, 124
    %v2840 = vpop.permute.xlu0 %2839
    %2841 = vrot.lane.b32.xlu0 %v2834, 124
    %v2842 = vpop.permute.xlu0 %2841
    %v2847 = vadd.f32 %v2808, %v2836
    %v2848 = vadd.f32 %v2809, %v2838
    %v2849 = vadd.f32 %v2810, %v2840
    %v2850 = vadd.f32 %v2811, %v2842
    %v2851 = vstv %s775
    %v2852 = vmul.f32 %v2851, %v709
    %v2853 = vmul.f32 %v2851, %v710
    %v2854 = vmul.f32 %v2851, %v711
    %v2855 = vmul.f32 %v2851, %v712
    %v2856 = vmul.f32 %v2851, %v713
    %v2857 = vmul.f32 %v2851, %v714
    %v2864 = vrot.slane %v2852, 1
    %v2865 = vrot.slane %v2853, 1
    %v2866 = vsel %vm844, %v2864, %v2865
    %v2867 = vrot.slane %v2854, 1
    %v2868 = vsel %vm844, %v2865, %v2867
    %v2869 = vrot.slane %v2855, 1
    %v2870 = vrot.slane %v2856, 1
    %v2871 = vsel %vm844, %v2869, %v2870
    %v2872 = vrot.slane %v2857, 1
    %v2873 = vsel %vm844, %v2870, %v2872
    %2874 = vrot.lane.b32.xlu0 %v2866, 124
    %v2875 = vpop.permute.xlu0 %2874
    %2876 = vrot.lane.b32.xlu0 %v2868, 124
    %v2877 = vpop.permute.xlu0 %2876
    %2878 = vrot.lane.b32.xlu0 %v2871, 124
    %v2879 = vpop.permute.xlu0 %2878
    %2880 = vrot.lane.b32.xlu0 %v2873, 124
    %v2881 = vpop.permute.xlu0 %2880
    %v2886 = vadd.f32 %v2847, %v2875
    %v2887 = vadd.f32 %v2848, %v2877
    %v2888 = vadd.f32 %v2849, %v2879
    %v2889 = vadd.f32 %v2850, %v2881
    %v2890 = vstv %s733
    %v2891 = vmul.f32 %v2890, %v703
    %v2892 = vmul.f32 %v2890, %v704
    %v2893 = vmul.f32 %v2890, %v705
    %v2894 = vmul.f32 %v2890, %v706
    %v2895 = vmul.f32 %v2890, %v707
    %v2896 = vmul.f32 %v2890, %v708
    %v2903 = vrot.slane %v2891, 2
    %v2904 = vrot.slane %v2892, 2
    %v2905 = vsel %vm907, %v2903, %v2904
    %v2906 = vrot.slane %v2893, 2
    %v2907 = vsel %vm907, %v2904, %v2906
    %v2908 = vrot.slane %v2894, 2
    %v2909 = vrot.slane %v2895, 2
    %v2910 = vsel %vm907, %v2908, %v2909
    %v2911 = vrot.slane %v2896, 2
    %v2912 = vsel %vm907, %v2909, %v2911
    %2913 = vrot.lane.b32.xlu0 %v2905, 124
    %v2914 = vpop.permute.xlu0 %2913
    %2915 = vrot.lane.b32.xlu0 %v2907, 124
    %v2916 = vpop.permute.xlu0 %2915
    %2917 = vrot.lane.b32.xlu0 %v2910, 124
    %v2918 = vpop.permute.xlu0 %2917
    %2919 = vrot.lane.b32.xlu0 %v2912, 124
    %v2920 = vpop.permute.xlu0 %2919
    %v2925 = vadd.f32 %v2886, %v2914
    %v2926 = vadd.f32 %v2887, %v2916
    %v2927 = vadd.f32 %v2888, %v2918
    %v2928 = vadd.f32 %v2889, %v2920
    %v2929 = vstv %s782
    %v2930 = vmul.f32 %v2929, %v709
    %v2931 = vmul.f32 %v2929, %v710
    %v2932 = vmul.f32 %v2929, %v711
    %v2933 = vmul.f32 %v2929, %v712
    %v2934 = vmul.f32 %v2929, %v713
    %v2935 = vmul.f32 %v2929, %v714
    %v2942 = vrot.slane %v2930, 2
    %v2943 = vrot.slane %v2931, 2
    %v2944 = vsel %vm907, %v2942, %v2943
    %v2945 = vrot.slane %v2932, 2
    %v2946 = vsel %vm907, %v2943, %v2945
    %v2947 = vrot.slane %v2933, 2
    %v2948 = vrot.slane %v2934, 2
    %v2949 = vsel %vm907, %v2947, %v2948
    %v2950 = vrot.slane %v2935, 2
    %v2951 = vsel %vm907, %v2948, %v2950
    %2952 = vrot.lane.b32.xlu0 %v2944, 124
    %v2953 = vpop.permute.xlu0 %2952
    %2954 = vrot.lane.b32.xlu0 %v2946, 124
    %v2955 = vpop.permute.xlu0 %2954
    %2956 = vrot.lane.b32.xlu0 %v2949, 124
    %v2957 = vpop.permute.xlu0 %2956
    %2958 = vrot.lane.b32.xlu0 %v2951, 124
    %v2959 = vpop.permute.xlu0 %2958
    %v2964 = vadd.f32 %v2925, %v2953
    %v2965 = vadd.f32 %v2926, %v2955
    %v2966 = vadd.f32 %v2927, %v2957
    %v2967 = vadd.f32 %v2928, %v2959
    %v2968 = vstv %s740
    %v2969 = vmul.f32 %v2968, %v703
    %v2970 = vmul.f32 %v2968, %v704
    %v2971 = vmul.f32 %v2968, %v705
    %v2972 = vmul.f32 %v2968, %v706
    %v2973 = vmul.f32 %v2968, %v707
    %v2974 = vmul.f32 %v2968, %v708
    %v2981 = vrot.slane %v2969, 3
    %v2982 = vrot.slane %v2970, 3
    %v2983 = vsel %vm970, %v2981, %v2982
    %v2984 = vrot.slane %v2971, 3
    %v2985 = vsel %vm970, %v2982, %v2984
    %v2986 = vrot.slane %v2972, 3
    %v2987 = vrot.slane %v2973, 3
    %v2988 = vsel %vm970, %v2986, %v2987
    %v2989 = vrot.slane %v2974, 3
    %v2990 = vsel %vm970, %v2987, %v2989
    %2991 = vrot.lane.b32.xlu0 %v2983, 124
    %v2992 = vpop.permute.xlu0 %2991
    %2993 = vrot.lane.b32.xlu0 %v2985, 124
    %v2994 = vpop.permute.xlu0 %2993
    %2995 = vrot.lane.b32.xlu0 %v2988, 124
    %v2996 = vpop.permute.xlu0 %2995
    %2997 = vrot.lane.b32.xlu0 %v2990, 124
    %v2998 = vpop.permute.xlu0 %2997
    %v3003 = vadd.f32 %v2964, %v2992
    %v3004 = vadd.f32 %v2965, %v2994
    %v3005 = vadd.f32 %v2966, %v2996
    %v3006 = vadd.f32 %v2967, %v2998
    %v3007 = vstv %s789
    %v3008 = vmul.f32 %v3007, %v709
    %v3009 = vmul.f32 %v3007, %v710
    %v3010 = vmul.f32 %v3007, %v711
    %v3011 = vmul.f32 %v3007, %v712
    %v3012 = vmul.f32 %v3007, %v713
    %v3013 = vmul.f32 %v3007, %v714
    %v3020 = vrot.slane %v3008, 3
    %v3021 = vrot.slane %v3009, 3
    %v3022 = vsel %vm970, %v3020, %v3021
    %v3023 = vrot.slane %v3010, 3
    %v3024 = vsel %vm970, %v3021, %v3023
    %v3025 = vrot.slane %v3011, 3
    %v3026 = vrot.slane %v3012, 3
    %v3027 = vsel %vm970, %v3025, %v3026
    %v3028 = vrot.slane %v3013, 3
    %v3029 = vsel %vm970, %v3026, %v3028
    %3030 = vrot.lane.b32.xlu0 %v3022, 124
    %v3031 = vpop.permute.xlu0 %3030
    %3032 = vrot.lane.b32.xlu0 %v3024, 124
    %v3033 = vpop.permute.xlu0 %3032
    %3034 = vrot.lane.b32.xlu0 %v3027, 124
    %v3035 = vpop.permute.xlu0 %3034
    %3036 = vrot.lane.b32.xlu0 %v3029, 124
    %v3037 = vpop.permute.xlu0 %3036
    %v3042 = vadd.f32 %v3003, %v3031
    %v3043 = vadd.f32 %v3004, %v3033
    %v3044 = vadd.f32 %v3005, %v3035
    %v3045 = vadd.f32 %v3006, %v3037
    %v3046 = vstv %s747
    %v3047 = vmul.f32 %v3046, %v703
    %v3048 = vmul.f32 %v3046, %v704
    %v3049 = vmul.f32 %v3046, %v705
    %v3050 = vmul.f32 %v3046, %v706
    %v3051 = vmul.f32 %v3046, %v707
    %v3052 = vmul.f32 %v3046, %v708
    %v3059 = vrot.slane %v3047, 4
    %v3060 = vrot.slane %v3048, 4
    %v3061 = vsel %vm71, %v3059, %v3060
    %v3062 = vrot.slane %v3049, 4
    %v3063 = vsel %vm71, %v3060, %v3062
    %v3064 = vrot.slane %v3050, 4
    %v3065 = vrot.slane %v3051, 4
    %v3066 = vsel %vm71, %v3064, %v3065
    %v3067 = vrot.slane %v3052, 4
    %v3068 = vsel %vm71, %v3065, %v3067
    %3069 = vrot.lane.b32.xlu0 %v3061, 124
    %v3070 = vpop.permute.xlu0 %3069
    %3071 = vrot.lane.b32.xlu0 %v3063, 124
    %v3072 = vpop.permute.xlu0 %3071
    %3073 = vrot.lane.b32.xlu0 %v3066, 124
    %v3074 = vpop.permute.xlu0 %3073
    %3075 = vrot.lane.b32.xlu0 %v3068, 124
    %v3076 = vpop.permute.xlu0 %3075
    %v3081 = vadd.f32 %v3042, %v3070
    %v3082 = vadd.f32 %v3043, %v3072
    %v3083 = vadd.f32 %v3044, %v3074
    %v3084 = vadd.f32 %v3045, %v3076
    %v3085 = vstv %s796
    %v3086 = vmul.f32 %v3085, %v709
    %v3087 = vmul.f32 %v3085, %v710
    %v3088 = vmul.f32 %v3085, %v711
    %v3089 = vmul.f32 %v3085, %v712
    %v3090 = vmul.f32 %v3085, %v713
    %v3091 = vmul.f32 %v3085, %v714
    %v3098 = vrot.slane %v3086, 4
    %v3099 = vrot.slane %v3087, 4
    %v3100 = vsel %vm71, %v3098, %v3099
    %v3101 = vrot.slane %v3088, 4
    %v3102 = vsel %vm71, %v3099, %v3101
    %v3103 = vrot.slane %v3089, 4
    %v3104 = vrot.slane %v3090, 4
    %v3105 = vsel %vm71, %v3103, %v3104
    %v3106 = vrot.slane %v3091, 4
    %v3107 = vsel %vm71, %v3104, %v3106
    %3108 = vrot.lane.b32.xlu0 %v3100, 124
    %v3109 = vpop.permute.xlu0 %3108
    %3110 = vrot.lane.b32.xlu0 %v3102, 124
    %v3111 = vpop.permute.xlu0 %3110
    %3112 = vrot.lane.b32.xlu0 %v3105, 124
    %v3113 = vpop.permute.xlu0 %3112
    %3114 = vrot.lane.b32.xlu0 %v3107, 124
    %v3115 = vpop.permute.xlu0 %3114
    %v3120 = vadd.f32 %v3081, %v3109
    %v3121 = vadd.f32 %v3082, %v3111
    %v3122 = vadd.f32 %v3083, %v3113
    %v3123 = vadd.f32 %v3084, %v3115
    %v3124 = vstv %s754
    %v3125 = vmul.f32 %v3124, %v703
    %v3126 = vmul.f32 %v3124, %v704
    %v3127 = vmul.f32 %v3124, %v705
    %v3128 = vmul.f32 %v3124, %v706
    %v3129 = vmul.f32 %v3124, %v707
    %v3130 = vmul.f32 %v3124, %v708
    %v3137 = vrot.slane %v3125, 5
    %v3138 = vrot.slane %v3126, 5
    %v3139 = vsel %vm1095, %v3137, %v3138
    %v3140 = vrot.slane %v3127, 5
    %v3141 = vsel %vm1095, %v3138, %v3140
    %v3142 = vrot.slane %v3128, 5
    %v3143 = vrot.slane %v3129, 5
    %v3144 = vsel %vm1095, %v3142, %v3143
    %v3145 = vrot.slane %v3130, 5
    %v3146 = vsel %vm1095, %v3143, %v3145
    %3147 = vrot.lane.b32.xlu0 %v3139, 124
    %v3148 = vpop.permute.xlu0 %3147
    %3149 = vrot.lane.b32.xlu0 %v3141, 124
    %v3150 = vpop.permute.xlu0 %3149
    %3151 = vrot.lane.b32.xlu0 %v3144, 124
    %v3152 = vpop.permute.xlu0 %3151
    %3153 = vrot.lane.b32.xlu0 %v3146, 124
    %v3154 = vpop.permute.xlu0 %3153
    %v3159 = vadd.f32 %v3120, %v3148
    %v3160 = vadd.f32 %v3121, %v3150
    %v3161 = vadd.f32 %v3122, %v3152
    %v3162 = vadd.f32 %v3123, %v3154
    %v3163 = vstv %s803
    %v3164 = vmul.f32 %v3163, %v709
    %v3165 = vmul.f32 %v3163, %v710
    %v3166 = vmul.f32 %v3163, %v711
    %v3167 = vmul.f32 %v3163, %v712
    %v3168 = vmul.f32 %v3163, %v713
    %v3169 = vmul.f32 %v3163, %v714
    %v3176 = vrot.slane %v3164, 5
    %v3177 = vrot.slane %v3165, 5
    %v3178 = vsel %vm1095, %v3176, %v3177
    %v3179 = vrot.slane %v3166, 5
    %v3180 = vsel %vm1095, %v3177, %v3179
    %v3181 = vrot.slane %v3167, 5
    %v3182 = vrot.slane %v3168, 5
    %v3183 = vsel %vm1095, %v3181, %v3182
    %v3184 = vrot.slane %v3169, 5
    %v3185 = vsel %vm1095, %v3182, %v3184
    %3186 = vrot.lane.b32.xlu0 %v3178, 124
    %v3187 = vpop.permute.xlu0 %3186
    %3188 = vrot.lane.b32.xlu0 %v3180, 124
    %v3189 = vpop.permute.xlu0 %3188
    %3190 = vrot.lane.b32.xlu0 %v3183, 124
    %v3191 = vpop.permute.xlu0 %3190
    %3192 = vrot.lane.b32.xlu0 %v3185, 124
    %v3193 = vpop.permute.xlu0 %3192
    %v3198 = vadd.f32 %v3159, %v3187
    %v3199 = vadd.f32 %v3160, %v3189
    %v3200 = vadd.f32 %v3161, %v3191
    %v3201 = vadd.f32 %v3162, %v3193
    %v3202 = vstv %s761
    %v3203 = vmul.f32 %v3202, %v703
    %v3204 = vmul.f32 %v3202, %v704
    %v3205 = vmul.f32 %v3202, %v705
    %v3206 = vmul.f32 %v3202, %v706
    %v3207 = vmul.f32 %v3202, %v707
    %v3208 = vmul.f32 %v3202, %v708
    %v3215 = vrot.slane %v3203, 6
    %v3216 = vrot.slane %v3204, 6
    %v3217 = vsel %vm1158, %v3215, %v3216
    %v3218 = vrot.slane %v3205, 6
    %v3219 = vsel %vm1158, %v3216, %v3218
    %v3220 = vrot.slane %v3206, 6
    %v3221 = vrot.slane %v3207, 6
    %v3222 = vsel %vm1158, %v3220, %v3221
    %v3223 = vrot.slane %v3208, 6
    %v3224 = vsel %vm1158, %v3221, %v3223
    %3225 = vrot.lane.b32.xlu0 %v3217, 124
    %v3226 = vpop.permute.xlu0 %3225
    %3227 = vrot.lane.b32.xlu0 %v3219, 124
    %v3228 = vpop.permute.xlu0 %3227
    %3229 = vrot.lane.b32.xlu0 %v3222, 124
    %v3230 = vpop.permute.xlu0 %3229
    %3231 = vrot.lane.b32.xlu0 %v3224, 124
    %v3232 = vpop.permute.xlu0 %3231
    %v3237 = vadd.f32 %v3198, %v3226
    %v3238 = vadd.f32 %v3199, %v3228
    %v3239 = vadd.f32 %v3200, %v3230
    %v3240 = vadd.f32 %v3201, %v3232
    %v3241 = vstv %s810
    %v3242 = vmul.f32 %v3241, %v709
    %v3243 = vmul.f32 %v3241, %v710
    %v3244 = vmul.f32 %v3241, %v711
    %v3245 = vmul.f32 %v3241, %v712
    %v3246 = vmul.f32 %v3241, %v713
    %v3247 = vmul.f32 %v3241, %v714
    %v3254 = vrot.slane %v3242, 6
    %v3255 = vrot.slane %v3243, 6
    %v3256 = vsel %vm1158, %v3254, %v3255
    %v3257 = vrot.slane %v3244, 6
    %v3258 = vsel %vm1158, %v3255, %v3257
    %v3259 = vrot.slane %v3245, 6
    %v3260 = vrot.slane %v3246, 6
    %v3261 = vsel %vm1158, %v3259, %v3260
    %v3262 = vrot.slane %v3247, 6
    %v3263 = vsel %vm1158, %v3260, %v3262
    %3264 = vrot.lane.b32.xlu0 %v3256, 124
    %v3265 = vpop.permute.xlu0 %3264
    %3266 = vrot.lane.b32.xlu0 %v3258, 124
    %v3267 = vpop.permute.xlu0 %3266
    %3268 = vrot.lane.b32.xlu0 %v3261, 124
    %v3269 = vpop.permute.xlu0 %3268
    %3270 = vrot.lane.b32.xlu0 %v3263, 124
    %v3271 = vpop.permute.xlu0 %3270
    %v3276 = vadd.f32 %v3237, %v3265
    %v3277 = vadd.f32 %v3238, %v3267
    %v3278 = vadd.f32 %v3239, %v3269
    %v3279 = vadd.f32 %v3240, %v3271
    %v3280 = vstv %s720
    %v3281 = vmul.f32 %v3280, %v703
    %v3282 = vmul.f32 %v3280, %v704
    %v3283 = vmul.f32 %v3280, %v706
    %v3284 = vmul.f32 %v3280, %v707
    %3289 = vrot.lane.b32.xlu0 %v3281, 123
    %v3290 = vpop.permute.xlu0 %3289
    %3291 = vrot.lane.b32.xlu0 %v3282, 123
    %v3292 = vpop.permute.xlu0 %3291
    %3293 = vrot.lane.b32.xlu0 %v3283, 123
    %v3294 = vpop.permute.xlu0 %3293
    %3295 = vrot.lane.b32.xlu0 %v3284, 123
    %v3296 = vpop.permute.xlu0 %3295
    %v3301 = vadd.f32 %v3276, %v3290
    %v3302 = vadd.f32 %v3277, %v3292
    %v3303 = vadd.f32 %v3278, %v3294
    %v3304 = vadd.f32 %v3279, %v3296
    %v3305 = vstv %s769
    %v3306 = vmul.f32 %v3305, %v709
    %v3307 = vmul.f32 %v3305, %v710
    %v3308 = vmul.f32 %v3305, %v712
    %v3309 = vmul.f32 %v3305, %v713
    %3314 = vrot.lane.b32.xlu0 %v3306, 123
    %v3315 = vpop.permute.xlu0 %3314
    %3316 = vrot.lane.b32.xlu0 %v3307, 123
    %v3317 = vpop.permute.xlu0 %3316
    %3318 = vrot.lane.b32.xlu0 %v3308, 123
    %v3319 = vpop.permute.xlu0 %3318
    %3320 = vrot.lane.b32.xlu0 %v3309, 123
    %v3321 = vpop.permute.xlu0 %3320
    %v3326 = vadd.f32 %v3301, %v3315
    %v3327 = vadd.f32 %v3302, %v3317
    %v3328 = vadd.f32 %v3303, %v3319
    %v3329 = vadd.f32 %v3304, %v3321
    %v3330 = vstv %s727
    %v3331 = vmul.f32 %v3330, %v703
    %v3332 = vmul.f32 %v3330, %v704
    %v3333 = vmul.f32 %v3330, %v705
    %v3334 = vmul.f32 %v3330, %v706
    %v3335 = vmul.f32 %v3330, %v707
    %v3336 = vmul.f32 %v3330, %v708
    %v3343 = vrot.slane %v3331, 1
    %v3344 = vrot.slane %v3332, 1
    %v3345 = vsel %vm844, %v3343, %v3344
    %v3346 = vrot.slane %v3333, 1
    %v3347 = vsel %vm844, %v3344, %v3346
    %v3348 = vrot.slane %v3334, 1
    %v3349 = vrot.slane %v3335, 1
    %v3350 = vsel %vm844, %v3348, %v3349
    %v3351 = vrot.slane %v3336, 1
    %v3352 = vsel %vm844, %v3349, %v3351
    %3353 = vrot.lane.b32.xlu0 %v3345, 123
    %v3354 = vpop.permute.xlu0 %3353
    %3355 = vrot.lane.b32.xlu0 %v3347, 123
    %v3356 = vpop.permute.xlu0 %3355
    %3357 = vrot.lane.b32.xlu0 %v3350, 123
    %v3358 = vpop.permute.xlu0 %3357
    %3359 = vrot.lane.b32.xlu0 %v3352, 123
    %v3360 = vpop.permute.xlu0 %3359
    %v3365 = vadd.f32 %v3326, %v3354
    %v3366 = vadd.f32 %v3327, %v3356
    %v3367 = vadd.f32 %v3328, %v3358
    %v3368 = vadd.f32 %v3329, %v3360
    %v3369 = vstv %s776
    %v3370 = vmul.f32 %v3369, %v709
    %v3371 = vmul.f32 %v3369, %v710
    %v3372 = vmul.f32 %v3369, %v711
    %v3373 = vmul.f32 %v3369, %v712
    %v3374 = vmul.f32 %v3369, %v713
    %v3375 = vmul.f32 %v3369, %v714
    %v3382 = vrot.slane %v3370, 1
    %v3383 = vrot.slane %v3371, 1
    %v3384 = vsel %vm844, %v3382, %v3383
    %v3385 = vrot.slane %v3372, 1
    %v3386 = vsel %vm844, %v3383, %v3385
    %v3387 = vrot.slane %v3373, 1
    %v3388 = vrot.slane %v3374, 1
    %v3389 = vsel %vm844, %v3387, %v3388
    %v3390 = vrot.slane %v3375, 1
    %v3391 = vsel %vm844, %v3388, %v3390
    %3392 = vrot.lane.b32.xlu0 %v3384, 123
    %v3393 = vpop.permute.xlu0 %3392
    %3394 = vrot.lane.b32.xlu0 %v3386, 123
    %v3395 = vpop.permute.xlu0 %3394
    %3396 = vrot.lane.b32.xlu0 %v3389, 123
    %v3397 = vpop.permute.xlu0 %3396
    %3398 = vrot.lane.b32.xlu0 %v3391, 123
    %v3399 = vpop.permute.xlu0 %3398
    %v3404 = vadd.f32 %v3365, %v3393
    %v3405 = vadd.f32 %v3366, %v3395
    %v3406 = vadd.f32 %v3367, %v3397
    %v3407 = vadd.f32 %v3368, %v3399
    %v3408 = vstv %s734
    %v3409 = vmul.f32 %v3408, %v703
    %v3410 = vmul.f32 %v3408, %v704
    %v3411 = vmul.f32 %v3408, %v705
    %v3412 = vmul.f32 %v3408, %v706
    %v3413 = vmul.f32 %v3408, %v707
    %v3414 = vmul.f32 %v3408, %v708
    %v3421 = vrot.slane %v3409, 2
    %v3422 = vrot.slane %v3410, 2
    %v3423 = vsel %vm907, %v3421, %v3422
    %v3424 = vrot.slane %v3411, 2
    %v3425 = vsel %vm907, %v3422, %v3424
    %v3426 = vrot.slane %v3412, 2
    %v3427 = vrot.slane %v3413, 2
    %v3428 = vsel %vm907, %v3426, %v3427
    %v3429 = vrot.slane %v3414, 2
    %v3430 = vsel %vm907, %v3427, %v3429
    %3431 = vrot.lane.b32.xlu0 %v3423, 123
    %v3432 = vpop.permute.xlu0 %3431
    %3433 = vrot.lane.b32.xlu0 %v3425, 123
    %v3434 = vpop.permute.xlu0 %3433
    %3435 = vrot.lane.b32.xlu0 %v3428, 123
    %v3436 = vpop.permute.xlu0 %3435
    %3437 = vrot.lane.b32.xlu0 %v3430, 123
    %v3438 = vpop.permute.xlu0 %3437
    %v3443 = vadd.f32 %v3404, %v3432
    %v3444 = vadd.f32 %v3405, %v3434
    %v3445 = vadd.f32 %v3406, %v3436
    %v3446 = vadd.f32 %v3407, %v3438
    %v3447 = vstv %s783
    %v3448 = vmul.f32 %v3447, %v709
    %v3449 = vmul.f32 %v3447, %v710
    %v3450 = vmul.f32 %v3447, %v711
    %v3451 = vmul.f32 %v3447, %v712
    %v3452 = vmul.f32 %v3447, %v713
    %v3453 = vmul.f32 %v3447, %v714
    %v3460 = vrot.slane %v3448, 2
    %v3461 = vrot.slane %v3449, 2
    %v3462 = vsel %vm907, %v3460, %v3461
    %v3463 = vrot.slane %v3450, 2
    %v3464 = vsel %vm907, %v3461, %v3463
    %v3465 = vrot.slane %v3451, 2
    %v3466 = vrot.slane %v3452, 2
    %v3467 = vsel %vm907, %v3465, %v3466
    %v3468 = vrot.slane %v3453, 2
    %v3469 = vsel %vm907, %v3466, %v3468
    %3470 = vrot.lane.b32.xlu0 %v3462, 123
    %v3471 = vpop.permute.xlu0 %3470
    %3472 = vrot.lane.b32.xlu0 %v3464, 123
    %v3473 = vpop.permute.xlu0 %3472
    %3474 = vrot.lane.b32.xlu0 %v3467, 123
    %v3475 = vpop.permute.xlu0 %3474
    %3476 = vrot.lane.b32.xlu0 %v3469, 123
    %v3477 = vpop.permute.xlu0 %3476
    %v3482 = vadd.f32 %v3443, %v3471
    %v3483 = vadd.f32 %v3444, %v3473
    %v3484 = vadd.f32 %v3445, %v3475
    %v3485 = vadd.f32 %v3446, %v3477
    %v3486 = vstv %s741
    %v3487 = vmul.f32 %v3486, %v703
    %v3488 = vmul.f32 %v3486, %v704
    %v3489 = vmul.f32 %v3486, %v705
    %v3490 = vmul.f32 %v3486, %v706
    %v3491 = vmul.f32 %v3486, %v707
    %v3492 = vmul.f32 %v3486, %v708
    %v3499 = vrot.slane %v3487, 3
    %v3500 = vrot.slane %v3488, 3
    %v3501 = vsel %vm970, %v3499, %v3500
    %v3502 = vrot.slane %v3489, 3
    %v3503 = vsel %vm970, %v3500, %v3502
    %v3504 = vrot.slane %v3490, 3
    %v3505 = vrot.slane %v3491, 3
    %v3506 = vsel %vm970, %v3504, %v3505
    %v3507 = vrot.slane %v3492, 3
    %v3508 = vsel %vm970, %v3505, %v3507
    %3509 = vrot.lane.b32.xlu0 %v3501, 123
    %v3510 = vpop.permute.xlu0 %3509
    %3511 = vrot.lane.b32.xlu0 %v3503, 123
    %v3512 = vpop.permute.xlu0 %3511
    %3513 = vrot.lane.b32.xlu0 %v3506, 123
    %v3514 = vpop.permute.xlu0 %3513
    %3515 = vrot.lane.b32.xlu0 %v3508, 123
    %v3516 = vpop.permute.xlu0 %3515
    %v3521 = vadd.f32 %v3482, %v3510
    %v3522 = vadd.f32 %v3483, %v3512
    %v3523 = vadd.f32 %v3484, %v3514
    %v3524 = vadd.f32 %v3485, %v3516
    %v3525 = vstv %s790
    %v3526 = vmul.f32 %v3525, %v709
    %v3527 = vmul.f32 %v3525, %v710
    %v3528 = vmul.f32 %v3525, %v711
    %v3529 = vmul.f32 %v3525, %v712
    %v3530 = vmul.f32 %v3525, %v713
    %v3531 = vmul.f32 %v3525, %v714
    %v3538 = vrot.slane %v3526, 3
    %v3539 = vrot.slane %v3527, 3
    %v3540 = vsel %vm970, %v3538, %v3539
    %v3541 = vrot.slane %v3528, 3
    %v3542 = vsel %vm970, %v3539, %v3541
    %v3543 = vrot.slane %v3529, 3
    %v3544 = vrot.slane %v3530, 3
    %v3545 = vsel %vm970, %v3543, %v3544
    %v3546 = vrot.slane %v3531, 3
    %v3547 = vsel %vm970, %v3544, %v3546
    %3548 = vrot.lane.b32.xlu0 %v3540, 123
    %v3549 = vpop.permute.xlu0 %3548
    %3550 = vrot.lane.b32.xlu0 %v3542, 123
    %v3551 = vpop.permute.xlu0 %3550
    %3552 = vrot.lane.b32.xlu0 %v3545, 123
    %v3553 = vpop.permute.xlu0 %3552
    %3554 = vrot.lane.b32.xlu0 %v3547, 123
    %v3555 = vpop.permute.xlu0 %3554
    %v3560 = vadd.f32 %v3521, %v3549
    %v3561 = vadd.f32 %v3522, %v3551
    %v3562 = vadd.f32 %v3523, %v3553
    %v3563 = vadd.f32 %v3524, %v3555
    %v3564 = vstv %s748
    %v3565 = vmul.f32 %v3564, %v703
    %v3566 = vmul.f32 %v3564, %v704
    %v3567 = vmul.f32 %v3564, %v705
    %v3568 = vmul.f32 %v3564, %v706
    %v3569 = vmul.f32 %v3564, %v707
    %v3570 = vmul.f32 %v3564, %v708
    %v3577 = vrot.slane %v3565, 4
    %v3578 = vrot.slane %v3566, 4
    %v3579 = vsel %vm71, %v3577, %v3578
    %v3580 = vrot.slane %v3567, 4
    %v3581 = vsel %vm71, %v3578, %v3580
    %v3582 = vrot.slane %v3568, 4
    %v3583 = vrot.slane %v3569, 4
    %v3584 = vsel %vm71, %v3582, %v3583
    %v3585 = vrot.slane %v3570, 4
    %v3586 = vsel %vm71, %v3583, %v3585
    %3587 = vrot.lane.b32.xlu0 %v3579, 123
    %v3588 = vpop.permute.xlu0 %3587
    %3589 = vrot.lane.b32.xlu0 %v3581, 123
    %v3590 = vpop.permute.xlu0 %3589
    %3591 = vrot.lane.b32.xlu0 %v3584, 123
    %v3592 = vpop.permute.xlu0 %3591
    %3593 = vrot.lane.b32.xlu0 %v3586, 123
    %v3594 = vpop.permute.xlu0 %3593
    %v3599 = vadd.f32 %v3560, %v3588
    %v3600 = vadd.f32 %v3561, %v3590
    %v3601 = vadd.f32 %v3562, %v3592
    %v3602 = vadd.f32 %v3563, %v3594
    %v3603 = vstv %s797
    %v3604 = vmul.f32 %v3603, %v709
    %v3605 = vmul.f32 %v3603, %v710
    %v3606 = vmul.f32 %v3603, %v711
    %v3607 = vmul.f32 %v3603, %v712
    %v3608 = vmul.f32 %v3603, %v713
    %v3609 = vmul.f32 %v3603, %v714
    %v3616 = vrot.slane %v3604, 4
    %v3617 = vrot.slane %v3605, 4
    %v3618 = vsel %vm71, %v3616, %v3617
    %v3619 = vrot.slane %v3606, 4
    %v3620 = vsel %vm71, %v3617, %v3619
    %v3621 = vrot.slane %v3607, 4
    %v3622 = vrot.slane %v3608, 4
    %v3623 = vsel %vm71, %v3621, %v3622
    %v3624 = vrot.slane %v3609, 4
    %v3625 = vsel %vm71, %v3622, %v3624
    %3626 = vrot.lane.b32.xlu0 %v3618, 123
    %v3627 = vpop.permute.xlu0 %3626
    %3628 = vrot.lane.b32.xlu0 %v3620, 123
    %v3629 = vpop.permute.xlu0 %3628
    %3630 = vrot.lane.b32.xlu0 %v3623, 123
    %v3631 = vpop.permute.xlu0 %3630
    %3632 = vrot.lane.b32.xlu0 %v3625, 123
    %v3633 = vpop.permute.xlu0 %3632
    %v3638 = vadd.f32 %v3599, %v3627
    %v3639 = vadd.f32 %v3600, %v3629
    %v3640 = vadd.f32 %v3601, %v3631
    %v3641 = vadd.f32 %v3602, %v3633
    %v3642 = vstv %s755
    %v3643 = vmul.f32 %v3642, %v703
    %v3644 = vmul.f32 %v3642, %v704
    %v3645 = vmul.f32 %v3642, %v705
    %v3646 = vmul.f32 %v3642, %v706
    %v3647 = vmul.f32 %v3642, %v707
    %v3648 = vmul.f32 %v3642, %v708
    %v3655 = vrot.slane %v3643, 5
    %v3656 = vrot.slane %v3644, 5
    %v3657 = vsel %vm1095, %v3655, %v3656
    %v3658 = vrot.slane %v3645, 5
    %v3659 = vsel %vm1095, %v3656, %v3658
    %v3660 = vrot.slane %v3646, 5
    %v3661 = vrot.slane %v3647, 5
    %v3662 = vsel %vm1095, %v3660, %v3661
    %v3663 = vrot.slane %v3648, 5
    %v3664 = vsel %vm1095, %v3661, %v3663
    %3665 = vrot.lane.b32.xlu0 %v3657, 123
    %v3666 = vpop.permute.xlu0 %3665
    %3667 = vrot.lane.b32.xlu0 %v3659, 123
    %v3668 = vpop.permute.xlu0 %3667
    %3669 = vrot.lane.b32.xlu0 %v3662, 123
    %v3670 = vpop.permute.xlu0 %3669
    %3671 = vrot.lane.b32.xlu0 %v3664, 123
    %v3672 = vpop.permute.xlu0 %3671
    %v3677 = vadd.f32 %v3638, %v3666
    %v3678 = vadd.f32 %v3639, %v3668
    %v3679 = vadd.f32 %v3640, %v3670
    %v3680 = vadd.f32 %v3641, %v3672
    %v3681 = vstv %s804
    %v3682 = vmul.f32 %v3681, %v709
    %v3683 = vmul.f32 %v3681, %v710
    %v3684 = vmul.f32 %v3681, %v711
    %v3685 = vmul.f32 %v3681, %v712
    %v3686 = vmul.f32 %v3681, %v713
    %v3687 = vmul.f32 %v3681, %v714
    %v3694 = vrot.slane %v3682, 5
    %v3695 = vrot.slane %v3683, 5
    %v3696 = vsel %vm1095, %v3694, %v3695
    %v3697 = vrot.slane %v3684, 5
    %v3698 = vsel %vm1095, %v3695, %v3697
    %v3699 = vrot.slane %v3685, 5
    %v3700 = vrot.slane %v3686, 5
    %v3701 = vsel %vm1095, %v3699, %v3700
    %v3702 = vrot.slane %v3687, 5
    %v3703 = vsel %vm1095, %v3700, %v3702
    %3704 = vrot.lane.b32.xlu0 %v3696, 123
    %v3705 = vpop.permute.xlu0 %3704
    %3706 = vrot.lane.b32.xlu0 %v3698, 123
    %v3707 = vpop.permute.xlu0 %3706
    %3708 = vrot.lane.b32.xlu0 %v3701, 123
    %v3709 = vpop.permute.xlu0 %3708
    %3710 = vrot.lane.b32.xlu0 %v3703, 123
    %v3711 = vpop.permute.xlu0 %3710
    %v3716 = vadd.f32 %v3677, %v3705
    %v3717 = vadd.f32 %v3678, %v3707
    %v3718 = vadd.f32 %v3679, %v3709
    %v3719 = vadd.f32 %v3680, %v3711
    %v3720 = vstv %s762
    %v3721 = vmul.f32 %v3720, %v703
    %v3722 = vmul.f32 %v3720, %v704
    %v3723 = vmul.f32 %v3720, %v705
    %v3724 = vmul.f32 %v3720, %v706
    %v3725 = vmul.f32 %v3720, %v707
    %v3726 = vmul.f32 %v3720, %v708
    %v3733 = vrot.slane %v3721, 6
    %v3734 = vrot.slane %v3722, 6
    %v3735 = vsel %vm1158, %v3733, %v3734
    %v3736 = vrot.slane %v3723, 6
    %v3737 = vsel %vm1158, %v3734, %v3736
    %v3738 = vrot.slane %v3724, 6
    %v3739 = vrot.slane %v3725, 6
    %v3740 = vsel %vm1158, %v3738, %v3739
    %v3741 = vrot.slane %v3726, 6
    %v3742 = vsel %vm1158, %v3739, %v3741
    %3743 = vrot.lane.b32.xlu0 %v3735, 123
    %v3744 = vpop.permute.xlu0 %3743
    %3745 = vrot.lane.b32.xlu0 %v3737, 123
    %v3746 = vpop.permute.xlu0 %3745
    %3747 = vrot.lane.b32.xlu0 %v3740, 123
    %v3748 = vpop.permute.xlu0 %3747
    %3749 = vrot.lane.b32.xlu0 %v3742, 123
    %v3750 = vpop.permute.xlu0 %3749
    %v3755 = vadd.f32 %v3716, %v3744
    %v3756 = vadd.f32 %v3717, %v3746
    %v3757 = vadd.f32 %v3718, %v3748
    %v3758 = vadd.f32 %v3719, %v3750
    %v3759 = vstv %s811
    %v3760 = vmul.f32 %v3759, %v709
    %v3761 = vmul.f32 %v3759, %v710
    %v3762 = vmul.f32 %v3759, %v711
    %v3763 = vmul.f32 %v3759, %v712
    %v3764 = vmul.f32 %v3759, %v713
    %v3765 = vmul.f32 %v3759, %v714
    %v3772 = vrot.slane %v3760, 6
    %v3773 = vrot.slane %v3761, 6
    %v3774 = vsel %vm1158, %v3772, %v3773
    %v3775 = vrot.slane %v3762, 6
    %v3776 = vsel %vm1158, %v3773, %v3775
    %v3777 = vrot.slane %v3763, 6
    %v3778 = vrot.slane %v3764, 6
    %v3779 = vsel %vm1158, %v3777, %v3778
    %v3780 = vrot.slane %v3765, 6
    %v3781 = vsel %vm1158, %v3778, %v3780
    %3782 = vrot.lane.b32.xlu0 %v3774, 123
    %v3783 = vpop.permute.xlu0 %3782
    %3784 = vrot.lane.b32.xlu0 %v3776, 123
    %v3785 = vpop.permute.xlu0 %3784
    %3786 = vrot.lane.b32.xlu0 %v3779, 123
    %v3787 = vpop.permute.xlu0 %3786
    %3788 = vrot.lane.b32.xlu0 %v3781, 123
    %v3789 = vpop.permute.xlu0 %3788
    %v3794 = vadd.f32 %v3755, %v3783
    %v3795 = vadd.f32 %v3756, %v3785
    %v3796 = vadd.f32 %v3757, %v3787
    %v3797 = vadd.f32 %v3758, %v3789
    %v3798 = vstv %s721
    %v3799 = vmul.f32 %v3798, %v703
    %v3800 = vmul.f32 %v3798, %v704
    %v3801 = vmul.f32 %v3798, %v706
    %v3802 = vmul.f32 %v3798, %v707
    %3807 = vrot.lane.b32.xlu0 %v3799, 122
    %v3808 = vpop.permute.xlu0 %3807
    %3809 = vrot.lane.b32.xlu0 %v3800, 122
    %v3810 = vpop.permute.xlu0 %3809
    %3811 = vrot.lane.b32.xlu0 %v3801, 122
    %v3812 = vpop.permute.xlu0 %3811
    %3813 = vrot.lane.b32.xlu0 %v3802, 122
    %v3814 = vpop.permute.xlu0 %3813
    %v3819 = vadd.f32 %v3794, %v3808
    %v3820 = vadd.f32 %v3795, %v3810
    %v3821 = vadd.f32 %v3796, %v3812
    %v3822 = vadd.f32 %v3797, %v3814
    %v3823 = vstv %s770
    %v3824 = vmul.f32 %v3823, %v709
    %v3825 = vmul.f32 %v3823, %v710
    %v3826 = vmul.f32 %v3823, %v712
    %v3827 = vmul.f32 %v3823, %v713
    %3832 = vrot.lane.b32.xlu0 %v3824, 122
    %v3833 = vpop.permute.xlu0 %3832
    %3834 = vrot.lane.b32.xlu0 %v3825, 122
    %v3835 = vpop.permute.xlu0 %3834
    %3836 = vrot.lane.b32.xlu0 %v3826, 122
    %v3837 = vpop.permute.xlu0 %3836
    %3838 = vrot.lane.b32.xlu0 %v3827, 122
    %v3839 = vpop.permute.xlu0 %3838
    %v3844 = vadd.f32 %v3819, %v3833
    %v3845 = vadd.f32 %v3820, %v3835
    %v3846 = vadd.f32 %v3821, %v3837
    %v3847 = vadd.f32 %v3822, %v3839
    %v3848 = vstv %s728
    %v3849 = vmul.f32 %v3848, %v703
    %v3850 = vmul.f32 %v3848, %v704
    %v3851 = vmul.f32 %v3848, %v705
    %v3852 = vmul.f32 %v3848, %v706
    %v3853 = vmul.f32 %v3848, %v707
    %v3854 = vmul.f32 %v3848, %v708
    %v3861 = vrot.slane %v3849, 1
    %v3862 = vrot.slane %v3850, 1
    %v3863 = vsel %vm844, %v3861, %v3862
    %v3864 = vrot.slane %v3851, 1
    %v3865 = vsel %vm844, %v3862, %v3864
    %v3866 = vrot.slane %v3852, 1
    %v3867 = vrot.slane %v3853, 1
    %v3868 = vsel %vm844, %v3866, %v3867
    %v3869 = vrot.slane %v3854, 1
    %v3870 = vsel %vm844, %v3867, %v3869
    %3871 = vrot.lane.b32.xlu0 %v3863, 122
    %v3872 = vpop.permute.xlu0 %3871
    %3873 = vrot.lane.b32.xlu0 %v3865, 122
    %v3874 = vpop.permute.xlu0 %3873
    %3875 = vrot.lane.b32.xlu0 %v3868, 122
    %v3876 = vpop.permute.xlu0 %3875
    %3877 = vrot.lane.b32.xlu0 %v3870, 122
    %v3878 = vpop.permute.xlu0 %3877
    %v3883 = vadd.f32 %v3844, %v3872
    %v3884 = vadd.f32 %v3845, %v3874
    %v3885 = vadd.f32 %v3846, %v3876
    %v3886 = vadd.f32 %v3847, %v3878
    %v3887 = vstv %s777
    %v3888 = vmul.f32 %v3887, %v709
    %v3889 = vmul.f32 %v3887, %v710
    %v3890 = vmul.f32 %v3887, %v711
    %v3891 = vmul.f32 %v3887, %v712
    %v3892 = vmul.f32 %v3887, %v713
    %v3893 = vmul.f32 %v3887, %v714
    %v3900 = vrot.slane %v3888, 1
    %v3901 = vrot.slane %v3889, 1
    %v3902 = vsel %vm844, %v3900, %v3901
    %v3903 = vrot.slane %v3890, 1
    %v3904 = vsel %vm844, %v3901, %v3903
    %v3905 = vrot.slane %v3891, 1
    %v3906 = vrot.slane %v3892, 1
    %v3907 = vsel %vm844, %v3905, %v3906
    %v3908 = vrot.slane %v3893, 1
    %v3909 = vsel %vm844, %v3906, %v3908
    %3910 = vrot.lane.b32.xlu0 %v3902, 122
    %v3911 = vpop.permute.xlu0 %3910
    %3912 = vrot.lane.b32.xlu0 %v3904, 122
    %v3913 = vpop.permute.xlu0 %3912
    %3914 = vrot.lane.b32.xlu0 %v3907, 122
    %v3915 = vpop.permute.xlu0 %3914
    %3916 = vrot.lane.b32.xlu0 %v3909, 122
    %v3917 = vpop.permute.xlu0 %3916
    %v3922 = vadd.f32 %v3883, %v3911
    %v3923 = vadd.f32 %v3884, %v3913
    %v3924 = vadd.f32 %v3885, %v3915
    %v3925 = vadd.f32 %v3886, %v3917
    %v3926 = vstv %s735
    %v3927 = vmul.f32 %v3926, %v703
    %v3928 = vmul.f32 %v3926, %v704
    %v3929 = vmul.f32 %v3926, %v705
    %v3930 = vmul.f32 %v3926, %v706
    %v3931 = vmul.f32 %v3926, %v707
    %v3932 = vmul.f32 %v3926, %v708
    %v3939 = vrot.slane %v3927, 2
    %v3940 = vrot.slane %v3928, 2
    %v3941 = vsel %vm907, %v3939, %v3940
    %v3942 = vrot.slane %v3929, 2
    %v3943 = vsel %vm907, %v3940, %v3942
    %v3944 = vrot.slane %v3930, 2
    %v3945 = vrot.slane %v3931, 2
    %v3946 = vsel %vm907, %v3944, %v3945
    %v3947 = vrot.slane %v3932, 2
    %v3948 = vsel %vm907, %v3945, %v3947
    %3949 = vrot.lane.b32.xlu0 %v3941, 122
    %v3950 = vpop.permute.xlu0 %3949
    %3951 = vrot.lane.b32.xlu0 %v3943, 122
    %v3952 = vpop.permute.xlu0 %3951
    %3953 = vrot.lane.b32.xlu0 %v3946, 122
    %v3954 = vpop.permute.xlu0 %3953
    %3955 = vrot.lane.b32.xlu0 %v3948, 122
    %v3956 = vpop.permute.xlu0 %3955
    %v3961 = vadd.f32 %v3922, %v3950
    %v3962 = vadd.f32 %v3923, %v3952
    %v3963 = vadd.f32 %v3924, %v3954
    %v3964 = vadd.f32 %v3925, %v3956
    %v3965 = vstv %s784
    %v3966 = vmul.f32 %v3965, %v709
    %v3967 = vmul.f32 %v3965, %v710
    %v3968 = vmul.f32 %v3965, %v711
    %v3969 = vmul.f32 %v3965, %v712
    %v3970 = vmul.f32 %v3965, %v713
    %v3971 = vmul.f32 %v3965, %v714
    %v3978 = vrot.slane %v3966, 2
    %v3979 = vrot.slane %v3967, 2
    %v3980 = vsel %vm907, %v3978, %v3979
    %v3981 = vrot.slane %v3968, 2
    %v3982 = vsel %vm907, %v3979, %v3981
    %v3983 = vrot.slane %v3969, 2
    %v3984 = vrot.slane %v3970, 2
    %v3985 = vsel %vm907, %v3983, %v3984
    %v3986 = vrot.slane %v3971, 2
    %v3987 = vsel %vm907, %v3984, %v3986
    %3988 = vrot.lane.b32.xlu0 %v3980, 122
    %v3989 = vpop.permute.xlu0 %3988
    %3990 = vrot.lane.b32.xlu0 %v3982, 122
    %v3991 = vpop.permute.xlu0 %3990
    %3992 = vrot.lane.b32.xlu0 %v3985, 122
    %v3993 = vpop.permute.xlu0 %3992
    %3994 = vrot.lane.b32.xlu0 %v3987, 122
    %v3995 = vpop.permute.xlu0 %3994
    %v4000 = vadd.f32 %v3961, %v3989
    %v4001 = vadd.f32 %v3962, %v3991
    %v4002 = vadd.f32 %v3963, %v3993
    %v4003 = vadd.f32 %v3964, %v3995
    %v4004 = vstv %s742
    %v4005 = vmul.f32 %v4004, %v703
    %v4006 = vmul.f32 %v4004, %v704
    %v4007 = vmul.f32 %v4004, %v705
    %v4008 = vmul.f32 %v4004, %v706
    %v4009 = vmul.f32 %v4004, %v707
    %v4010 = vmul.f32 %v4004, %v708
    %v4017 = vrot.slane %v4005, 3
    %v4018 = vrot.slane %v4006, 3
    %v4019 = vsel %vm970, %v4017, %v4018
    %v4020 = vrot.slane %v4007, 3
    %v4021 = vsel %vm970, %v4018, %v4020
    %v4022 = vrot.slane %v4008, 3
    %v4023 = vrot.slane %v4009, 3
    %v4024 = vsel %vm970, %v4022, %v4023
    %v4025 = vrot.slane %v4010, 3
    %v4026 = vsel %vm970, %v4023, %v4025
    %4027 = vrot.lane.b32.xlu0 %v4019, 122
    %v4028 = vpop.permute.xlu0 %4027
    %4029 = vrot.lane.b32.xlu0 %v4021, 122
    %v4030 = vpop.permute.xlu0 %4029
    %4031 = vrot.lane.b32.xlu0 %v4024, 122
    %v4032 = vpop.permute.xlu0 %4031
    %4033 = vrot.lane.b32.xlu0 %v4026, 122
    %v4034 = vpop.permute.xlu0 %4033
    %v4039 = vadd.f32 %v4000, %v4028
    %v4040 = vadd.f32 %v4001, %v4030
    %v4041 = vadd.f32 %v4002, %v4032
    %v4042 = vadd.f32 %v4003, %v4034
    %v4043 = vstv %s791
    %v4044 = vmul.f32 %v4043, %v709
    %v4045 = vmul.f32 %v4043, %v710
    %v4046 = vmul.f32 %v4043, %v711
    %v4047 = vmul.f32 %v4043, %v712
    %v4048 = vmul.f32 %v4043, %v713
    %v4049 = vmul.f32 %v4043, %v714
    %v4056 = vrot.slane %v4044, 3
    %v4057 = vrot.slane %v4045, 3
    %v4058 = vsel %vm970, %v4056, %v4057
    %v4059 = vrot.slane %v4046, 3
    %v4060 = vsel %vm970, %v4057, %v4059
    %v4061 = vrot.slane %v4047, 3
    %v4062 = vrot.slane %v4048, 3
    %v4063 = vsel %vm970, %v4061, %v4062
    %v4064 = vrot.slane %v4049, 3
    %v4065 = vsel %vm970, %v4062, %v4064
    %4066 = vrot.lane.b32.xlu0 %v4058, 122
    %v4067 = vpop.permute.xlu0 %4066
    %4068 = vrot.lane.b32.xlu0 %v4060, 122
    %v4069 = vpop.permute.xlu0 %4068
    %4070 = vrot.lane.b32.xlu0 %v4063, 122
    %v4071 = vpop.permute.xlu0 %4070
    %4072 = vrot.lane.b32.xlu0 %v4065, 122
    %v4073 = vpop.permute.xlu0 %4072
    %v4078 = vadd.f32 %v4039, %v4067
    %v4079 = vadd.f32 %v4040, %v4069
    %v4080 = vadd.f32 %v4041, %v4071
    %v4081 = vadd.f32 %v4042, %v4073
    %v4082 = vstv %s749
    %v4083 = vmul.f32 %v4082, %v703
    %v4084 = vmul.f32 %v4082, %v704
    %v4085 = vmul.f32 %v4082, %v705
    %v4086 = vmul.f32 %v4082, %v706
    %v4087 = vmul.f32 %v4082, %v707
    %v4088 = vmul.f32 %v4082, %v708
    %v4095 = vrot.slane %v4083, 4
    %v4096 = vrot.slane %v4084, 4
    %v4097 = vsel %vm71, %v4095, %v4096
    %v4098 = vrot.slane %v4085, 4
    %v4099 = vsel %vm71, %v4096, %v4098
    %v4100 = vrot.slane %v4086, 4
    %v4101 = vrot.slane %v4087, 4
    %v4102 = vsel %vm71, %v4100, %v4101
    %v4103 = vrot.slane %v4088, 4
    %v4104 = vsel %vm71, %v4101, %v4103
    %4105 = vrot.lane.b32.xlu0 %v4097, 122
    %v4106 = vpop.permute.xlu0 %4105
    %4107 = vrot.lane.b32.xlu0 %v4099, 122
    %v4108 = vpop.permute.xlu0 %4107
    %4109 = vrot.lane.b32.xlu0 %v4102, 122
    %v4110 = vpop.permute.xlu0 %4109
    %4111 = vrot.lane.b32.xlu0 %v4104, 122
    %v4112 = vpop.permute.xlu0 %4111
    %v4117 = vadd.f32 %v4078, %v4106
    %v4118 = vadd.f32 %v4079, %v4108
    %v4119 = vadd.f32 %v4080, %v4110
    %v4120 = vadd.f32 %v4081, %v4112
    %v4121 = vstv %s798
    %v4122 = vmul.f32 %v4121, %v709
    %v4123 = vmul.f32 %v4121, %v710
    %v4124 = vmul.f32 %v4121, %v711
    %v4125 = vmul.f32 %v4121, %v712
    %v4126 = vmul.f32 %v4121, %v713
    %v4127 = vmul.f32 %v4121, %v714
    %v4134 = vrot.slane %v4122, 4
    %v4135 = vrot.slane %v4123, 4
    %v4136 = vsel %vm71, %v4134, %v4135
    %v4137 = vrot.slane %v4124, 4
    %v4138 = vsel %vm71, %v4135, %v4137
    %v4139 = vrot.slane %v4125, 4
    %v4140 = vrot.slane %v4126, 4
    %v4141 = vsel %vm71, %v4139, %v4140
    %v4142 = vrot.slane %v4127, 4
    %v4143 = vsel %vm71, %v4140, %v4142
    %4144 = vrot.lane.b32.xlu0 %v4136, 122
    %v4145 = vpop.permute.xlu0 %4144
    %4146 = vrot.lane.b32.xlu0 %v4138, 122
    %v4147 = vpop.permute.xlu0 %4146
    %4148 = vrot.lane.b32.xlu0 %v4141, 122
    %v4149 = vpop.permute.xlu0 %4148
    %4150 = vrot.lane.b32.xlu0 %v4143, 122
    %v4151 = vpop.permute.xlu0 %4150
    %v4156 = vadd.f32 %v4117, %v4145
    %v4157 = vadd.f32 %v4118, %v4147
    %v4158 = vadd.f32 %v4119, %v4149
    %v4159 = vadd.f32 %v4120, %v4151
    %v4160 = vstv %s756
    %v4161 = vmul.f32 %v4160, %v703
    %v4162 = vmul.f32 %v4160, %v704
    %v4163 = vmul.f32 %v4160, %v705
    %v4164 = vmul.f32 %v4160, %v706
    %v4165 = vmul.f32 %v4160, %v707
    %v4166 = vmul.f32 %v4160, %v708
    %v4173 = vrot.slane %v4161, 5
    %v4174 = vrot.slane %v4162, 5
    %v4175 = vsel %vm1095, %v4173, %v4174
    %v4176 = vrot.slane %v4163, 5
    %v4177 = vsel %vm1095, %v4174, %v4176
    %v4178 = vrot.slane %v4164, 5
    %v4179 = vrot.slane %v4165, 5
    %v4180 = vsel %vm1095, %v4178, %v4179
    %v4181 = vrot.slane %v4166, 5
    %v4182 = vsel %vm1095, %v4179, %v4181
    %4183 = vrot.lane.b32.xlu0 %v4175, 122
    %v4184 = vpop.permute.xlu0 %4183
    %4185 = vrot.lane.b32.xlu0 %v4177, 122
    %v4186 = vpop.permute.xlu0 %4185
    %4187 = vrot.lane.b32.xlu0 %v4180, 122
    %v4188 = vpop.permute.xlu0 %4187
    %4189 = vrot.lane.b32.xlu0 %v4182, 122
    %v4190 = vpop.permute.xlu0 %4189
    %v4195 = vadd.f32 %v4156, %v4184
    %v4196 = vadd.f32 %v4157, %v4186
    %v4197 = vadd.f32 %v4158, %v4188
    %v4198 = vadd.f32 %v4159, %v4190
    %v4199 = vstv %s805
    %v4200 = vmul.f32 %v4199, %v709
    %v4201 = vmul.f32 %v4199, %v710
    %v4202 = vmul.f32 %v4199, %v711
    %v4203 = vmul.f32 %v4199, %v712
    %v4204 = vmul.f32 %v4199, %v713
    %v4205 = vmul.f32 %v4199, %v714
    %v4212 = vrot.slane %v4200, 5
    %v4213 = vrot.slane %v4201, 5
    %v4214 = vsel %vm1095, %v4212, %v4213
    %v4215 = vrot.slane %v4202, 5
    %v4216 = vsel %vm1095, %v4213, %v4215
    %v4217 = vrot.slane %v4203, 5
    %v4218 = vrot.slane %v4204, 5
    %v4219 = vsel %vm1095, %v4217, %v4218
    %v4220 = vrot.slane %v4205, 5
    %v4221 = vsel %vm1095, %v4218, %v4220
    %4222 = vrot.lane.b32.xlu0 %v4214, 122
    %v4223 = vpop.permute.xlu0 %4222
    %4224 = vrot.lane.b32.xlu0 %v4216, 122
    %v4225 = vpop.permute.xlu0 %4224
    %4226 = vrot.lane.b32.xlu0 %v4219, 122
    %v4227 = vpop.permute.xlu0 %4226
    %4228 = vrot.lane.b32.xlu0 %v4221, 122
    %v4229 = vpop.permute.xlu0 %4228
    %v4234 = vadd.f32 %v4195, %v4223
    %v4235 = vadd.f32 %v4196, %v4225
    %v4236 = vadd.f32 %v4197, %v4227
    %v4237 = vadd.f32 %v4198, %v4229
    %v4238 = vstv %s763
    %v4239 = vmul.f32 %v4238, %v703
    %v4240 = vmul.f32 %v4238, %v704
    %v4241 = vmul.f32 %v4238, %v705
    %v4242 = vmul.f32 %v4238, %v706
    %v4243 = vmul.f32 %v4238, %v707
    %v4244 = vmul.f32 %v4238, %v708
    %v4251 = vrot.slane %v4239, 6
    %v4252 = vrot.slane %v4240, 6
    %v4253 = vsel %vm1158, %v4251, %v4252
    %v4254 = vrot.slane %v4241, 6
    %v4255 = vsel %vm1158, %v4252, %v4254
    %v4256 = vrot.slane %v4242, 6
    %v4257 = vrot.slane %v4243, 6
    %v4258 = vsel %vm1158, %v4256, %v4257
    %v4259 = vrot.slane %v4244, 6
    %v4260 = vsel %vm1158, %v4257, %v4259
    %4261 = vrot.lane.b32.xlu0 %v4253, 122
    %v4262 = vpop.permute.xlu0 %4261
    %4263 = vrot.lane.b32.xlu0 %v4255, 122
    %v4264 = vpop.permute.xlu0 %4263
    %4265 = vrot.lane.b32.xlu0 %v4258, 122
    %v4266 = vpop.permute.xlu0 %4265
    %4267 = vrot.lane.b32.xlu0 %v4260, 122
    %v4268 = vpop.permute.xlu0 %4267
    %v4273 = vadd.f32 %v4234, %v4262
    %v4274 = vadd.f32 %v4235, %v4264
    %v4275 = vadd.f32 %v4236, %v4266
    %v4276 = vadd.f32 %v4237, %v4268
    %v4277 = vstv %s812
    %v4278 = vmul.f32 %v4277, %v709
    %v4279 = vmul.f32 %v4277, %v710
    %v4280 = vmul.f32 %v4277, %v711
    %v4281 = vmul.f32 %v4277, %v712
    %v4282 = vmul.f32 %v4277, %v713
    %v4283 = vmul.f32 %v4277, %v714
    %v4290 = vrot.slane %v4278, 6
    %v4291 = vrot.slane %v4279, 6
    %v4292 = vsel %vm1158, %v4290, %v4291
    %v4293 = vrot.slane %v4280, 6
    %v4294 = vsel %vm1158, %v4291, %v4293
    %v4295 = vrot.slane %v4281, 6
    %v4296 = vrot.slane %v4282, 6
    %v4297 = vsel %vm1158, %v4295, %v4296
    %v4298 = vrot.slane %v4283, 6
    %v4299 = vsel %vm1158, %v4296, %v4298
    %4300 = vrot.lane.b32.xlu0 %v4292, 122
    %v4301 = vpop.permute.xlu0 %4300
    %4302 = vrot.lane.b32.xlu0 %v4294, 122
    %v4303 = vpop.permute.xlu0 %4302
    %4304 = vrot.lane.b32.xlu0 %v4297, 122
    %v4305 = vpop.permute.xlu0 %4304
    %4306 = vrot.lane.b32.xlu0 %v4299, 122
    %v4307 = vpop.permute.xlu0 %4306
    %v4312 = vadd.f32 %v4273, %v4301
    %v4313 = vadd.f32 %v4274, %v4303
    %v4314 = vadd.f32 %v4275, %v4305
    %v4315 = vadd.f32 %v4276, %v4307
    %v4316 = vxor.u32 %v4312, 2147483648
    %v4317 = vxor.u32 %v4313, 2147483648
    %v4318 = vxor.u32 %v4314, 2147483648
    %v4319 = vxor.u32 %v4315, 2147483648
    %v4320 = vmul.f32 %v4316, 1.442695
    %v4321 = vpow.pop %v4320
    %v4322 = vmul.f32 %v4317, 1.442695
    %v4323 = vpow.pop %v4322
    %v4324 = vmul.f32 %v4318, 1.442695
    %v4325 = vpow.pop %v4324
    %v4326 = vmul.f32 %v4319, 1.442695
    %v4327 = vpow.pop %v4326
    %v4328 = vadd.f32 %v4321, 1.0
    %v4329 = vadd.f32 %v4323, 1.0
    %v4330 = vadd.f32 %v4325, 1.0
    %v4331 = vadd.f32 %v4327, 1.0
    %v4332 = vrcp.pop %v4328
    %v4333 = vmul.f32 %v4328, %v4332
    %v4334 = vsub.f32 1.0, %v4333
    %v4335 = vmul.f32 %v4332, %v4334
    %v4336 = vadd.f32 %v4332, %v4335
    %vm4337 = vweird.f32 %v4328
    %vm4338 = vweird.f32 %v4332
    %vm4339 = vmor %vm4337, %vm4338
    %v4340 = vsel %vm4339, %v4332, %v4336
    %v4341 = vand.u32 2147483647, %v4328
    %vm4342 = vcmp.eq.f32.partialorder %v4341, 8.507059e+37
    %v4343 = vand.u32 %v4328, 2147483648
    %v4344 = vor.u32 1.1754944e-38, %v4343
    %v4345 = vsel %vm4342, %v4344, %v4340
    %v4346 = vmul.f32 1.0, %v4345
    %v4347 = vrcp.pop %v4329
    %v4348 = vmul.f32 %v4329, %v4347
    %v4349 = vsub.f32 1.0, %v4348
    %v4350 = vmul.f32 %v4347, %v4349
    %v4351 = vadd.f32 %v4347, %v4350
    %vm4352 = vweird.f32 %v4329
    %vm4353 = vweird.f32 %v4347
    %vm4354 = vmor %vm4352, %vm4353
    %v4355 = vsel %vm4354, %v4347, %v4351
    %v4356 = vand.u32 2147483647, %v4329
    %vm4357 = vcmp.eq.f32.partialorder %v4356, 8.507059e+37
    %v4358 = vand.u32 %v4329, 2147483648
    %v4359 = vor.u32 1.1754944e-38, %v4358
    %v4360 = vsel %vm4357, %v4359, %v4355
    %v4361 = vmul.f32 1.0, %v4360
    %v4362 = vrcp.pop %v4330
    %v4363 = vmul.f32 %v4330, %v4362
    %v4364 = vsub.f32 1.0, %v4363
    %v4365 = vmul.f32 %v4362, %v4364
    %v4366 = vadd.f32 %v4362, %v4365
    %vm4367 = vweird.f32 %v4330
    %vm4368 = vweird.f32 %v4362
    %vm4369 = vmor %vm4367, %vm4368
    %v4370 = vsel %vm4369, %v4362, %v4366
    %v4371 = vand.u32 2147483647, %v4330
    %vm4372 = vcmp.eq.f32.partialorder %v4371, 8.507059e+37
    %v4373 = vand.u32 %v4330, 2147483648
    %v4374 = vor.u32 1.1754944e-38, %v4373
    %v4375 = vsel %vm4372, %v4374, %v4370
    %v4376 = vmul.f32 1.0, %v4375
    %v4377 = vrcp.pop %v4331
    %v4378 = vmul.f32 %v4331, %v4377
    %v4379 = vsub.f32 1.0, %v4378
    %v4380 = vmul.f32 %v4377, %v4379
    %v4381 = vadd.f32 %v4377, %v4380
    %vm4382 = vweird.f32 %v4331
    %vm4383 = vweird.f32 %v4377
    %vm4384 = vmor %vm4382, %vm4383
    %v4385 = vsel %vm4384, %v4377, %v4381
    %v4386 = vand.u32 2147483647, %v4331
    %vm4387 = vcmp.eq.f32.partialorder %v4386, 8.507059e+37
    %v4388 = vand.u32 %v4331, 2147483648
    %v4389 = vor.u32 1.1754944e-38, %v4388
    %v4390 = vsel %vm4387, %v4389, %v4385
    %v4391 = vmul.f32 1.0, %v4390
    %v4392 = vrot.slane %v4346, 4
    %v4393 = vsel %vm393, 0.0, %v4392
    %v4395 = vunpack.c.l.s4 1983009808
    %v4396 = vunpack.c.0.s8 %v4395
    %v4397 = vperm.slane %v4346, %v4396
    %v4399 = vunpack.c.l.s4 1983009808
    %v4400 = vunpack.c.0.s8 %v4399
    %v4401 = vperm.slane %v4393, %v4400
    %v4402 = vrot.slane %v4397, 4
    %v4403 = vsel %vm393, 0.0, %v4402
    %v4405 = vunpack.c.l.s4 1934713408
    %v4406 = vunpack.c.0.s8 %v4405
    %v4407 = vperm.slane %v4397, %v4406
    %v4409 = vunpack.c.l.s4 1934713408
    %v4410 = vunpack.c.0.s8 %v4409
    %v4411 = vperm.slane %v4403, %v4410
    %v4412 = vrot.slane %v4401, 4
    %v4413 = vsel %vm393, 0.0, %v4412
    %v4415 = vunpack.c.l.s4 1934713408
    %v4416 = vunpack.c.0.s8 %v4415
    %v4417 = vperm.slane %v4401, %v4416
    %v4419 = vunpack.c.l.s4 1934713408
    %v4420 = vunpack.c.0.s8 %v4419
    %v4421 = vperm.slane %v4413, %v4420
    %v4422 = vrot.slane %v4407, 4
    %v4423 = vsel %vm393, 0.0, %v4422
    %v4424 = vrot.slane %v4411, 4
    %v4425 = vsel %vm393, 0.0, %v4424
    %v4426 = vrot.slane %v4417, 4
    %v4427 = vsel %vm393, 0.0, %v4426
    %v4428 = vrot.slane %v4421, 4
    %v4429 = vsel %vm393, 0.0, %v4428
    %v4430 = vrot.slane %v4361, 4
    %v4431 = vsel %vm393, 0.0, %v4430
    %v4433 = vunpack.c.l.s4 1983009808
    %v4434 = vunpack.c.0.s8 %v4433
    %v4435 = vperm.slane %v4361, %v4434
    %v4437 = vunpack.c.l.s4 1983009808
    %v4438 = vunpack.c.0.s8 %v4437
    %v4439 = vperm.slane %v4431, %v4438
    %v4440 = vrot.slane %v4435, 4
    %v4441 = vsel %vm393, 0.0, %v4440
    %v4443 = vunpack.c.l.s4 1934713408
    %v4444 = vunpack.c.0.s8 %v4443
    %v4445 = vperm.slane %v4435, %v4444
    %v4447 = vunpack.c.l.s4 1934713408
    %v4448 = vunpack.c.0.s8 %v4447
    %v4449 = vperm.slane %v4441, %v4448
    %v4450 = vrot.slane %v4439, 4
    %v4451 = vsel %vm393, 0.0, %v4450
    %v4453 = vunpack.c.l.s4 1934713408
    %v4454 = vunpack.c.0.s8 %v4453
    %v4455 = vperm.slane %v4439, %v4454
    %v4457 = vunpack.c.l.s4 1934713408
    %v4458 = vunpack.c.0.s8 %v4457
    %v4459 = vperm.slane %v4451, %v4458
    %v4460 = vrot.slane %v4445, 4
    %v4461 = vsel %vm393, 0.0, %v4460
    %v4462 = vrot.slane %v4449, 4
    %v4463 = vsel %vm393, 0.0, %v4462
    %v4464 = vrot.slane %v4455, 4
    %v4465 = vsel %vm393, 0.0, %v4464
    %v4466 = vrot.slane %v4459, 4
    %v4467 = vsel %vm393, 0.0, %v4466
    %v4468 = vrot.slane %v4376, 4
    %v4469 = vsel %vm393, 0.0, %v4468
    %v4471 = vunpack.c.l.s4 1983009808
    %v4472 = vunpack.c.0.s8 %v4471
    %v4473 = vperm.slane %v4376, %v4472
    %v4475 = vunpack.c.l.s4 1983009808
    %v4476 = vunpack.c.0.s8 %v4475
    %v4477 = vperm.slane %v4469, %v4476
    %v4478 = vrot.slane %v4473, 4
    %v4479 = vsel %vm393, 0.0, %v4478
    %v4481 = vunpack.c.l.s4 1934713408
    %v4482 = vunpack.c.0.s8 %v4481
    %v4483 = vperm.slane %v4473, %v4482
    %v4485 = vunpack.c.l.s4 1934713408
    %v4486 = vunpack.c.0.s8 %v4485
    %v4487 = vperm.slane %v4479, %v4486
    %v4488 = vrot.slane %v4477, 4
    %v4489 = vsel %vm393, 0.0, %v4488
    %v4491 = vunpack.c.l.s4 1934713408
    %v4492 = vunpack.c.0.s8 %v4491
    %v4493 = vperm.slane %v4477, %v4492
    %v4495 = vunpack.c.l.s4 1934713408
    %v4496 = vunpack.c.0.s8 %v4495
    %v4497 = vperm.slane %v4489, %v4496
    %v4498 = vrot.slane %v4483, 4
    %v4499 = vsel %vm393, 0.0, %v4498
    %v4500 = vrot.slane %v4487, 4
    %v4501 = vsel %vm393, 0.0, %v4500
    %v4502 = vrot.slane %v4493, 4
    %v4503 = vsel %vm393, 0.0, %v4502
    %v4504 = vrot.slane %v4497, 4
    %v4505 = vsel %vm393, 0.0, %v4504
    %v4506 = vrot.slane %v4391, 4
    %v4507 = vsel %vm393, 0.0, %v4506
    %v4509 = vunpack.c.l.s4 1983009808
    %v4510 = vunpack.c.0.s8 %v4509
    %v4511 = vperm.slane %v4391, %v4510
    %v4513 = vunpack.c.l.s4 1983009808
    %v4514 = vunpack.c.0.s8 %v4513
    %v4515 = vperm.slane %v4507, %v4514
    %v4516 = vrot.slane %v4511, 4
    %v4517 = vsel %vm393, 0.0, %v4516
    %v4519 = vunpack.c.l.s4 1934713408
    %v4520 = vunpack.c.0.s8 %v4519
    %v4521 = vperm.slane %v4511, %v4520
    %v4523 = vunpack.c.l.s4 1934713408
    %v4524 = vunpack.c.0.s8 %v4523
    %v4525 = vperm.slane %v4517, %v4524
    %v4526 = vrot.slane %v4515, 4
    %v4527 = vsel %vm393, 0.0, %v4526
    %v4529 = vunpack.c.l.s4 1934713408
    %v4530 = vunpack.c.0.s8 %v4529
    %v4531 = vperm.slane %v4515, %v4530
    %v4533 = vunpack.c.l.s4 1934713408
    %v4534 = vunpack.c.0.s8 %v4533
    %v4535 = vperm.slane %v4527, %v4534
    %v4536 = vrot.slane %v4521, 4
    %v4537 = vsel %vm393, 0.0, %v4536
    %v4538 = vrot.slane %v4525, 4
    %v4539 = vsel %vm393, 0.0, %v4538
    %v4540 = vrot.slane %v4531, 4
    %v4541 = vsel %vm393, 0.0, %v4540
    %v4542 = vrot.slane %v4535, 4
    %v4543 = vsel %vm393, 0.0, %v4542
    %4546 = vrot.lane.b32.xlu0 %v4423, 16
    %v4547 = vpop.permute.xlu0 %4546
    %4548 = vrot.lane.b32.xlu0 %v4499, 16
    %v4549 = vpop.permute.xlu0 %4548
    %4554 = vrot.lane.b32.xlu0 %v4411, 32
    %v4555 = vpop.permute.xlu0 %4554
    %4556 = vrot.lane.b32.xlu0 %v4487, 32
    %v4557 = vpop.permute.xlu0 %4556
    %4562 = vrot.lane.b32.xlu0 %v4425, 48
    %v4563 = vpop.permute.xlu0 %4562
    %4564 = vrot.lane.b32.xlu0 %v4501, 48
    %v4565 = vpop.permute.xlu0 %4564
    %4570 = vrot.lane.b32.xlu0 %v4417, 64
    %v4571 = vpop.permute.xlu0 %4570
    %4572 = vrot.lane.b32.xlu0 %v4493, 64
    %v4573 = vpop.permute.xlu0 %4572
    %4578 = vrot.lane.b32.xlu0 %v4427, 80
    %v4579 = vpop.permute.xlu0 %4578
    %4580 = vrot.lane.b32.xlu0 %v4503, 80
    %v4581 = vpop.permute.xlu0 %4580
    %4586 = vrot.lane.b32.xlu0 %v4421, 96
    %v4587 = vpop.permute.xlu0 %4586
    %4588 = vrot.lane.b32.xlu0 %v4497, 96
    %v4589 = vpop.permute.xlu0 %4588
    %4594 = vrot.lane.b32.xlu0 %v4429, 112
    %v4595 = vpop.permute.xlu0 %4594
    %4596 = vrot.lane.b32.xlu0 %v4505, 112
    %v4597 = vpop.permute.xlu0 %4596
    %4602 = vrot.lane.b32.xlu0 %v4461, 16
    %v4603 = vpop.permute.xlu0 %4602
    %4604 = vrot.lane.b32.xlu0 %v4537, 16
    %v4605 = vpop.permute.xlu0 %4604
    %4610 = vrot.lane.b32.xlu0 %v4449, 32
    %v4611 = vpop.permute.xlu0 %4610
    %4612 = vrot.lane.b32.xlu0 %v4525, 32
    %v4613 = vpop.permute.xlu0 %4612
    %4618 = vrot.lane.b32.xlu0 %v4463, 48
    %v4619 = vpop.permute.xlu0 %4618
    %4620 = vrot.lane.b32.xlu0 %v4539, 48
    %v4621 = vpop.permute.xlu0 %4620
    %4626 = vrot.lane.b32.xlu0 %v4455, 64
    %v4627 = vpop.permute.xlu0 %4626
    %4628 = vrot.lane.b32.xlu0 %v4531, 64
    %v4629 = vpop.permute.xlu0 %4628
    %4634 = vrot.lane.b32.xlu0 %v4465, 80
    %v4635 = vpop.permute.xlu0 %4634
    %4636 = vrot.lane.b32.xlu0 %v4541, 80
    %v4637 = vpop.permute.xlu0 %4636
    %4642 = vrot.lane.b32.xlu0 %v4459, 96
    %v4643 = vpop.permute.xlu0 %4642
    %4644 = vrot.lane.b32.xlu0 %v4535, 96
    %v4645 = vpop.permute.xlu0 %4644
    %4650 = vrot.lane.b32.xlu0 %v4467, 112
    %v4651 = vpop.permute.xlu0 %4650
    %4652 = vrot.lane.b32.xlu0 %v4543, 112
    %v4653 = vpop.permute.xlu0 %4652
    %vm4656 = vcmask 130048
    %v4657 = vsel %vm4656, %v4407, %v4547
    %v4658 = vsel %vm4656, %v4483, %v4549
    %vm4659 = vcmask 261120
    %v4660 = vsel %vm4659, %v4657, %v4555
    %v4661 = vsel %vm4659, %v4658, %v4557
    %vm4662 = vcmask 392192
    %v4663 = vsel %vm4662, %v4660, %v4563
    %v4664 = vsel %vm4662, %v4661, %v4565
    %vm4665 = vcmask 523264
    %v4666 = vsel %vm4665, %v4663, %v4571
    %v4667 = vsel %vm4665, %v4664, %v4573
    %vm4668 = vcmask 654336
    %v4669 = vsel %vm4668, %v4666, %v4579
    %v4670 = vsel %vm4668, %v4667, %v4581
    %vm4671 = vcmask 785408
    %v4672 = vsel %vm4671, %v4669, %v4587
    %v4673 = vsel %vm4671, %v4670, %v4589
    %vm4674 = vcmask 916480
    %v4675 = vsel %vm4674, %v4672, %v4595
    %v4676 = vsel %vm4674, %v4673, %v4597
    %v4677 = vsel %vm4656, %v4445, %v4603
    %v4678 = vsel %vm4656, %v4521, %v4605
    %v4679 = vsel %vm4659, %v4677, %v4611
    %v4680 = vsel %vm4659, %v4678, %v4613
    %v4681 = vsel %vm4662, %v4679, %v4619
    %v4682 = vsel %vm4662, %v4680, %v4621
    %v4683 = vsel %vm4665, %v4681, %v4627
    %v4684 = vsel %vm4665, %v4682, %v4629
    %v4685 = vsel %vm4668, %v4683, %v4635
    %v4686 = vsel %vm4668, %v4684, %v4637
    %v4687 = vsel %vm4671, %v4685, %v4643
    %v4688 = vsel %vm4671, %v4686, %v4645
    %v4689 = vsel %vm4674, %v4687, %v4651
    %v4690 = vsel %vm4674, %v4688, %v4653
    %v4691 = vperm.slane %v4675, 0
    %v4692 = vperm.slane %v4689, 0
    %v4693 = vperm.slane %v4676, 0
    %v4694 = vperm.slane %v4690, 0
    %v4699 = vrot.slane %v4692, 4
    %v4700 = vrot.slane %v4694, 4
    %v4701 = vsel %vm71, %v4691, %v4699
    %v4702 = vsel %vm71, %v4693, %v4700
    %v4705 = vmul.f32 %v177, %v4701
    %v4706 = vmul.f32 %v178, %v4702
    %4707 = vst [vmem:[#allocation10] sm:$0xff] %v4705
    %4708 = vst [vmem:[#allocation10 + $0x8] sm:$0xff] %v4706
    // Predicated region
    $region26: #{tpu_custom_call.1} parent=1 // pred_check
      _
    $region27: #{tpu_custom_call.1} parent=1 // pred_check_branch
      %4710 = sbr.rel (0) target = $region29
    $region28: #{tpu_custom_call.1} parent=1 // pred_region
      %4712 = vsyncadd [#allocation5], 0
      %s4713 = sshll.u32 [#allocation10], 4
      %s4714 = int_to_ptr.vmem [resolvable:$true] %s4713
      %s4715 = sshll.u32 %s3, 4
      %s4716 = int_to_ptr.hbm [resolvable:$true] %s4715
      %4721 = dma.vmem_to_hbm [thread:$0]  %s4714, 256, %s4716, [#allocation5], 128, 128, 8
    $region29: #{tpu_custom_call.1} parent=1 // pred_fallthru
      _
    // Predicated region
    $region30: #{tpu_custom_call.1} parent=1 // pred_check
      _
    $region31: #{tpu_custom_call.1} parent=1 // pred_check_branch
      %4723 = sbr.rel (0) target = $region33
    $region32: #{tpu_custom_call.1} parent=1 // pred_region
      %4725 = dma.done [#allocation5], 256
    $region33: #{tpu_custom_call.1} parent=1 // pred_fallthru
      _
    %4726 = vsyncpa [#allocation4], 1
    %4727 = vsyncpa [#allocation5], 1
    %4728 = vsyncpa [#allocation6], 1
    %4729 = vsyncpa [#allocation8], 1

</llo_original>
